<compile_context>
chip_gen: v7x
topology: tpu7x:2x2x1
jax: 0.10.0
libtpu: 0.0.40
codegen_flags: <defaults>
</compile_context>

<pallas_src>
import jax
import jax.numpy as jnp
import numpy as np
from jax.experimental import pallas as pl
from jax.experimental.pallas import tpu as pltpu


def acf_user_kernel(user_ref, profile_ref, feat_ref, mask_ref,
                    wdc_ref, bdc_ref,    # folded [dim_reductor | dim_reductor∘w_x] : (Fin, 2E), (1, 2E)
                    wuc_ref, buc_ref,    # fused  [UserNet.w_u  | FeatureNet.w_u]   : (E, 2E),  (1, 2E)
                    wf_ref, bwf_ref,     # ACFFeatureNet.w                          : (1, E),   (1, 1)
                    wpx_ref, bpx_ref,    # stacked [UserNet.w_p ; UserNet.w_x]      : (2E, E),  (1, E)
                    wm_ref, bwm_ref,     # ACFUserNet.w                             : (1, E),   (1, 1)
                    out_ref):
    Bb, PC, Fin = feat_ref.shape
    P = profile_ref.shape[1]
    E = profile_ref.shape[2]
    C = PC // P
    f32 = jnp.float32
    bf16 = jnp.bfloat16

    user = user_ref[...]                    # (Bb, E)    f32
    profile = profile_ref[...]              # (Bb, P, E) f32
    mask = mask_ref[...]                    # (Bb, P)    f32 {0,1}

    # ---------------- ACFFeatureNet: component-level attention ----------------
    # One fused MXU call gives both x (= dim_reductor(feats)) and x_tilde (= w_x(x)),
    # with the contraction kept at K=Fin thanks to the host-side wd@wfx fold.
    feats2 = feat_ref[...].reshape(Bb * PC, Fin)                                    # bf16, 2-D lane-dense
    xc = jnp.dot(feats2, wdc_ref[...], preferred_element_type=f32) + bdc_ref[...]   # (Bb*PC, 2E) f32
    x2 = xc[:, :E]                                                                  # (Bb*PC, E)
    xt = xc[:, E:].reshape(Bb, PC, E)                                               # (Bb, PC, E)

    # One fused MXU call gives both u (= UserNet.w_u(user)) and uf (= FeatureNet.w_u(user)).
    uc = jnp.dot(user.astype(bf16), wuc_ref[...], preferred_element_type=f32) + buc_ref[...]
    u = uc[:, :E]                                                                   # (Bb, E)
    uf = uc[:, E:]                                                                  # (Bb, E)

    h = jnp.maximum(xt + uf[:, None, :], 0.0)                                       # (Bb, PC, E) f32
    # beta logits: multiply + lane-reduce on VPU/XLU (an N=1 matmul would waste the MXU).
    bl = jnp.sum(h * wf_ref[...], axis=-1) + bwf_ref[...]                           # (Bb, PC)
    bl = bl.reshape(Bb, P, C)
    bmax = jnp.max(bl, axis=-1, keepdims=True)                                      # softmax over components
    be = jnp.exp(bl - bmax)
    beta = be / jnp.sum(be, axis=-1, keepdims=True)                                 # (Bb, P, C)
    pooled = jnp.sum(beta[..., None] * x2.reshape(Bb, P, C, E), axis=2)             # (Bb, P, E)
    pooled = pooled * mask[..., None]                                               # zero padded profile slots

    # ---------------- ACFUserNet: profile-level attention ----------------
    # Fused w_p / w_x matmul: [profile | pooled] @ [wp ; wx]  (K = 2E = 256-wide MXU friendly).
    pc = jnp.concatenate([profile.reshape(Bb * P, E).astype(bf16),
                          pooled.reshape(Bb * P, E).astype(bf16)], axis=-1)         # (Bb*P, 2E)
    pqcx = (jnp.dot(pc, wpx_ref[...], preferred_element_type=f32)
            + bpx_ref[...]).reshape(Bb, P, E)                                       # (Bb, P, E)

    ah = jnp.maximum(u[:, None, :] + pqcx, 0.0)                                     # (Bb, P, E)
    al = jnp.sum(ah * wm_ref[...], axis=-1) + bwm_ref[...]                          # (Bb, P)

    valid = mask > 0.0
    neg_inf = jnp.float32(-jnp.inf)
    al = jnp.where(valid, al, neg_inf)                 # masked_fill(~mask, -inf)
    amax = jnp.max(al, axis=-1, keepdims=True)         # softmax over profile dim
    amax = jnp.where(amax == neg_inf, 0.0, amax)       # guard all-masked rows
    ae = jnp.where(valid, jnp.exp(al - amax), 0.0)
    asum = jnp.sum(ae, axis=-1, keepdims=True)
    alpha = jnp.where(asum > 0.0, ae / asum, 0.0)      # torch: nan -> 0 for empty profiles
    user_profile = jnp.sum(alpha[..., None] * profile, axis=1)                      # (Bb, E)

    out_ref[...] = (u + user_profile).astype(out_ref.dtype)


def _resident_spec(arr):
    """Full-array block with a constant index map: no re-DMA across grid steps."""
    zeros = (0,) * arr.ndim
    return pl.BlockSpec(arr.shape, lambda i, _z=zeros: _z)


def acf_user_forward(params, user_ids, profile_ids, features, profile_mask, b_blk=None):
    B = user_ids.shape[0]
    P = profile_ids.shape[1]
    E = params["user_table"].shape[1]
    Fin = features.shape[-1]

    # Batch tile: bounds VMEM per grid step, enables double-buffered pipelining, and the
    # "parallel" axis shards across TensorCores (megacore on v7x).
    # Tune per generation: ~32 on v7x (64 MiB VMEM), up to ~64 on v5e/v6e.
    if b_blk is None:
        b_blk = next((c for c in (32, 16, 8) if B % c == 0), B)
    assert B % b_blk == 0, f"batch {B} must be a multiple of b_blk {b_blk}"
    nb = B // b_blk

    # ---- glue (plain JAX): embedding gathers + flatten of spatial dims ----
    # TODO(synk): embedding lookups (gathers) stay in JAX; not worth a DMA-gather kernel here.
    user_emb = params["user_table"][user_ids]                    # (B, E) f32
    profile_emb = params["prof_table"][profile_ids]              # (B, P, E) f32
    feats = features.reshape(B, -1, Fin).astype(jnp.bfloat16)    # (B, P*C, Fin) — bf16 halves the big DMA
    PC = feats.shape[1]
    mask_f = profile_mask.astype(jnp.float32)                    # (B, P)

    # ---- host-side weight folding / fusion (exact algebra, done once per call) ----
    wd, bd = params["wd"], params["bd"]
    wfx, bfx = params["wfx"], params["bfx"]
    wdc = jnp.concatenate([wd, wd @ wfx], axis=1).astype(jnp.bfloat16)                    # (Fin, 2E)
    bdc = jnp.concatenate([bd, bd @ wfx + bfx], axis=1)                                   # (1, 2E) f32
    wuc = jnp.concatenate([params["wu"], params["wfu"]], axis=1).astype(jnp.bfloat16)     # (E, 2E)
    buc = jnp.concatenate([params["bu"], params["bfu"]], axis=1)                          # (1, 2E) f32
    wpx = jnp.concatenate([params["wp"], params["wx"]], axis=0).astype(jnp.bfloat16)      # (2E, E)
    bpx = params["bp"] + params["bx"]                                                     # (1, E) f32
    weights = [wdc, bdc, wuc, buc,
               params["wf"], params["bwf"],
               wpx, bpx,
               params["wm"], params["bwm"]]

    in_specs = [
        pl.BlockSpec((b_blk, E), lambda i: (i, 0)),           # user_emb
        pl.BlockSpec((b_blk, P, E), lambda i: (i, 0, 0)),     # profile_emb
        pl.BlockSpec((b_blk, PC, Fin), lambda i: (i, 0, 0)),  # features (bf16)
        pl.BlockSpec((b_blk, P), lambda i: (i, 0)),           # profile mask
    ] + [_resident_spec(w) for w in weights]

    grid_spec = pltpu.PrefetchScalarGridSpec(
        num_scalar_prefetch=0,
        grid=(nb,),
        in_specs=in_specs,
        out_specs=pl.BlockSpec((b_blk, E), lambda i: (i, 0)),
    )

    user_out = pl.pallas_call(
        acf_user_kernel,
        out_shape=jax.ShapeDtypeStruct((B, E), jnp.float32),
        grid_spec=grid_spec,
        compiler_params=pltpu.CompilerParams(
            dimension_semantics=("parallel",),
            vmem_limit_bytes=48 * 1024 * 1024,   # explicit, with headroom on v7x's 64 MiB VMEM
        ),
    )(user_emb, profile_emb, feats, mask_f, *weights)
    return {"user": user_out}


# ---------------- pure-JAX f32 reference following the PyTorch axis order ----------------
def acf_user_ref(params, user_ids, profile_ids, features, profile_mask):
    user = params["user_table"][user_ids]                     # (B, E)
    profile = params["prof_table"][profile_ids]               # (B, P, E)
    B, P = profile_ids.shape
    Fin = features.shape[-1]
    comps = features.reshape(B, P, -1, Fin)                   # flatten(start_dim=2, end_dim=3)

    # ACFFeatureNet
    x = comps @ params["wd"] + params["bd"]                   # (B,P,C,E)
    x = jnp.moveaxis(x, 0, -2)                                # (P,C,B,E)
    x_tilde = x @ params["wfx"] + params["bfx"]
    uf = user @ params["wfu"] + params["bfu"]                 # (B,E)
    beta = jax.nn.relu(x_tilde + uf)
    beta = beta @ params["wf"].T + params["bwf"]              # (P,C,B,1)
    beta = jax.nn.softmax(beta, axis=1)
    x = (beta * x).sum(axis=1)                                # (P,B,E)
    x = jnp.moveaxis(x, -2, 0)                                # (B,P,E)
    pm = profile_mask.astype(jnp.float32)[..., None]
    components = pm * x

    # ACFUserNet
    u = user @ params["wu"] + params["bu"]
    pq = profile @ params["wp"] + params["bp"]
    cx = components @ params["wx"] + params["bx"]
    pq = jnp.transpose(pq, (1, 0, 2))
    cx = jnp.transpose(cx, (1, 0, 2))
    alpha = jax.nn.relu(u + pq + cx)
    alpha = alpha @ params["wm"].T + params["bwm"]            # (P,B,1)
    m = jnp.transpose(profile_mask, (1, 0))[..., None]
    alpha = jnp.where(m, alpha, -jnp.inf)
    alpha = jax.nn.softmax(alpha, axis=0)
    alpha = jnp.where(jnp.isnan(alpha), 0.0, alpha)
    alpha = jnp.transpose(alpha, (1, 0, 2))                   # (B,P,1)
    user_profile = (alpha * profile).sum(axis=1)
    return u + user_profile


def init_params(key, num_users, num_items, E, Fin):
    ks = jax.random.split(key, 12)

    def kaiming(k, fan_in, shape):
        return jax.random.normal(k, shape, jnp.float32) * np.float32(np.sqrt(2.0 / fan_in))

    p = {}
    p["user_table"] = jax.random.normal(ks[0], (num_users, E), jnp.float32)
    prof = jax.random.normal(ks[1], (num_items, E), jnp.float32)
    p["prof_table"] = prof.at[0].set(0.0)                      # padding_idx = 0
    # ACFFeatureNet.dim_reductor: default torch Linear init
    bound = 1.0 / np.sqrt(Fin)
    p["wd"] = jax.random.uniform(ks[2], (Fin, E), jnp.float32, -bound, bound)
    p["bd"] = jax.random.uniform(ks[3], (1, E), jnp.float32, -bound, bound)
    # kaiming-initialized layers, zero biases
    p["wfx"] = kaiming(ks[4], E, (E, E)); p["bfx"] = jnp.zeros((1, E), jnp.float32)
    p["wfu"] = kaiming(ks[5], E, (E, E)); p["bfu"] = jnp.zeros((1, E), jnp.float32)
    p["wf"] = kaiming(ks[6], E, (1, E));  p["bwf"] = jnp.zeros((1, 1), jnp.float32)
    p["wu"] = kaiming(ks[7], E, (E, E));  p["bu"] = jnp.zeros((1, E), jnp.float32)
    p["wp"] = kaiming(ks[8], E, (E, E));  p["bp"] = jnp.zeros((1, E), jnp.float32)
    p["wx"] = kaiming(ks[9], E, (E, E));  p["bx"] = jnp.zeros((1, E), jnp.float32)
    p["wm"] = kaiming(ks[10], E, (1, E)); p["bwm"] = jnp.zeros((1, 1), jnp.float32)
    return p


if __name__ == "__main__":
    B, P, C1, C2, Fin, E = 16, 8, 2, 4, 32, 128
    num_users, num_items = 32, 64

    key = jax.random.PRNGKey(0)
    kp, ku, ki, kf, km = jax.random.split(key, 5)
    params = init_params(kp, num_users, num_items, E, Fin)

    user_ids = jax.random.randint(ku, (B,), 0, num_users)
    lens = jax.random.randint(km, (B,), 0, P + 1)
    lens = lens.at[0].set(P).at[B - 1].set(0)                  # full profile + empty profile (nan->0 path)
    profile_mask = jnp.arange(P)[None, :] < lens[:, None]      # (B, P) bool
    raw_ids = jax.random.randint(ki, (B, P), 1, num_items)
    profile_ids = jnp.where(profile_mask, raw_ids, 0)          # pad token = 0
    features = jax.random.normal(kf, (B, P, C1, C2, Fin), jnp.float32)

    # b_blk=8 -> grid=(2,), exercising the batch-tiled pipeline even at this small batch.
    out = acf_user_forward(params, user_ids, profile_ids, features, profile_mask, b_blk=8)
    user_vec = jax.block_until_ready(out["user"])

    ref = acf_user_ref(params, user_ids, profile_ids, features, profile_mask)
    # bf16 MXU operands (f32 accumulation) => relaxed tolerance vs. the pure-f32 reference.
    np.testing.assert_allclose(np.asarray(user_vec), np.asarray(ref), rtol=5e-2, atol=1e-1)
    print("KERNEL_OK")
</pallas_src>

<mosaic_0001>
module attributes {stable_mosaic.version = 11 : i64} {
  func.func @acf_user_kernel(%arg0: i32, %arg1: memref<8x128xf32, #tpu.memory_space<vmem>>, %arg2: memref<8x8x128xf32, #tpu.memory_space<vmem>>, %arg3: memref<8x64x32xbf16, #tpu.memory_space<vmem>>, %arg4: memref<8x8xf32, #tpu.memory_space<vmem>>, %arg5: memref<32x256xbf16, #tpu.memory_space<vmem>>, %arg6: memref<1x256xf32, #tpu.memory_space<vmem>>, %arg7: memref<128x256xbf16, #tpu.memory_space<vmem>>, %arg8: memref<1x256xf32, #tpu.memory_space<vmem>>, %arg9: memref<1x128xf32, #tpu.memory_space<vmem>>, %arg10: memref<1x1xf32, #tpu.memory_space<vmem>>, %arg11: memref<256x128xbf16, #tpu.memory_space<vmem>>, %arg12: memref<1x128xf32, #tpu.memory_space<vmem>>, %arg13: memref<1x128xf32, #tpu.memory_space<vmem>>, %arg14: memref<1x1xf32, #tpu.memory_space<vmem>>, %arg15: memref<8x128xf32, #tpu.memory_space<vmem>>) attributes {dimension_semantics = [#tpu.dimension_semantics<parallel>], iteration_bounds = array<i64: 2>, scalar_prefetch = 0 : i64, scratch_operands = 0 : i64, tpu.core_type = #tpu.core_type<tc>, window_params = [{transform_indices = @transform_0, window_bounds = array<i64: 8, 128>}, {transform_indices = @transform_1, window_bounds = array<i64: 8, 8, 128>}, {transform_indices = @transform_2, window_bounds = array<i64: 8, 64, 32>}, {transform_indices = @transform_3, window_bounds = array<i64: 8, 8>}, {pipeline_mode = #tpu.pipeline_mode<synchronous>, transform_indices = @transform_4, window_bounds = array<i64: 32, 256>}, {pipeline_mode = #tpu.pipeline_mode<synchronous>, transform_indices = @transform_5, window_bounds = array<i64: 1, 256>}, {pipeline_mode = #tpu.pipeline_mode<synchronous>, transform_indices = @transform_6, window_bounds = array<i64: 128, 256>}, {pipeline_mode = #tpu.pipeline_mode<synchronous>, transform_indices = @transform_7, window_bounds = array<i64: 1, 256>}, {pipeline_mode = #tpu.pipeline_mode<synchronous>, transform_indices = @transform_8, window_bounds = array<i64: 1, 128>}, {pipeline_mode = #tpu.pipeline_mode<synchronous>, transform_indices = @transform_9, window_bounds = array<i64: 1, 1>}, {pipeline_mode = #tpu.pipeline_mode<synchronous>, transform_indices = @transform_10, window_bounds = array<i64: 256, 128>}, {pipeline_mode = #tpu.pipeline_mode<synchronous>, transform_indices = @transform_11, window_bounds = array<i64: 1, 128>}, {pipeline_mode = #tpu.pipeline_mode<synchronous>, transform_indices = @transform_12, window_bounds = array<i64: 1, 128>}, {pipeline_mode = #tpu.pipeline_mode<synchronous>, transform_indices = @transform_13, window_bounds = array<i64: 1, 1>}, {transform_indices = @transform_14, window_bounds = array<i64: 8, 128>}]} {
    %c0 = arith.constant 0 : index
    %c0_0 = arith.constant 0 : index
    %0 = vector.load %arg1[%c0, %c0_0] : memref<8x128xf32, #tpu.memory_space<vmem>>, vector<8x128xf32>
    %c0_1 = arith.constant 0 : index
    %c0_2 = arith.constant 0 : index
    %c0_3 = arith.constant 0 : index
    %1 = vector.load %arg2[%c0_1, %c0_2, %c0_3] : memref<8x8x128xf32, #tpu.memory_space<vmem>>, vector<8x8x128xf32>
    %c0_4 = arith.constant 0 : index
    %c0_5 = arith.constant 0 : index
    %2 = vector.load %arg4[%c0_4, %c0_5] : memref<8x8xf32, #tpu.memory_space<vmem>>, vector<8x8xf32>
    %c0_6 = arith.constant 0 : index
    %c0_7 = arith.constant 0 : index
    %c0_8 = arith.constant 0 : index
    %3 = vector.load %arg3[%c0_6, %c0_7, %c0_8] : memref<8x64x32xbf16, #tpu.memory_space<vmem>>, vector<8x64x32xbf16>
    %4 = vector.shape_cast %3 : vector<8x64x32xbf16> to vector<512x32xbf16>
    %c0_9 = arith.constant 0 : index
    %c0_10 = arith.constant 0 : index
    %5 = vector.load %arg5[%c0_9, %c0_10] : memref<32x256xbf16, #tpu.memory_space<vmem>>, vector<32x256xbf16>
    %cst = arith.constant dense<0.000000e+00> : vector<512x256xf32>
    %6 = tpu.matmul %4, %5, %cst {dimension_numbers = #tpu.dot_dimension_numbers<[1], [0], [0], [1], [0, 0, 1, 1], [], []>} : vector<512x32xbf16>, vector<32x256xbf16>, vector<512x256xf32> -> vector<512x256xf32>
    %c0_11 = arith.constant 0 : index
    %c0_12 = arith.constant 0 : index
    %7 = vector.load %arg6[%c0_11, %c0_12] : memref<1x256xf32, #tpu.memory_space<vmem>>, vector<1x256xf32>
    %8 = vector.broadcast %7 : vector<1x256xf32> to vector<512x256xf32>
    %9 = arith.addf %6, %8 : vector<512x256xf32>
    %10 = vector.extract_strided_slice %9 {offsets = [0, 0], sizes = [512, 128], strides = [1, 1]} : vector<512x256xf32> to vector<512x128xf32>
    %11 = vector.extract_strided_slice %9 {offsets = [0, 128], sizes = [512, 128], strides = [1, 1]} : vector<512x256xf32> to vector<512x128xf32>
    %12 = vector.shape_cast %11 : vector<512x128xf32> to vector<8x64x128xf32>
    %13 = arith.truncf %0 : vector<8x128xf32> to vector<8x128xbf16>
    %c0_13 = arith.constant 0 : index
    %c0_14 = arith.constant 0 : index
    %14 = vector.load %arg7[%c0_13, %c0_14] : memref<128x256xbf16, #tpu.memory_space<vmem>>, vector<128x256xbf16>
    %cst_15 = arith.constant dense<0.000000e+00> : vector<8x256xf32>
    %15 = tpu.matmul %13, %14, %cst_15 {dimension_numbers = #tpu.dot_dimension_numbers<[1], [0], [0], [1], [0, 0, 1, 1], [], []>} : vector<8x128xbf16>, vector<128x256xbf16>, vector<8x256xf32> -> vector<8x256xf32>
    %c0_16 = arith.constant 0 : index
    %c0_17 = arith.constant 0 : index
    %16 = vector.load %arg8[%c0_16, %c0_17] : memref<1x256xf32, #tpu.memory_space<vmem>>, vector<1x256xf32>
    %17 = vector.broadcast %16 : vector<1x256xf32> to vector<8x256xf32>
    %18 = arith.addf %15, %17 : vector<8x256xf32>
    %19 = vector.extract_strided_slice %18 {offsets = [0, 0], sizes = [8, 128], strides = [1, 1]} : vector<8x256xf32> to vector<8x128xf32>
    %20 = vector.extract_strided_slice %18 {offsets = [0, 128], sizes = [8, 128], strides = [1, 1]} : vector<8x256xf32> to vector<8x128xf32>
    %21 = vector.shape_cast %20 : vector<8x128xf32> to vector<8x1x128xf32>
    %22 = vector.broadcast %21 : vector<8x1x128xf32> to vector<8x64x128xf32>
    %23 = arith.addf %12, %22 : vector<8x64x128xf32>
    %cst_18 = arith.constant 0.000000e+00 : f32
    %24 = vector.broadcast %cst_18 : f32 to vector<8x64x128xf32>
    %25 = arith.maximumf %23, %24 : vector<8x64x128xf32>
    %c0_19 = arith.constant 0 : index
    %c0_20 = arith.constant 0 : index
    %26 = vector.load %arg9[%c0_19, %c0_20] : memref<1x128xf32, #tpu.memory_space<vmem>>, vector<1x128xf32>
    %27 = vector.shape_cast %26 : vector<1x128xf32> to vector<1x1x128xf32>
    %28 = vector.broadcast %27 : vector<1x1x128xf32> to vector<8x64x128xf32>
    %29 = arith.mulf %25, %28 : vector<8x64x128xf32>
    %cst_21 = arith.constant dense<0.000000e+00> : vector<8x64xf32>
    %30 = vector.multi_reduction <add>, %29, %cst_21 [2] : vector<8x64x128xf32> to vector<8x64xf32>
    %c0_22 = arith.constant 0 : index
    %c0_23 = arith.constant 0 : index
    %31 = vector.load %arg10[%c0_22, %c0_23] : memref<1x1xf32, #tpu.memory_space<vmem>>, vector<1x1xf32>
    %32 = vector.broadcast %31 : vector<1x1xf32> to vector<8x64xf32>
    %33 = arith.addf %30, %32 : vector<8x64xf32>
    %34 = vector.shape_cast %33 : vector<8x64xf32> to vector<8x8x8xf32>
    %cst_24 = arith.constant dense<0xFF800000> : vector<8x8xf32>
    %35 = vector.multi_reduction <maximumf>, %34, %cst_24 [2] : vector<8x8x8xf32> to vector<8x8xf32>
    %36 = vector.shape_cast %35 : vector<8x8xf32> to vector<8x8x1xf32>
    %37 = vector.broadcast %36 : vector<8x8x1xf32> to vector<8x8x8xf32>
    %38 = arith.subf %34, %37 : vector<8x8x8xf32>
    %39 = math.exp %38 : vector<8x8x8xf32>
    %cst_25 = arith.constant dense<0.000000e+00> : vector<8x8xf32>
    %40 = vector.multi_reduction <add>, %39, %cst_25 [2] : vector<8x8x8xf32> to vector<8x8xf32>
    %41 = vector.shape_cast %40 : vector<8x8xf32> to vector<8x8x1xf32>
    %42 = vector.broadcast %41 : vector<8x8x1xf32> to vector<8x8x8xf32>
    %43 = arith.divf %39, %42 : vector<8x8x8xf32>
    %44 = vector.shape_cast %43 : vector<8x8x8xf32> to vector<8x8x8x1xf32>
    %45 = vector.shape_cast %10 : vector<512x128xf32> to vector<8x8x8x128xf32>
    %46 = vector.broadcast %44 : vector<8x8x8x1xf32> to vector<8x8x8x128xf32>
    %47 = arith.mulf %46, %45 : vector<8x8x8x128xf32>
    %cst_26 = arith.constant dense<0.000000e+00> : vector<8x8x128xf32>
    %48 = vector.multi_reduction <add>, %47, %cst_26 [2] : vector<8x8x8x128xf32> to vector<8x8x128xf32>
    %49 = vector.shape_cast %2 : vector<8x8xf32> to vector<8x8x1xf32>
    %50 = vector.broadcast %49 : vector<8x8x1xf32> to vector<8x8x128xf32>
    %51 = arith.mulf %48, %50 : vector<8x8x128xf32>
    %52 = vector.shape_cast %1 : vector<8x8x128xf32> to vector<64x128xf32>
    %53 = arith.truncf %52 : vector<64x128xf32> to vector<64x128xbf16>
    %54 = vector.shape_cast %51 : vector<8x8x128xf32> to vector<64x128xf32>
    %55 = arith.truncf %54 : vector<64x128xf32> to vector<64x128xbf16>
    %56 = tpu.concatenate %53, %55 in 1 : vector<64x128xbf16>, vector<64x128xbf16> -> vector<64x256xbf16>
    %c0_27 = arith.constant 0 : index
    %c0_28 = arith.constant 0 : index
    %57 = vector.load %arg11[%c0_27, %c0_28] : memref<256x128xbf16, #tpu.memory_space<vmem>>, vector<256x128xbf16>
    %cst_29 = arith.constant dense<0.000000e+00> : vector<64x128xf32>
    %58 = tpu.matmul %56, %57, %cst_29 {dimension_numbers = #tpu.dot_dimension_numbers<[1], [0], [0], [1], [0, 0, 1, 1], [], []>} : vector<64x256xbf16>, vector<256x128xbf16>, vector<64x128xf32> -> vector<64x128xf32>
    %c0_30 = arith.constant 0 : index
    %c0_31 = arith.constant 0 : index
    %59 = vector.load %arg12[%c0_30, %c0_31] : memref<1x128xf32, #tpu.memory_space<vmem>>, vector<1x128xf32>
    %60 = vector.broadcast %59 : vector<1x128xf32> to vector<64x128xf32>
    %61 = arith.addf %58, %60 : vector<64x128xf32>
    %62 = vector.shape_cast %61 : vector<64x128xf32> to vector<8x8x128xf32>
    %63 = vector.shape_cast %19 : vector<8x128xf32> to vector<8x1x128xf32>
    %64 = vector.broadcast %63 : vector<8x1x128xf32> to vector<8x8x128xf32>
    %65 = arith.addf %64, %62 : vector<8x8x128xf32>
    %cst_32 = arith.constant 0.000000e+00 : f32
    %66 = vector.broadcast %cst_32 : f32 to vector<8x8x128xf32>
    %67 = arith.maximumf %65, %66 : vector<8x8x128xf32>
    %c0_33 = arith.constant 0 : index
    %c0_34 = arith.constant 0 : index
    %68 = vector.load %arg13[%c0_33, %c0_34] : memref<1x128xf32, #tpu.memory_space<vmem>>, vector<1x128xf32>
    %69 = vector.shape_cast %68 : vector<1x128xf32> to vector<1x1x128xf32>
    %70 = vector.broadcast %69 : vector<1x1x128xf32> to vector<8x8x128xf32>
    %71 = arith.mulf %67, %70 : vector<8x8x128xf32>
    %cst_35 = arith.constant dense<0.000000e+00> : vector<8x8xf32>
    %72 = vector.multi_reduction <add>, %71, %cst_35 [2] : vector<8x8x128xf32> to vector<8x8xf32>
    %c0_36 = arith.constant 0 : index
    %c0_37 = arith.constant 0 : index
    %73 = vector.load %arg14[%c0_36, %c0_37] : memref<1x1xf32, #tpu.memory_space<vmem>>, vector<1x1xf32>
    %74 = vector.broadcast %73 : vector<1x1xf32> to vector<8x8xf32>
    %75 = arith.addf %72, %74 : vector<8x8xf32>
    %cst_38 = arith.constant 0.000000e+00 : f32
    %76 = vector.broadcast %cst_38 : f32 to vector<8x8xf32>
    %77 = arith.cmpf ogt, %2, %76 : vector<8x8xf32>
    %cst_39 = arith.constant 0xFF800000 : f32
    %78 = vector.broadcast %cst_39 : f32 to vector<8x8xf32>
    %79 = arith.select %77, %75, %78 : vector<8x8xi1>, vector<8x8xf32>
    %cst_40 = arith.constant dense<0xFF800000> : vector<8xf32>
    %80 = vector.multi_reduction <maximumf>, %79, %cst_40 [1] : vector<8x8xf32> to vector<8xf32>
    %81 = vector.shape_cast %80 : vector<8xf32> to vector<8x1xf32>
    %cst_41 = arith.constant 0xFF800000 : f32
    %82 = vector.broadcast %cst_41 : f32 to vector<8x1xf32>
    %83 = arith.cmpf oeq, %81, %82 : vector<8x1xf32>
    %cst_42 = arith.constant 0.000000e+00 : f32
    %84 = vector.broadcast %cst_42 : f32 to vector<8x1xf32>
    %85 = arith.select %83, %84, %81 : vector<8x1xi1>, vector<8x1xf32>
    %86 = vector.broadcast %85 : vector<8x1xf32> to vector<8x8xf32>
    %87 = arith.subf %79, %86 : vector<8x8xf32>
    %88 = math.exp %87 : vector<8x8xf32>
    %cst_43 = arith.constant 0.000000e+00 : f32
    %89 = vector.broadcast %cst_43 : f32 to vector<8x8xf32>
    %90 = arith.select %77, %88, %89 : vector<8x8xi1>, vector<8x8xf32>
    %cst_44 = arith.constant dense<0.000000e+00> : vector<8xf32>
    %91 = vector.multi_reduction <add>, %90, %cst_44 [1] : vector<8x8xf32> to vector<8xf32>
    %92 = vector.shape_cast %91 : vector<8xf32> to vector<8x1xf32>
    %cst_45 = arith.constant 0.000000e+00 : f32
    %93 = vector.broadcast %cst_45 : f32 to vector<8x1xf32>
    %94 = arith.cmpf ogt, %92, %93 : vector<8x1xf32>
    %95 = vector.broadcast %92 : vector<8x1xf32> to vector<8x8xf32>
    %96 = arith.divf %90, %95 : vector<8x8xf32>
    %cst_46 = arith.constant 0.000000e+00 : f32
    %97 = vector.shape_cast %94 : vector<8x1xi1> to vector<8x1xi1>
    %98 = vector.broadcast %97 : vector<8x1xi1> to vector<8x8xi1>
    %99 = vector.broadcast %cst_46 : f32 to vector<8x8xf32>
    %100 = arith.select %98, %96, %99 : vector<8x8xi1>, vector<8x8xf32>
    %101 = vector.shape_cast %100 : vector<8x8xf32> to vector<8x8x1xf32>
    %102 = vector.broadcast %101 : vector<8x8x1xf32> to vector<8x8x128xf32>
    %103 = arith.mulf %102, %1 : vector<8x8x128xf32>
    %cst_47 = arith.constant dense<0.000000e+00> : vector<8x128xf32>
    %104 = vector.multi_reduction <add>, %103, %cst_47 [1] : vector<8x8x128xf32> to vector<8x128xf32>
    %105 = arith.addf %19, %104 : vector<8x128xf32>
    %c0_48 = arith.constant 0 : index
    %c0_49 = arith.constant 0 : index
    %106 = vector.load %arg15[%c0_48, %c0_49] : memref<8x128xf32, #tpu.memory_space<vmem>>, vector<8x128xf32>
    tpu.vector_store %arg15[%c0_48, %c0_49], %105 {strides = array<i32>} : memref<8x128xf32, #tpu.memory_space<vmem>>, vector<8x128xf32>,
    return
  }
  func.func @transform_0(%arg0: i32) -> (i32, i32) {
    %c0_i32 = arith.constant 0 : i32
    %c0_i32_0 = arith.constant 0 : i32
    return %arg0, %c0_i32 : i32, i32
  }
  func.func @transform_1(%arg0: i32) -> (i32, i32, i32) {
    %c0_i32 = arith.constant 0 : i32
    %c0_i32_0 = arith.constant 0 : i32
    %c0_i32_1 = arith.constant 0 : i32
    return %arg0, %c0_i32, %c0_i32_0 : i32, i32, i32
  }
  func.func @transform_2(%arg0: i32) -> (i32, i32, i32) {
    %c0_i32 = arith.constant 0 : i32
    %c0_i32_0 = arith.constant 0 : i32
    %c0_i32_1 = arith.constant 0 : i32
    return %arg0, %c0_i32, %c0_i32_0 : i32, i32, i32
  }
  func.func @transform_3(%arg0: i32) -> (i32, i32) {
    %c0_i32 = arith.constant 0 : i32
    %c0_i32_0 = arith.constant 0 : i32
    return %arg0, %c0_i32 : i32, i32
  }
  func.func @transform_4(%arg0: i32) -> (i32, i32) {
    %c0_i32 = arith.constant 0 : i32
    %c0_i32_0 = arith.constant 0 : i32
    %c0_i32_1 = arith.constant 0 : i32
    return %c0_i32, %c0_i32_0 : i32, i32
  }
  func.func @transform_5(%arg0: i32) -> (i32, i32) {
    %c0_i32 = arith.constant 0 : i32
    %c0_i32_0 = arith.constant 0 : i32
    %c0_i32_1 = arith.constant 0 : i32
    return %c0_i32, %c0_i32_0 : i32, i32
  }
  func.func @transform_6(%arg0: i32) -> (i32, i32) {
    %c0_i32 = arith.constant 0 : i32
    %c0_i32_0 = arith.constant 0 : i32
    %c0_i32_1 = arith.constant 0 : i32
    return %c0_i32, %c0_i32_0 : i32, i32
  }
  func.func @transform_7(%arg0: i32) -> (i32, i32) {
    %c0_i32 = arith.constant 0 : i32
    %c0_i32_0 = arith.constant 0 : i32
    %c0_i32_1 = arith.constant 0 : i32
    return %c0_i32, %c0_i32_0 : i32, i32
  }
  func.func @transform_8(%arg0: i32) -> (i32, i32) {
    %c0_i32 = arith.constant 0 : i32
    %c0_i32_0 = arith.constant 0 : i32
    %c0_i32_1 = arith.constant 0 : i32
    return %c0_i32, %c0_i32_0 : i32, i32
  }
  func.func @transform_9(%arg0: i32) -> (i32, i32) {
    %c0_i32 = arith.constant 0 : i32
    %c0_i32_0 = arith.constant 0 : i32
    %c0_i32_1 = arith.constant 0 : i32
    return %c0_i32, %c0_i32_0 : i32, i32
  }
  func.func @transform_10(%arg0: i32) -> (i32, i32) {
    %c0_i32 = arith.constant 0 : i32
    %c0_i32_0 = arith.constant 0 : i32
    %c0_i32_1 = arith.constant 0 : i32
    return %c0_i32, %c0_i32_0 : i32, i32
  }
  func.func @transform_11(%arg0: i32) -> (i32, i32) {
    %c0_i32 = arith.constant 0 : i32
    %c0_i32_0 = arith.constant 0 : i32
    %c0_i32_1 = arith.constant 0 : i32
    return %c0_i32, %c0_i32_0 : i32, i32
  }
  func.func @transform_12(%arg0: i32) -> (i32, i32) {
    %c0_i32 = arith.constant 0 : i32
    %c0_i32_0 = arith.constant 0 : i32
    %c0_i32_1 = arith.constant 0 : i32
    return %c0_i32, %c0_i32_0 : i32, i32
  }
  func.func @transform_13(%arg0: i32) -> (i32, i32) {
    %c0_i32 = arith.constant 0 : i32
    %c0_i32_0 = arith.constant 0 : i32
    %c0_i32_1 = arith.constant 0 : i32
    return %c0_i32, %c0_i32_0 : i32, i32
  }
  func.func @transform_14(%arg0: i32) -> (i32, i32) {
    %c0_i32 = arith.constant 0 : i32
    %c0_i32_0 = arith.constant 0 : i32
    return %arg0, %c0_i32 : i32, i32
  }
}

</mosaic_0001>

<llo_original>
// kernel: tpu_custom_call.1
$region0: #{tpu_custom_call.1}
  #allocation0 [shape = 'u32[]', space=smem, size = 0x4, offset = 0x4, fixed_abs, tag = 'smem constant byte address 0x4 - core index']
  #allocation1 [shape = 'u32[144,128]{1,0:T(1,128)}', space=vmem, size = 0x12000, scoped, tag = 'internal scratch']
  #allocation2 [shape = 'f32[1,1]{1,0:T(1,128)S(1)}', space=vmem, size = 0x200, scoped, tag = 'scoped memory for tpu_custom_call.1']
  #allocation3 [shape = 'f32[1,1]{1,0:T(1,128)S(1)}', space=vmem, size = 0x200, scoped, tag = 'scoped memory for tpu_custom_call.1']
  %s0 = inlined_call_operand.vmem [shape: f32[16,128], index: 0, kind: input, shape index: {}]
  %s1 = inlined_call_operand.vmem [shape: f32[16,8,128], index: 1, kind: input, shape index: {}]
  %s2 = inlined_call_operand.vmem [shape: bf16[16,64,32], index: 2, kind: input, shape index: {}]
  %s3 = inlined_call_operand.vmem [shape: f32[16,8], index: 3, kind: input, shape index: {}]
  %s4 = inlined_call_operand.vmem [shape: bf16[32,256], index: 4, kind: input, shape index: {}]
  %s5 = inlined_call_operand.vmem [shape: f32[1,256], index: 5, kind: input, shape index: {}]
  %s6 = inlined_call_operand.vmem [shape: bf16[128,256], index: 6, kind: input, shape index: {}]
  %s7 = inlined_call_operand.vmem [shape: f32[1,256], index: 7, kind: input, shape index: {}]
  %s8 = inlined_call_operand.vmem [shape: f32[1,128], index: 8, kind: input, shape index: {}]
  %s9 = inlined_call_operand.<no memory space> [shape: f32[1,1], index: 9, kind: input, shape index: {}]
  %s10 = inlined_call_operand.vmem [shape: bf16[256,128], index: 10, kind: input, shape index: {}]
  %s11 = inlined_call_operand.vmem [shape: f32[1,128], index: 11, kind: input, shape index: {}]
  %s12 = inlined_call_operand.vmem [shape: f32[1,128], index: 12, kind: input, shape index: {}]
  %s13 = inlined_call_operand.<no memory space> [shape: f32[1,1], index: 13, kind: input, shape index: {}]
  %s14 = inlined_call_operand.hbm [shape: f32[16,128], index: 14, kind: output, shape index: {}]
  %s15 = sld [smem:[#allocation0]]
  $region89: #{tpu_custom_call.1} parent=0
    _
  %s17 = ssub.s32 1, %s15
  %s18 = scalar_select 0, %s17, %s15
  %v19 = vstv %s9
  %20 = vst [vmem:[#allocation2] sm:$0x1] %v19
  %v21 = vstv %s13
  %22 = vst [vmem:[#allocation3] sm:$0x1] %v21
  $region1: #{tpu_custom_call.1} parent=0
    #allocation4 [shape = 'u8[8192]{0}', space=vmem, size = 0x2000, scoped, tag = 'output window, operand 0']
    #allocation5 [shape = 's32[2]{0}', space=sflag, size = 0x8, scoped, tag = 'scoped memory for tpu_custom_call.1']
    %23 = vsyncpa [#allocation5], 0
    %s24 = scalar_lea.sflag [#allocation5], 1
    %25 = vsyncpa %s24, 0
    loop: start=0, step=1, limit=4
    $region2: #{tpu_custom_call.1} parent=1 // loop_pre_header
      _
    $region3: #{tpu_custom_call.1} parent=1 // loop_header
      %s27 = sphi 0, %s31
      %p28 = scmp.ge.s32.totalorder %s27, 4
      %s37 = sphi 0, %s39
      %s40 = sphi 0, %s37
      %s41 = sphi 0, %s40
      %s57 = sphi 0, %s41
      %s63 = sphi 0, %s65
      %s66 = sphi 0, %s63
      %s67 = sphi 0, %s66
      %s83 = sphi 0, %s67
      %s89 = sphi 0, %s91
      %s92 = sphi 0, %s89
      %s93 = sphi 0, %s92
      %s109 = sphi 0, %s93
      %s115 = sphi 0, %s117
      %s118 = sphi 0, %s115
      %s119 = sphi 0, %s118
      %s135 = sphi 0, %s119
      %s139 = sphi 0, %s139
      %s141 = sphi 0, %s139
      %s142 = sphi 0, %s141
      %s156 = sphi 0, %s142
      %s160 = sphi 0, %s160
      %s162 = sphi 0, %s160
      %s163 = sphi 0, %s162
      %s177 = sphi 0, %s163
      %s181 = sphi 0, %s181
      %s183 = sphi 0, %s181
      %s184 = sphi 0, %s183
      %s198 = sphi 0, %s184
      %s202 = sphi 0, %s202
      %s204 = sphi 0, %s202
      %s205 = sphi 0, %s204
      %s219 = sphi 0, %s205
      %s223 = sphi 0, %s223
      %s225 = sphi 0, %s223
      %s226 = sphi 0, %s225
      %s240 = sphi 0, %s226
      %s244 = sphi 0, %s244
      %s246 = sphi 0, %s244
      %s247 = sphi 0, %s246
      %s261 = sphi 0, %s247
      %s265 = sphi 0, %s265
      %s267 = sphi 0, %s265
      %s268 = sphi 0, %s267
      %s282 = sphi 0, %s268
      %s286 = sphi 0, %s286
      %s288 = sphi 0, %s286
      %s289 = sphi 0, %s288
      %s303 = sphi 0, %s289
      %s307 = sphi 0, %s307
      %s309 = sphi 0, %s307
      %s310 = sphi 0, %s309
      %s324 = sphi 0, %s310
      %s328 = sphi 0, %s328
      %s330 = sphi 0, %s328
      %s331 = sphi 0, %s330
      %s345 = sphi 0, %s331
      %s351 = sphi 0, %s353
      %s354 = sphi 0, %s351
      %s355 = sphi 0, %s354
      %s371 = sphi 0, %s355
    $region4: #{tpu_custom_call.1} parent=1 // loop_header_branch
      %30 = sbr.rel (%p28) target = $region8
    $region5: #{tpu_custom_call.1} parent=1 // loop_body
      %s32 = ssub.s32 %s27, 1
      %s33 = ssub.s32 %s27, 2
      %s34 = sadd.s32 %s27, 1
      %s35 = ssub.s32 %s27, %s34
      %p36 = scmp.eq.s32.totalorder %s35, 0
      %s38 = sadd.s32 %s37, 1
      %s39 = scalar_select %p36, %s37, %s38
      %p42 = pneg %p36
      %p43 = scmp.eq.s32.totalorder %s27, 1
      %p44 = por %p42, %p43
      %p45 = scmp.ne.s32.totalorder %s37, %s40
      %p46 = scmp.eq.s32.totalorder %s27, 0
      %p47 = por %p45, %p46
      %p48 = scmp.ne.s32.totalorder %s37, %s40
      %p49 = scmp.eq.s32.totalorder %s32, 1
      %p50 = por %p48, %p49
      %p51 = scmp.ne.s32.totalorder %s40, %s41
      %p52 = scmp.eq.s32.totalorder %s32, 0
      %p53 = por %p51, %p52
      %p54 = scmp.ne.s32.totalorder %s40, %s41
      %p55 = scmp.eq.s32.totalorder %s33, 1
      %p56 = por %p54, %p55
      %p58 = scmp.ne.s32.totalorder %s41, %s57
      %p59 = scmp.eq.s32.totalorder %s33, 0
      %p60 = por %p58, %p59
      %s61 = ssub.s32 %s27, %s34
      %p62 = scmp.eq.s32.totalorder %s61, 0
      %s64 = sadd.s32 %s63, 1
      %s65 = scalar_select %p62, %s63, %s64
      %p68 = pneg %p62
      %p69 = scmp.eq.s32.totalorder %s27, 1
      %p70 = por %p68, %p69
      %p71 = scmp.ne.s32.totalorder %s63, %s66
      %p72 = scmp.eq.s32.totalorder %s27, 0
      %p73 = por %p71, %p72
      %p74 = scmp.ne.s32.totalorder %s63, %s66
      %p75 = scmp.eq.s32.totalorder %s32, 1
      %p76 = por %p74, %p75
      %p77 = scmp.ne.s32.totalorder %s66, %s67
      %p78 = scmp.eq.s32.totalorder %s32, 0
      %p79 = por %p77, %p78
      %p80 = scmp.ne.s32.totalorder %s66, %s67
      %p81 = scmp.eq.s32.totalorder %s33, 1
      %p82 = por %p80, %p81
      %p84 = scmp.ne.s32.totalorder %s67, %s83
      %p85 = scmp.eq.s32.totalorder %s33, 0
      %p86 = por %p84, %p85
      %s87 = ssub.s32 %s27, %s34
      %p88 = scmp.eq.s32.totalorder %s87, 0
      %s90 = sadd.s32 %s89, 1
      %s91 = scalar_select %p88, %s89, %s90
      %p94 = pneg %p88
      %p95 = scmp.eq.s32.totalorder %s27, 1
      %p96 = por %p94, %p95
      %p97 = scmp.ne.s32.totalorder %s89, %s92
      %p98 = scmp.eq.s32.totalorder %s27, 0
      %p99 = por %p97, %p98
      %p100 = scmp.ne.s32.totalorder %s89, %s92
      %p101 = scmp.eq.s32.totalorder %s32, 1
      %p102 = por %p100, %p101
      %p103 = scmp.ne.s32.totalorder %s92, %s93
      %p104 = scmp.eq.s32.totalorder %s32, 0
      %p105 = por %p103, %p104
      %p106 = scmp.ne.s32.totalorder %s92, %s93
      %p107 = scmp.eq.s32.totalorder %s33, 1
      %p108 = por %p106, %p107
      %p110 = scmp.ne.s32.totalorder %s93, %s109
      %p111 = scmp.eq.s32.totalorder %s33, 0
      %p112 = por %p110, %p111
      %s113 = ssub.s32 %s27, %s34
      %p114 = scmp.eq.s32.totalorder %s113, 0
      %s116 = sadd.s32 %s115, 1
      %s117 = scalar_select %p114, %s115, %s116
      %p120 = pneg %p114
      %p121 = scmp.eq.s32.totalorder %s27, 1
      %p122 = por %p120, %p121
      %p123 = scmp.ne.s32.totalorder %s115, %s118
      %p124 = scmp.eq.s32.totalorder %s27, 0
      %p125 = por %p123, %p124
      %p126 = scmp.ne.s32.totalorder %s115, %s118
      %p127 = scmp.eq.s32.totalorder %s32, 1
      %p128 = por %p126, %p127
      %p129 = scmp.ne.s32.totalorder %s118, %s119
      %p130 = scmp.eq.s32.totalorder %s32, 0
      %p131 = por %p129, %p130
      %p132 = scmp.ne.s32.totalorder %s118, %s119
      %p133 = scmp.eq.s32.totalorder %s33, 1
      %p134 = por %p132, %p133
      %p136 = scmp.ne.s32.totalorder %s119, %s135
      %p137 = scmp.eq.s32.totalorder %s33, 0
      %p138 = por %p136, %p137
      %s140 = sadd.s32 %s139, 1
      %p143 = scmp.eq.s32.totalorder %s27, 1
      %p144 = scmp.ne.s32.totalorder %s139, %s141
      %p145 = scmp.eq.s32.totalorder %s27, 0
      %p146 = por %p144, %p145
      %p147 = scmp.ne.s32.totalorder %s139, %s141
      %p148 = scmp.eq.s32.totalorder %s32, 1
      %p149 = por %p147, %p148
      %p150 = scmp.ne.s32.totalorder %s141, %s142
      %p151 = scmp.eq.s32.totalorder %s32, 0
      %p152 = por %p150, %p151
      %p153 = scmp.ne.s32.totalorder %s141, %s142
      %p154 = scmp.eq.s32.totalorder %s33, 1
      %p155 = por %p153, %p154
      %p157 = scmp.ne.s32.totalorder %s142, %s156
      %p158 = scmp.eq.s32.totalorder %s33, 0
      %p159 = por %p157, %p158
      %s161 = sadd.s32 %s160, 1
      %p164 = scmp.eq.s32.totalorder %s27, 1
      %p165 = scmp.ne.s32.totalorder %s160, %s162
      %p166 = scmp.eq.s32.totalorder %s27, 0
      %p167 = por %p165, %p166
      %p168 = scmp.ne.s32.totalorder %s160, %s162
      %p169 = scmp.eq.s32.totalorder %s32, 1
      %p170 = por %p168, %p169
      %p171 = scmp.ne.s32.totalorder %s162, %s163
      %p172 = scmp.eq.s32.totalorder %s32, 0
      %p173 = por %p171, %p172
      %p174 = scmp.ne.s32.totalorder %s162, %s163
      %p175 = scmp.eq.s32.totalorder %s33, 1
      %p176 = por %p174, %p175
      %p178 = scmp.ne.s32.totalorder %s163, %s177
      %p179 = scmp.eq.s32.totalorder %s33, 0
      %p180 = por %p178, %p179
      %s182 = sadd.s32 %s181, 1
      %p185 = scmp.eq.s32.totalorder %s27, 1
      %p186 = scmp.ne.s32.totalorder %s181, %s183
      %p187 = scmp.eq.s32.totalorder %s27, 0
      %p188 = por %p186, %p187
      %p189 = scmp.ne.s32.totalorder %s181, %s183
      %p190 = scmp.eq.s32.totalorder %s32, 1
      %p191 = por %p189, %p190
      %p192 = scmp.ne.s32.totalorder %s183, %s184
      %p193 = scmp.eq.s32.totalorder %s32, 0
      %p194 = por %p192, %p193
      %p195 = scmp.ne.s32.totalorder %s183, %s184
      %p196 = scmp.eq.s32.totalorder %s33, 1
      %p197 = por %p195, %p196
      %p199 = scmp.ne.s32.totalorder %s184, %s198
      %p200 = scmp.eq.s32.totalorder %s33, 0
      %p201 = por %p199, %p200
      %s203 = sadd.s32 %s202, 1
      %p206 = scmp.eq.s32.totalorder %s27, 1
      %p207 = scmp.ne.s32.totalorder %s202, %s204
      %p208 = scmp.eq.s32.totalorder %s27, 0
      %p209 = por %p207, %p208
      %p210 = scmp.ne.s32.totalorder %s202, %s204
      %p211 = scmp.eq.s32.totalorder %s32, 1
      %p212 = por %p210, %p211
      %p213 = scmp.ne.s32.totalorder %s204, %s205
      %p214 = scmp.eq.s32.totalorder %s32, 0
      %p215 = por %p213, %p214
      %p216 = scmp.ne.s32.totalorder %s204, %s205
      %p217 = scmp.eq.s32.totalorder %s33, 1
      %p218 = por %p216, %p217
      %p220 = scmp.ne.s32.totalorder %s205, %s219
      %p221 = scmp.eq.s32.totalorder %s33, 0
      %p222 = por %p220, %p221
      %s224 = sadd.s32 %s223, 1
      %p227 = scmp.eq.s32.totalorder %s27, 1
      %p228 = scmp.ne.s32.totalorder %s223, %s225
      %p229 = scmp.eq.s32.totalorder %s27, 0
      %p230 = por %p228, %p229
      %p231 = scmp.ne.s32.totalorder %s223, %s225
      %p232 = scmp.eq.s32.totalorder %s32, 1
      %p233 = por %p231, %p232
      %p234 = scmp.ne.s32.totalorder %s225, %s226
      %p235 = scmp.eq.s32.totalorder %s32, 0
      %p236 = por %p234, %p235
      %p237 = scmp.ne.s32.totalorder %s225, %s226
      %p238 = scmp.eq.s32.totalorder %s33, 1
      %p239 = por %p237, %p238
      %p241 = scmp.ne.s32.totalorder %s226, %s240
      %p242 = scmp.eq.s32.totalorder %s33, 0
      %p243 = por %p241, %p242
      %s245 = sadd.s32 %s244, 1
      %p248 = scmp.eq.s32.totalorder %s27, 1
      %p249 = scmp.ne.s32.totalorder %s244, %s246
      %p250 = scmp.eq.s32.totalorder %s27, 0
      %p251 = por %p249, %p250
      %p252 = scmp.ne.s32.totalorder %s244, %s246
      %p253 = scmp.eq.s32.totalorder %s32, 1
      %p254 = por %p252, %p253
      %p255 = scmp.ne.s32.totalorder %s246, %s247
      %p256 = scmp.eq.s32.totalorder %s32, 0
      %p257 = por %p255, %p256
      %p258 = scmp.ne.s32.totalorder %s246, %s247
      %p259 = scmp.eq.s32.totalorder %s33, 1
      %p260 = por %p258, %p259
      %p262 = scmp.ne.s32.totalorder %s247, %s261
      %p263 = scmp.eq.s32.totalorder %s33, 0
      %p264 = por %p262, %p263
      %s266 = sadd.s32 %s265, 1
      %p269 = scmp.eq.s32.totalorder %s27, 1
      %p270 = scmp.ne.s32.totalorder %s265, %s267
      %p271 = scmp.eq.s32.totalorder %s27, 0
      %p272 = por %p270, %p271
      %p273 = scmp.ne.s32.totalorder %s265, %s267
      %p274 = scmp.eq.s32.totalorder %s32, 1
      %p275 = por %p273, %p274
      %p276 = scmp.ne.s32.totalorder %s267, %s268
      %p277 = scmp.eq.s32.totalorder %s32, 0
      %p278 = por %p276, %p277
      %p279 = scmp.ne.s32.totalorder %s267, %s268
      %p280 = scmp.eq.s32.totalorder %s33, 1
      %p281 = por %p279, %p280
      %p283 = scmp.ne.s32.totalorder %s268, %s282
      %p284 = scmp.eq.s32.totalorder %s33, 0
      %p285 = por %p283, %p284
      %s287 = sadd.s32 %s286, 1
      %p290 = scmp.eq.s32.totalorder %s27, 1
      %p291 = scmp.ne.s32.totalorder %s286, %s288
      %p292 = scmp.eq.s32.totalorder %s27, 0
      %p293 = por %p291, %p292
      %p294 = scmp.ne.s32.totalorder %s286, %s288
      %p295 = scmp.eq.s32.totalorder %s32, 1
      %p296 = por %p294, %p295
      %p297 = scmp.ne.s32.totalorder %s288, %s289
      %p298 = scmp.eq.s32.totalorder %s32, 0
      %p299 = por %p297, %p298
      %p300 = scmp.ne.s32.totalorder %s288, %s289
      %p301 = scmp.eq.s32.totalorder %s33, 1
      %p302 = por %p300, %p301
      %p304 = scmp.ne.s32.totalorder %s289, %s303
      %p305 = scmp.eq.s32.totalorder %s33, 0
      %p306 = por %p304, %p305
      %s308 = sadd.s32 %s307, 1
      %p311 = scmp.eq.s32.totalorder %s27, 1
      %p312 = scmp.ne.s32.totalorder %s307, %s309
      %p313 = scmp.eq.s32.totalorder %s27, 0
      %p314 = por %p312, %p313
      %p315 = scmp.ne.s32.totalorder %s307, %s309
      %p316 = scmp.eq.s32.totalorder %s32, 1
      %p317 = por %p315, %p316
      %p318 = scmp.ne.s32.totalorder %s309, %s310
      %p319 = scmp.eq.s32.totalorder %s32, 0
      %p320 = por %p318, %p319
      %p321 = scmp.ne.s32.totalorder %s309, %s310
      %p322 = scmp.eq.s32.totalorder %s33, 1
      %p323 = por %p321, %p322
      %p325 = scmp.ne.s32.totalorder %s310, %s324
      %p326 = scmp.eq.s32.totalorder %s33, 0
      %p327 = por %p325, %p326
      %s329 = sadd.s32 %s328, 1
      %p332 = scmp.eq.s32.totalorder %s27, 1
      %p333 = scmp.ne.s32.totalorder %s328, %s330
      %p334 = scmp.eq.s32.totalorder %s27, 0
      %p335 = por %p333, %p334
      %p336 = scmp.ne.s32.totalorder %s328, %s330
      %p337 = scmp.eq.s32.totalorder %s32, 1
      %p338 = por %p336, %p337
      %p339 = scmp.ne.s32.totalorder %s330, %s331
      %p340 = scmp.eq.s32.totalorder %s32, 0
      %p341 = por %p339, %p340
      %p342 = scmp.ne.s32.totalorder %s330, %s331
      %p343 = scmp.eq.s32.totalorder %s33, 1
      %p344 = por %p342, %p343
      %p346 = scmp.ne.s32.totalorder %s331, %s345
      %p347 = scmp.eq.s32.totalorder %s33, 0
      %p348 = por %p346, %p347
      %s349 = ssub.s32 %s27, %s34
      %p350 = scmp.eq.s32.totalorder %s349, 0
      %s352 = sadd.s32 %s351, 1
      %s353 = scalar_select %p350, %s351, %s352
      %p356 = pneg %p350
      %p357 = scmp.eq.s32.totalorder %s27, 1
      %p358 = por %p356, %p357
      %p359 = scmp.ne.s32.totalorder %s351, %s354
      %p360 = scmp.eq.s32.totalorder %s27, 0
      %p361 = por %p359, %p360
      %p362 = scmp.ne.s32.totalorder %s351, %s354
      %p363 = scmp.eq.s32.totalorder %s32, 1
      %p364 = por %p362, %p363
      %p365 = scmp.ne.s32.totalorder %s354, %s355
      %p366 = scmp.eq.s32.totalorder %s32, 0
      %p367 = por %p365, %p366
      %p368 = scmp.ne.s32.totalorder %s354, %s355
      %p369 = scmp.eq.s32.totalorder %s33, 1
      %p370 = por %p368, %p369
      %p372 = scmp.ne.s32.totalorder %s355, %s371
      %p373 = scmp.eq.s32.totalorder %s33, 0
      %p374 = por %p372, %p373
      %p375 = scmp.le.s32.totalorder 1, %s27
      %p376 = scmp.lt.s32.totalorder %s27, 3
      %p377 = pnand %p375, %p376
      %p378 = pneg %p377
      // Predicated region
      $region9: #{tpu_custom_call.1} parent=5 // pred_check
        _
      $region10: #{tpu_custom_call.1} parent=5 // pred_check_branch
        %380 = sbr.rel (%p377) target = $region12
      $region11: #{tpu_custom_call.1} parent=5 // pred_region
        %s381 = ssub.s32 %s27, 1
        // Predicated region
        $region13: #{tpu_custom_call.1} parent=11 // pred_check
          %p382 = pneg %p152
        $region14: #{tpu_custom_call.1} parent=11 // pred_check_branch
          %384 = sbr.rel (%p382) target = $region16
        $region15: #{tpu_custom_call.1} parent=11 // pred_region
          _
        $region16: #{tpu_custom_call.1} parent=11 // pred_fallthru
          _
        // Predicated region
        $region17: #{tpu_custom_call.1} parent=11 // pred_check
          %p385 = pneg %p173
        $region18: #{tpu_custom_call.1} parent=11 // pred_check_branch
          %387 = sbr.rel (%p385) target = $region20
        $region19: #{tpu_custom_call.1} parent=11 // pred_region
          _
        $region20: #{tpu_custom_call.1} parent=11 // pred_fallthru
          _
        // Predicated region
        $region21: #{tpu_custom_call.1} parent=11 // pred_check
          %p388 = pneg %p194
        $region22: #{tpu_custom_call.1} parent=11 // pred_check_branch
          %390 = sbr.rel (%p388) target = $region24
        $region23: #{tpu_custom_call.1} parent=11 // pred_region
          _
        $region24: #{tpu_custom_call.1} parent=11 // pred_fallthru
          _
        // Predicated region
        $region25: #{tpu_custom_call.1} parent=11 // pred_check
          %p391 = pneg %p215
        $region26: #{tpu_custom_call.1} parent=11 // pred_check_branch
          %393 = sbr.rel (%p391) target = $region28
        $region27: #{tpu_custom_call.1} parent=11 // pred_region
          _
        $region28: #{tpu_custom_call.1} parent=11 // pred_fallthru
          _
        // Predicated region
        $region29: #{tpu_custom_call.1} parent=11 // pred_check
          %p394 = pneg %p236
        $region30: #{tpu_custom_call.1} parent=11 // pred_check_branch
          %396 = sbr.rel (%p394) target = $region32
        $region31: #{tpu_custom_call.1} parent=11 // pred_region
          _
        $region32: #{tpu_custom_call.1} parent=11 // pred_fallthru
          _
        // Predicated region
        $region33: #{tpu_custom_call.1} parent=11 // pred_check
          %p397 = pneg %p257
        $region34: #{tpu_custom_call.1} parent=11 // pred_check_branch
          %399 = sbr.rel (%p397) target = $region36
        $region35: #{tpu_custom_call.1} parent=11 // pred_region
          _
        $region36: #{tpu_custom_call.1} parent=11 // pred_fallthru
          _
        // Predicated region
        $region37: #{tpu_custom_call.1} parent=11 // pred_check
          %p400 = pneg %p278
        $region38: #{tpu_custom_call.1} parent=11 // pred_check_branch
          %402 = sbr.rel (%p400) target = $region40
        $region39: #{tpu_custom_call.1} parent=11 // pred_region
          _
        $region40: #{tpu_custom_call.1} parent=11 // pred_fallthru
          _
        // Predicated region
        $region41: #{tpu_custom_call.1} parent=11 // pred_check
          %p403 = pneg %p299
        $region42: #{tpu_custom_call.1} parent=11 // pred_check_branch
          %405 = sbr.rel (%p403) target = $region44
        $region43: #{tpu_custom_call.1} parent=11 // pred_region
          _
        $region44: #{tpu_custom_call.1} parent=11 // pred_fallthru
          _
        // Predicated region
        $region45: #{tpu_custom_call.1} parent=11 // pred_check
          %p406 = pneg %p320
        $region46: #{tpu_custom_call.1} parent=11 // pred_check_branch
          %408 = sbr.rel (%p406) target = $region48
        $region47: #{tpu_custom_call.1} parent=11 // pred_region
          _
        $region48: #{tpu_custom_call.1} parent=11 // pred_fallthru
          _
        // Predicated region
        $region49: #{tpu_custom_call.1} parent=11 // pred_check
          %p409 = pneg %p341
        $region50: #{tpu_custom_call.1} parent=11 // pred_check_branch
          %411 = sbr.rel (%p409) target = $region52
        $region51: #{tpu_custom_call.1} parent=11 // pred_region
          _
        $region52: #{tpu_custom_call.1} parent=11 // pred_fallthru
          _
      $region12: #{tpu_custom_call.1} parent=5 // pred_fallthru
        _
      %p412 = scmp.lt.s32.totalorder %s27, 2
      // Predicated region
      $region53: #{tpu_custom_call.1} parent=5 // pred_check
        %p413 = pneg %p412
      $region54: #{tpu_custom_call.1} parent=5 // pred_check_branch
        %415 = sbr.rel (%p413) target = $region56
      $region55: #{tpu_custom_call.1} parent=5 // pred_region
        // Predicated region
        $region57: #{tpu_custom_call.1} parent=55 // pred_check
          %p416 = pneg %p47
        $region58: #{tpu_custom_call.1} parent=55 // pred_check_branch
          %418 = sbr.rel (%p416) target = $region60
        $region59: #{tpu_custom_call.1} parent=55 // pred_region
          %p419 = scmp.lt.s32.totalorder %s27, 1
          %s420 = scalar_select %p419, %s27, 1
          %s421 = smul.addr %s420, 8
          %s422 = scalar_lea.vmem %s0, %s421
        $region60: #{tpu_custom_call.1} parent=55 // pred_fallthru
          _
        // Predicated region
        $region61: #{tpu_custom_call.1} parent=55 // pred_check
          %p423 = pneg %p73
        $region62: #{tpu_custom_call.1} parent=55 // pred_check_branch
          %425 = sbr.rel (%p423) target = $region64
        $region63: #{tpu_custom_call.1} parent=55 // pred_region
          %s426 = smul.u32 8, %s27
          %p427 = scmp.lt.s32.totalorder %s426, 15
          %s428 = scalar_select %p427, %s426, 15
          %s429 = smul.addr %s428, 8
          %s430 = scalar_lea.vmem %s1, %s429
          %s431 = smul.u32 8, %s27
        $region64: #{tpu_custom_call.1} parent=55 // pred_fallthru
          _
        // Predicated region
        $region65: #{tpu_custom_call.1} parent=55 // pred_check
          %p432 = pneg %p99
        $region66: #{tpu_custom_call.1} parent=55 // pred_check_branch
          %434 = sbr.rel (%p432) target = $region68
        $region67: #{tpu_custom_call.1} parent=55 // pred_region
          %s435 = smul.u32 8, %s27
          %p436 = scmp.lt.s32.totalorder %s435, 15
          %s437 = scalar_select %p436, %s435, 15
          %s438 = smul.addr %s437, 8
          %s439 = smul.addr %s438, 4
          %s440 = scalar_lea.vmem %s2, %s439
          %s441 = smul.u32 8, %s27
        $region68: #{tpu_custom_call.1} parent=55 // pred_fallthru
          _
        // Predicated region
        $region69: #{tpu_custom_call.1} parent=55 // pred_check
          %p442 = pneg %p125
        $region70: #{tpu_custom_call.1} parent=55 // pred_check_branch
          %444 = sbr.rel (%p442) target = $region72
        $region71: #{tpu_custom_call.1} parent=55 // pred_region
          %p445 = scmp.lt.s32.totalorder %s27, 1
          %s446 = scalar_select %p445, %s27, 1
          %s447 = smul.addr %s446, 8
          %s448 = scalar_lea.vmem %s3, %s447
        $region72: #{tpu_custom_call.1} parent=55 // pred_fallthru
          _
      $region56: #{tpu_custom_call.1} parent=5 // pred_fallthru
        _
      %p449 = scmp.le.s32.totalorder 1, %s27
      %p450 = scmp.lt.s32.totalorder %s27, 3
      %p451 = pnand %p449, %p450
      %p452 = pneg %p451
      // Predicated region
      $region73: #{tpu_custom_call.1} parent=5 // pred_check
        _
      $region74: #{tpu_custom_call.1} parent=5 // pred_check_branch
        %454 = sbr.rel (%p451) target = $region76
      $region75: #{tpu_custom_call.1} parent=5 // pred_region
        %s455 = ssub.s32 %s27, 1
        %p456 = scmp.lt.s32.totalorder %s32, 1
        %s457 = scalar_select %p456, %s32, 1
        %s458 = smul.addr %s457, 8
        %s459 = scalar_lea.vmem %s0, %s458
        %p460 = pneg %p53
        %p461 = pneg %p50
        %s462 = smul.u32 8, %s32
        %p463 = scmp.lt.s32.totalorder %s462, 15
        %s464 = scalar_select %p463, %s462, 15
        %s465 = smul.addr %s464, 8
        %s466 = scalar_lea.vmem %s1, %s465
        %p467 = pneg %p79
        %p468 = pneg %p76
        %s469 = smul.u32 8, %s32
        %p470 = scmp.lt.s32.totalorder %s469, 15
        %s471 = scalar_select %p470, %s469, 15
        %s472 = smul.addr %s471, 8
        %s473 = smul.addr %s472, 4
        %s474 = scalar_lea.vmem %s2, %s473
        %p475 = pneg %p105
        %p476 = pneg %p102
        %p477 = scmp.lt.s32.totalorder %s32, 1
        %s478 = scalar_select %p477, %s32, 1
        %s479 = smul.addr %s478, 8
        %s480 = scalar_lea.vmem %s3, %s479
        %p481 = pneg %p131
        %p482 = pneg %p128
        %p483 = pneg %p152
        %p484 = pneg %p149
        %p485 = pneg %p173
        %p486 = pneg %p170
        %p487 = pneg %p194
        %p488 = pneg %p191
        %p489 = pneg %p215
        %p490 = pneg %p212
        %p491 = pneg %p236
        %p492 = pneg %p233
        %p493 = pneg %p257
        %p494 = pneg %p254
        %p495 = pneg %p278
        %p496 = pneg %p275
        %p497 = pneg %p299
        %p498 = pneg %p296
        %p499 = pneg %p320
        %p500 = pneg %p317
        %p501 = pneg %p341
        %p502 = pneg %p338
        %p503 = pneg %p367
        %p504 = pneg %p364
        %s505 = sand.u32 %s354, 1
        %s506 = scalar_lea.sflag [#allocation5], %s505
        %s507 = sand.u32 %s354, 1
        %s508 = smul.addr %s507, 8
        %s509 = scalar_lea.vmem [#allocation4], %s508
        %p510 = scmp.lt.s32.totalorder %s32, 1
        %s511 = scalar_select %p510, %s32, 1
        %s512 = smul.addr %s511, 8
        %s513 = scalar_lea.vmem %s0, %s512
        %s514 = smul.u32 8, %s32
        %p515 = scmp.lt.s32.totalorder %s514, 15
        %s516 = scalar_select %p515, %s514, 15
        %s517 = smul.addr %s516, 8
        %s518 = scalar_lea.vmem %s1, %s517
        %s519 = smul.u32 8, %s32
        %s520 = smul.u32 8, %s32
        %p521 = scmp.lt.s32.totalorder %s520, 15
        %s522 = scalar_select %p521, %s520, 15
        %s523 = smul.addr %s522, 8
        %s524 = smul.addr %s523, 4
        %s525 = scalar_lea.vmem %s2, %s524
        %s526 = smul.u32 8, %s32
        %p527 = scmp.lt.s32.totalorder %s32, 1
        %s528 = scalar_select %p527, %s32, 1
        %s529 = smul.addr %s528, 8
        %s530 = scalar_lea.vmem %s3, %s529
        %v532 = vld [vmem:[%s513] sm:$0xff]
        %v533 = vld [vmem:[%s518] sm:$0xff]
        %v534 = vld [vmem:[%s518 + $0x8] sm:$0xff]
        %v535 = vld [vmem:[%s518 + $0x10] sm:$0xff]
        %v536 = vld [vmem:[%s518 + $0x18] sm:$0xff]
        %v537 = vld [vmem:[%s518 + $0x20] sm:$0xff]
        %v538 = vld [vmem:[%s518 + $0x28] sm:$0xff]
        %v539 = vld [vmem:[%s518 + $0x30] sm:$0xff]
        %v540 = vld [vmem:[%s518 + $0x38] sm:$0xff]
        %v541 = vld [vmem:[%s530] sm:$0xff]
        %v542 = vld [vmem:[%s525] sm:$0xf]
        %v543 = vld [vmem:[%s525 + $0x4] sm:$0xf]
        %v544 = vld [vmem:[%s525 + $0x8] sm:$0xf]
        %v545 = vld [vmem:[%s525 + $0xc] sm:$0xf]
        %v546 = vld [vmem:[%s525 + $0x10] sm:$0xf]
        %v547 = vld [vmem:[%s525 + $0x14] sm:$0xf]
        %v548 = vld [vmem:[%s525 + $0x18] sm:$0xf]
        %v549 = vld [vmem:[%s525 + $0x1c] sm:$0xf]
        %v550 = vld [vmem:[%s525 + $0x20] sm:$0xf]
        %v551 = vld [vmem:[%s525 + $0x24] sm:$0xf]
        %v552 = vld [vmem:[%s525 + $0x28] sm:$0xf]
        %v553 = vld [vmem:[%s525 + $0x2c] sm:$0xf]
        %v554 = vld [vmem:[%s525 + $0x30] sm:$0xf]
        %v555 = vld [vmem:[%s525 + $0x34] sm:$0xf]
        %v556 = vld [vmem:[%s525 + $0x38] sm:$0xf]
        %v557 = vld [vmem:[%s525 + $0x3c] sm:$0xf]
        %v558 = vld [vmem:[%s525 + $0x40] sm:$0xf]
        %v559 = vld [vmem:[%s525 + $0x44] sm:$0xf]
        %v560 = vld [vmem:[%s525 + $0x48] sm:$0xf]
        %v561 = vld [vmem:[%s525 + $0x4c] sm:$0xf]
        %v562 = vld [vmem:[%s525 + $0x50] sm:$0xf]
        %v563 = vld [vmem:[%s525 + $0x54] sm:$0xf]
        %v564 = vld [vmem:[%s525 + $0x58] sm:$0xf]
        %v565 = vld [vmem:[%s525 + $0x5c] sm:$0xf]
        %v566 = vld [vmem:[%s525 + $0x60] sm:$0xf]
        %v567 = vld [vmem:[%s525 + $0x64] sm:$0xf]
        %v568 = vld [vmem:[%s525 + $0x68] sm:$0xf]
        %v569 = vld [vmem:[%s525 + $0x6c] sm:$0xf]
        %v570 = vld [vmem:[%s525 + $0x70] sm:$0xf]
        %v571 = vld [vmem:[%s525 + $0x74] sm:$0xf]
        %v572 = vld [vmem:[%s525 + $0x78] sm:$0xf]
        %v573 = vld [vmem:[%s525 + $0x7c] sm:$0xf]
        %v574 = vld [vmem:[%s525 + $0x80] sm:$0xf]
        %v575 = vld [vmem:[%s525 + $0x84] sm:$0xf]
        %v576 = vld [vmem:[%s525 + $0x88] sm:$0xf]
        %v577 = vld [vmem:[%s525 + $0x8c] sm:$0xf]
        %v578 = vld [vmem:[%s525 + $0x90] sm:$0xf]
        %v579 = vld [vmem:[%s525 + $0x94] sm:$0xf]
        %v580 = vld [vmem:[%s525 + $0x98] sm:$0xf]
        %v581 = vld [vmem:[%s525 + $0x9c] sm:$0xf]
        %v582 = vld [vmem:[%s525 + $0xa0] sm:$0xf]
        %v583 = vld [vmem:[%s525 + $0xa4] sm:$0xf]
        %v584 = vld [vmem:[%s525 + $0xa8] sm:$0xf]
        %v585 = vld [vmem:[%s525 + $0xac] sm:$0xf]
        %v586 = vld [vmem:[%s525 + $0xb0] sm:$0xf]
        %v587 = vld [vmem:[%s525 + $0xb4] sm:$0xf]
        %v588 = vld [vmem:[%s525 + $0xb8] sm:$0xf]
        %v589 = vld [vmem:[%s525 + $0xbc] sm:$0xf]
        %v590 = vld [vmem:[%s525 + $0xc0] sm:$0xf]
        %v591 = vld [vmem:[%s525 + $0xc4] sm:$0xf]
        %v592 = vld [vmem:[%s525 + $0xc8] sm:$0xf]
        %v593 = vld [vmem:[%s525 + $0xcc] sm:$0xf]
        %v594 = vld [vmem:[%s525 + $0xd0] sm:$0xf]
        %v595 = vld [vmem:[%s525 + $0xd4] sm:$0xf]
        %v596 = vld [vmem:[%s525 + $0xd8] sm:$0xf]
        %v597 = vld [vmem:[%s525 + $0xdc] sm:$0xf]
        %v598 = vld [vmem:[%s525 + $0xe0] sm:$0xf]
        %v599 = vld [vmem:[%s525 + $0xe4] sm:$0xf]
        %v600 = vld [vmem:[%s525 + $0xe8] sm:$0xf]
        %v601 = vld [vmem:[%s525 + $0xec] sm:$0xf]
        %v602 = vld [vmem:[%s525 + $0xf0] sm:$0xf]
        %v603 = vld [vmem:[%s525 + $0xf4] sm:$0xf]
        %v604 = vld [vmem:[%s525 + $0xf8] sm:$0xf]
        %v605 = vld [vmem:[%s525 + $0xfc] sm:$0xf]
        %v606 = vld [vmem:[%s4] sm:$0xff]
        %v607 = vld [vmem:[%s4 + $0x8] sm:$0xff]
        %v608 = vld [vmem:[%s4 + $0x10] sm:$0xff]
        %v609 = vld [vmem:[%s4 + $0x18] sm:$0xff]
        %v610 = vld [vmem:[%s5] sm:$0x3]
        %v612 = vlaneseq
        %v613 = vshrl.u32 %v612, 7
        %v614 = vsub.s32 0, %v613
        %v615 = vrot.slane %v610, %v614
        %v616 = vlaneseq
        %v617 = vshrl.u32 %v616, 7
        %v618 = vsub.s32 1, %v617
        %v619 = vrot.slane %v610, %v618
        %v686 = vunpack.c.l.b16 %v542
        %v687 = vunpack.c.l.b16 %v543
        %v688 = vunpack.c.l.b16 %v544
        %v689 = vunpack.c.l.b16 %v545
        %v690 = vunpack.c.l.b16 %v546
        %v691 = vunpack.c.l.b16 %v547
        %v692 = vunpack.c.l.b16 %v548
        %v693 = vunpack.c.l.b16 %v549
        %v694 = vunpack.c.l.b16 %v550
        %v695 = vunpack.c.l.b16 %v551
        %v696 = vunpack.c.l.b16 %v552
        %v697 = vunpack.c.l.b16 %v553
        %v698 = vunpack.c.l.b16 %v554
        %v699 = vunpack.c.l.b16 %v555
        %v700 = vunpack.c.l.b16 %v556
        %v701 = vunpack.c.l.b16 %v557
        %v702 = vunpack.c.l.b16 %v558
        %v703 = vunpack.c.l.b16 %v559
        %v704 = vunpack.c.l.b16 %v560
        %v705 = vunpack.c.l.b16 %v561
        %v706 = vunpack.c.l.b16 %v562
        %v707 = vunpack.c.l.b16 %v563
        %v708 = vunpack.c.l.b16 %v564
        %v709 = vunpack.c.l.b16 %v565
        %v710 = vunpack.c.l.b16 %v566
        %v711 = vunpack.c.l.b16 %v567
        %v712 = vunpack.c.l.b16 %v568
        %v713 = vunpack.c.l.b16 %v569
        %v714 = vunpack.c.l.b16 %v570
        %v715 = vunpack.c.l.b16 %v571
        %v716 = vunpack.c.l.b16 %v572
        %v717 = vunpack.c.l.b16 %v573
        %v718 = vunpack.c.l.b16 %v574
        %v719 = vunpack.c.l.b16 %v575
        %v720 = vunpack.c.l.b16 %v576
        %v721 = vunpack.c.l.b16 %v577
        %v722 = vunpack.c.l.b16 %v578
        %v723 = vunpack.c.l.b16 %v579
        %v724 = vunpack.c.l.b16 %v580
        %v725 = vunpack.c.l.b16 %v581
        %v726 = vunpack.c.l.b16 %v582
        %v727 = vunpack.c.l.b16 %v583
        %v728 = vunpack.c.l.b16 %v584
        %v729 = vunpack.c.l.b16 %v585
        %v730 = vunpack.c.l.b16 %v586
        %v731 = vunpack.c.l.b16 %v587
        %v732 = vunpack.c.l.b16 %v588
        %v733 = vunpack.c.l.b16 %v589
        %v734 = vunpack.c.l.b16 %v590
        %v735 = vunpack.c.l.b16 %v591
        %v736 = vunpack.c.l.b16 %v592
        %v737 = vunpack.c.l.b16 %v593
        %v738 = vunpack.c.l.b16 %v594
        %v739 = vunpack.c.l.b16 %v595
        %v740 = vunpack.c.l.b16 %v596
        %v741 = vunpack.c.l.b16 %v597
        %v742 = vunpack.c.l.b16 %v598
        %v743 = vunpack.c.l.b16 %v599
        %v744 = vunpack.c.l.b16 %v600
        %v745 = vunpack.c.l.b16 %v601
        %v746 = vunpack.c.l.b16 %v602
        %v747 = vunpack.c.l.b16 %v603
        %v748 = vunpack.c.l.b16 %v604
        %v749 = vunpack.c.l.b16 %v605
        %v750 = vpack.c.b16 %v687, %v686
        %v751 = vpack.c.b16 %v689, %v688
        %v752 = vpack.c.b16 %v691, %v690
        %v753 = vpack.c.b16 %v693, %v692
        %v754 = vpack.c.b16 %v695, %v694
        %v755 = vpack.c.b16 %v697, %v696
        %v756 = vpack.c.b16 %v699, %v698
        %v757 = vpack.c.b16 %v701, %v700
        %v758 = vpack.c.b16 %v703, %v702
        %v759 = vpack.c.b16 %v705, %v704
        %v760 = vpack.c.b16 %v707, %v706
        %v761 = vpack.c.b16 %v709, %v708
        %v762 = vpack.c.b16 %v711, %v710
        %v763 = vpack.c.b16 %v713, %v712
        %v764 = vpack.c.b16 %v715, %v714
        %v765 = vpack.c.b16 %v717, %v716
        %v766 = vpack.c.b16 %v719, %v718
        %v767 = vpack.c.b16 %v721, %v720
        %v768 = vpack.c.b16 %v723, %v722
        %v769 = vpack.c.b16 %v725, %v724
        %v770 = vpack.c.b16 %v727, %v726
        %v771 = vpack.c.b16 %v729, %v728
        %v772 = vpack.c.b16 %v731, %v730
        %v773 = vpack.c.b16 %v733, %v732
        %v774 = vpack.c.b16 %v735, %v734
        %v775 = vpack.c.b16 %v737, %v736
        %v776 = vpack.c.b16 %v739, %v738
        %v777 = vpack.c.b16 %v741, %v740
        %v778 = vpack.c.b16 %v743, %v742
        %v779 = vpack.c.b16 %v745, %v744
        %v780 = vpack.c.b16 %v747, %v746
        %v781 = vpack.c.b16 %v749, %v748
        %v786 = vunpack.c.l.b16 %v606
        %v787 = vunpack.c.h.b16 %v606
        %v788 = vunpack.c.l.b16 %v607
        %v789 = vunpack.c.h.b16 %v607
        %v790 = vunpack.c.l.b16 %v608
        %v791 = vunpack.c.h.b16 %v608
        %v792 = vunpack.c.l.b16 %v609
        %v793 = vunpack.c.h.b16 %v609
        %v794 = vpack.c.b16 %v788, %v786
        %v795 = vpack.c.b16 %v789, %v787
        %v796 = vpack.c.b16 %v792, %v790
        %v797 = vpack.c.b16 %v793, %v791
        %vm802 = vcmask 261120
        %v804 = vsel %vm802, %v750, 0
        %v807 = vsel %vm802, %v751, 0
        %v810 = vsel %vm802, %v752, 0
        %v813 = vsel %vm802, %v753, 0
        %v816 = vsel %vm802, %v754, 0
        %v819 = vsel %vm802, %v755, 0
        %v822 = vsel %vm802, %v756, 0
        %v825 = vsel %vm802, %v757, 0
        %v828 = vsel %vm802, %v758, 0
        %v831 = vsel %vm802, %v759, 0
        %v834 = vsel %vm802, %v760, 0
        %v837 = vsel %vm802, %v761, 0
        %v840 = vsel %vm802, %v762, 0
        %v843 = vsel %vm802, %v763, 0
        %v846 = vsel %vm802, %v764, 0
        %v849 = vsel %vm802, %v765, 0
        %v852 = vsel %vm802, %v766, 0
        %v855 = vsel %vm802, %v767, 0
        %v858 = vsel %vm802, %v768, 0
        %v861 = vsel %vm802, %v769, 0
        %v864 = vsel %vm802, %v770, 0
        %v867 = vsel %vm802, %v771, 0
        %v870 = vsel %vm802, %v772, 0
        %v873 = vsel %vm802, %v773, 0
        %v876 = vsel %vm802, %v774, 0
        %v879 = vsel %vm802, %v775, 0
        %v882 = vsel %vm802, %v776, 0
        %v885 = vsel %vm802, %v777, 0
        %v888 = vsel %vm802, %v778, 0
        %v891 = vsel %vm802, %v779, 0
        %v894 = vsel %vm802, %v780, 0
        %v897 = vsel %vm802, %v781, 0
        %899 = vmatprep.subr.bf16.mxu0 %v795
        %900 = vmatpush1.bf16.msra.mxu0 %v794
        %901 = vmatprep.subr.bf16.mxu0 %v797
        %902 = vmatpush1.bf16.msra.mxu0 %v796
        %903 = vmatprep.subr.bf16.mxu0 0
        %904 = vmatpush1.bf16.msra.mxu0 0
        %905 = vmatprep.subr.bf16.mxu0 0
        %906 = vmatpush1.bf16.msra.mxu0 0
        %907 = vmatprep.subr.bf16.mxu0 0
        %908 = vmatpush1.bf16.msra.mxu0 0
        %909 = vmatprep.subr.bf16.mxu0 0
        %910 = vmatpush1.bf16.msra.mxu0 0
        %911 = vmatprep.subr.bf16.mxu0 0
        %912 = vmatpush1.bf16.msra.mxu0 0
        %913 = vmatprep.subr.bf16.mxu0 0
        %914 = vmatpush1.bf16.msra.mxu0 0
        %915 = vmatprep.subr.bf16.mxu0 0
        %916 = vmatpush1.bf16.msra.mxu0 0
        %917 = vmatprep.subr.bf16.mxu0 0
        %918 = vmatpush1.bf16.msra.mxu0 0
        %919 = vmatprep.subr.bf16.mxu0 0
        %920 = vmatpush1.bf16.msra.mxu0 0
        %921 = vmatprep.subr.bf16.mxu0 0
        %922 = vmatpush1.bf16.msra.mxu0 0
        %923 = vmatprep.subr.bf16.mxu0 0
        %924 = vmatpush1.bf16.msra.mxu0 0
        %925 = vmatprep.subr.bf16.mxu0 0
        %926 = vmatpush1.bf16.msra.mxu0 0
        %927 = vmatprep.subr.bf16.mxu0 0
        %928 = vmatpush1.bf16.msra.mxu0 0
        %929 = vmatprep.subr.bf16.mxu0 0
        %930 = vmatpush1.bf16.msra.mxu0 0
        %931 = vmatprep.mubr.bf16.mxu0 0
        %932 = vmatmul.mubr.bf16.gmra.mrb[0].mxu0 %v804
        %v933 = vpop.f32.mrb[0].mxu0
        %v934 = vadd.f32 %v615, %v933
        %v935 = vpop.f32.mrb[0].mxu0
        %v936 = vadd.f32 %v619, %v935
        %v937 = vpop.f32.mrb[0].mxu0
        %v938 = vadd.f32 %v615, %v937
        %v939 = vpop.f32.mrb[0].mxu0
        %v940 = vadd.f32 %v619, %v939
        %941 = vmatprep.mubr.bf16.mxu0 0
        %942 = vmatmul.mubr.bf16.gmra.mrb[0].mxu0 %v807
        %v943 = vpop.f32.mrb[0].mxu0
        %v944 = vadd.f32 %v615, %v943
        %v945 = vpop.f32.mrb[0].mxu0
        %v946 = vadd.f32 %v619, %v945
        %v947 = vpop.f32.mrb[0].mxu0
        %v948 = vadd.f32 %v615, %v947
        %v949 = vpop.f32.mrb[0].mxu0
        %v950 = vadd.f32 %v619, %v949
        %951 = vmatprep.mubr.bf16.mxu0 0
        %952 = vmatmul.mubr.bf16.gmra.mrb[0].mxu0 %v810
        %v953 = vpop.f32.mrb[0].mxu0
        %v954 = vadd.f32 %v615, %v953
        %v955 = vpop.f32.mrb[0].mxu0
        %v956 = vadd.f32 %v619, %v955
        %v957 = vpop.f32.mrb[0].mxu0
        %v958 = vadd.f32 %v615, %v957
        %v959 = vpop.f32.mrb[0].mxu0
        %v960 = vadd.f32 %v619, %v959
        %961 = vmatprep.mubr.bf16.mxu0 0
        %962 = vmatmul.mubr.bf16.gmra.mrb[0].mxu0 %v813
        %v963 = vpop.f32.mrb[0].mxu0
        %v964 = vadd.f32 %v615, %v963
        %v965 = vpop.f32.mrb[0].mxu0
        %v966 = vadd.f32 %v619, %v965
        %v967 = vpop.f32.mrb[0].mxu0
        %v968 = vadd.f32 %v615, %v967
        %v969 = vpop.f32.mrb[0].mxu0
        %v970 = vadd.f32 %v619, %v969
        %971 = vmatprep.mubr.bf16.mxu0 0
        %972 = vmatmul.mubr.bf16.gmra.mrb[0].mxu0 %v816
        %v973 = vpop.f32.mrb[0].mxu0
        %v974 = vadd.f32 %v615, %v973
        %v975 = vpop.f32.mrb[0].mxu0
        %v976 = vadd.f32 %v619, %v975
        %v977 = vpop.f32.mrb[0].mxu0
        %v978 = vadd.f32 %v615, %v977
        %v979 = vpop.f32.mrb[0].mxu0
        %v980 = vadd.f32 %v619, %v979
        %981 = vmatprep.mubr.bf16.mxu0 0
        %982 = vmatmul.mubr.bf16.gmra.mrb[0].mxu0 %v819
        %v983 = vpop.f32.mrb[0].mxu0
        %v984 = vadd.f32 %v615, %v983
        %v985 = vpop.f32.mrb[0].mxu0
        %v986 = vadd.f32 %v619, %v985
        %v987 = vpop.f32.mrb[0].mxu0
        %v988 = vadd.f32 %v615, %v987
        %v989 = vpop.f32.mrb[0].mxu0
        %v990 = vadd.f32 %v619, %v989
        %991 = vmatprep.mubr.bf16.mxu0 0
        %992 = vmatmul.mubr.bf16.gmra.mrb[0].mxu0 %v822
        %v993 = vpop.f32.mrb[0].mxu0
        %v994 = vadd.f32 %v615, %v993
        %v995 = vpop.f32.mrb[0].mxu0
        %v996 = vadd.f32 %v619, %v995
        %v997 = vpop.f32.mrb[0].mxu0
        %v998 = vadd.f32 %v615, %v997
        %v999 = vpop.f32.mrb[0].mxu0
        %v1000 = vadd.f32 %v619, %v999
        %1001 = vmatprep.mubr.bf16.mxu0 0
        %1002 = vmatmul.mubr.bf16.gmra.mrb[0].mxu0 %v825
        %v1003 = vpop.f32.mrb[0].mxu0
        %v1004 = vadd.f32 %v615, %v1003
        %v1005 = vpop.f32.mrb[0].mxu0
        %v1006 = vadd.f32 %v619, %v1005
        %v1007 = vpop.f32.mrb[0].mxu0
        %v1008 = vadd.f32 %v615, %v1007
        %v1009 = vpop.f32.mrb[0].mxu0
        %v1010 = vadd.f32 %v619, %v1009
        %1011 = vmatprep.mubr.bf16.mxu0 0
        %1012 = vmatmul.mubr.bf16.gmra.mrb[0].mxu0 %v828
        %v1013 = vpop.f32.mrb[0].mxu0
        %v1014 = vadd.f32 %v615, %v1013
        %v1015 = vpop.f32.mrb[0].mxu0
        %v1016 = vadd.f32 %v619, %v1015
        %v1017 = vpop.f32.mrb[0].mxu0
        %v1018 = vadd.f32 %v615, %v1017
        %v1019 = vpop.f32.mrb[0].mxu0
        %v1020 = vadd.f32 %v619, %v1019
        %1021 = vmatprep.mubr.bf16.mxu0 0
        %1022 = vmatmul.mubr.bf16.gmra.mrb[0].mxu0 %v831
        %v1023 = vpop.f32.mrb[0].mxu0
        %v1024 = vadd.f32 %v615, %v1023
        %v1025 = vpop.f32.mrb[0].mxu0
        %v1026 = vadd.f32 %v619, %v1025
        %v1027 = vpop.f32.mrb[0].mxu0
        %v1028 = vadd.f32 %v615, %v1027
        %v1029 = vpop.f32.mrb[0].mxu0
        %v1030 = vadd.f32 %v619, %v1029
        %1031 = vmatprep.mubr.bf16.mxu0 0
        %1032 = vmatmul.mubr.bf16.gmra.mrb[0].mxu0 %v834
        %v1033 = vpop.f32.mrb[0].mxu0
        %v1034 = vadd.f32 %v615, %v1033
        %v1035 = vpop.f32.mrb[0].mxu0
        %v1036 = vadd.f32 %v619, %v1035
        %v1037 = vpop.f32.mrb[0].mxu0
        %v1038 = vadd.f32 %v615, %v1037
        %v1039 = vpop.f32.mrb[0].mxu0
        %v1040 = vadd.f32 %v619, %v1039
        %1041 = vmatprep.mubr.bf16.mxu0 0
        %1042 = vmatmul.mubr.bf16.gmra.mrb[0].mxu0 %v837
        %v1043 = vpop.f32.mrb[0].mxu0
        %v1044 = vadd.f32 %v615, %v1043
        %v1045 = vpop.f32.mrb[0].mxu0
        %v1046 = vadd.f32 %v619, %v1045
        %v1047 = vpop.f32.mrb[0].mxu0
        %v1048 = vadd.f32 %v615, %v1047
        %v1049 = vpop.f32.mrb[0].mxu0
        %v1050 = vadd.f32 %v619, %v1049
        %1051 = vmatprep.mubr.bf16.mxu0 0
        %1052 = vmatmul.mubr.bf16.gmra.mrb[0].mxu0 %v840
        %v1053 = vpop.f32.mrb[0].mxu0
        %v1054 = vadd.f32 %v615, %v1053
        %v1055 = vpop.f32.mrb[0].mxu0
        %v1056 = vadd.f32 %v619, %v1055
        %v1057 = vpop.f32.mrb[0].mxu0
        %v1058 = vadd.f32 %v615, %v1057
        %v1059 = vpop.f32.mrb[0].mxu0
        %v1060 = vadd.f32 %v619, %v1059
        %1061 = vmatprep.mubr.bf16.mxu0 0
        %1062 = vmatmul.mubr.bf16.gmra.mrb[0].mxu0 %v843
        %v1063 = vpop.f32.mrb[0].mxu0
        %v1064 = vadd.f32 %v615, %v1063
        %v1065 = vpop.f32.mrb[0].mxu0
        %v1066 = vadd.f32 %v619, %v1065
        %v1067 = vpop.f32.mrb[0].mxu0
        %v1068 = vadd.f32 %v615, %v1067
        %v1069 = vpop.f32.mrb[0].mxu0
        %v1070 = vadd.f32 %v619, %v1069
        %1071 = vmatprep.mubr.bf16.mxu0 0
        %1072 = vmatmul.mubr.bf16.gmra.mrb[0].mxu0 %v846
        %v1073 = vpop.f32.mrb[0].mxu0
        %v1074 = vadd.f32 %v615, %v1073
        %v1075 = vpop.f32.mrb[0].mxu0
        %v1076 = vadd.f32 %v619, %v1075
        %v1077 = vpop.f32.mrb[0].mxu0
        %v1078 = vadd.f32 %v615, %v1077
        %v1079 = vpop.f32.mrb[0].mxu0
        %v1080 = vadd.f32 %v619, %v1079
        %1081 = vmatprep.mubr.bf16.mxu0 0
        %1082 = vmatmul.mubr.bf16.gmra.mrb[0].mxu0 %v849
        %v1083 = vpop.f32.mrb[0].mxu0
        %v1084 = vadd.f32 %v615, %v1083
        %v1085 = vpop.f32.mrb[0].mxu0
        %v1086 = vadd.f32 %v619, %v1085
        %v1087 = vpop.f32.mrb[0].mxu0
        %v1088 = vadd.f32 %v615, %v1087
        %v1089 = vpop.f32.mrb[0].mxu0
        %v1090 = vadd.f32 %v619, %v1089
        %1091 = vmatprep.mubr.bf16.mxu0 0
        %1092 = vmatmul.mubr.bf16.gmra.mrb[0].mxu0 %v852
        %v1093 = vpop.f32.mrb[0].mxu0
        %v1094 = vadd.f32 %v615, %v1093
        %v1095 = vpop.f32.mrb[0].mxu0
        %v1096 = vadd.f32 %v619, %v1095
        %v1097 = vpop.f32.mrb[0].mxu0
        %v1098 = vadd.f32 %v615, %v1097
        %v1099 = vpop.f32.mrb[0].mxu0
        %v1100 = vadd.f32 %v619, %v1099
        %1101 = vmatprep.mubr.bf16.mxu0 0
        %1102 = vmatmul.mubr.bf16.gmra.mrb[0].mxu0 %v855
        %v1103 = vpop.f32.mrb[0].mxu0
        %v1104 = vadd.f32 %v615, %v1103
        %v1105 = vpop.f32.mrb[0].mxu0
        %v1106 = vadd.f32 %v619, %v1105
        %v1107 = vpop.f32.mrb[0].mxu0
        %v1108 = vadd.f32 %v615, %v1107
        %v1109 = vpop.f32.mrb[0].mxu0
        %v1110 = vadd.f32 %v619, %v1109
        %1111 = vmatprep.mubr.bf16.mxu0 0
        %1112 = vmatmul.mubr.bf16.gmra.mrb[0].mxu0 %v858
        %v1113 = vpop.f32.mrb[0].mxu0
        %v1114 = vadd.f32 %v615, %v1113
        %v1115 = vpop.f32.mrb[0].mxu0
        %v1116 = vadd.f32 %v619, %v1115
        %v1117 = vpop.f32.mrb[0].mxu0
        %v1118 = vadd.f32 %v615, %v1117
        %v1119 = vpop.f32.mrb[0].mxu0
        %v1120 = vadd.f32 %v619, %v1119
        %1121 = vmatprep.mubr.bf16.mxu0 0
        %1122 = vmatmul.mubr.bf16.gmra.mrb[0].mxu0 %v861
        %v1123 = vpop.f32.mrb[0].mxu0
        %v1124 = vadd.f32 %v615, %v1123
        %v1125 = vpop.f32.mrb[0].mxu0
        %v1126 = vadd.f32 %v619, %v1125
        %v1127 = vpop.f32.mrb[0].mxu0
        %v1128 = vadd.f32 %v615, %v1127
        %v1129 = vpop.f32.mrb[0].mxu0
        %v1130 = vadd.f32 %v619, %v1129
        %1131 = vmatprep.mubr.bf16.mxu0 0
        %1132 = vmatmul.mubr.bf16.gmra.mrb[0].mxu0 %v864
        %v1133 = vpop.f32.mrb[0].mxu0
        %v1134 = vadd.f32 %v615, %v1133
        %v1135 = vpop.f32.mrb[0].mxu0
        %v1136 = vadd.f32 %v619, %v1135
        %v1137 = vpop.f32.mrb[0].mxu0
        %v1138 = vadd.f32 %v615, %v1137
        %v1139 = vpop.f32.mrb[0].mxu0
        %v1140 = vadd.f32 %v619, %v1139
        %1141 = vmatprep.mubr.bf16.mxu0 0
        %1142 = vmatmul.mubr.bf16.gmra.mrb[0].mxu0 %v867
        %v1143 = vpop.f32.mrb[0].mxu0
        %v1144 = vadd.f32 %v615, %v1143
        %v1145 = vpop.f32.mrb[0].mxu0
        %v1146 = vadd.f32 %v619, %v1145
        %v1147 = vpop.f32.mrb[0].mxu0
        %v1148 = vadd.f32 %v615, %v1147
        %v1149 = vpop.f32.mrb[0].mxu0
        %v1150 = vadd.f32 %v619, %v1149
        %1151 = vmatprep.mubr.bf16.mxu0 0
        %1152 = vmatmul.mubr.bf16.gmra.mrb[0].mxu0 %v870
        %v1153 = vpop.f32.mrb[0].mxu0
        %v1154 = vadd.f32 %v615, %v1153
        %v1155 = vpop.f32.mrb[0].mxu0
        %v1156 = vadd.f32 %v619, %v1155
        %v1157 = vpop.f32.mrb[0].mxu0
        %v1158 = vadd.f32 %v615, %v1157
        %v1159 = vpop.f32.mrb[0].mxu0
        %v1160 = vadd.f32 %v619, %v1159
        %1161 = vmatprep.mubr.bf16.mxu0 0
        %1162 = vmatmul.mubr.bf16.gmra.mrb[0].mxu0 %v873
        %v1163 = vpop.f32.mrb[0].mxu0
        %v1164 = vadd.f32 %v615, %v1163
        %v1165 = vpop.f32.mrb[0].mxu0
        %v1166 = vadd.f32 %v619, %v1165
        %v1167 = vpop.f32.mrb[0].mxu0
        %v1168 = vadd.f32 %v615, %v1167
        %v1169 = vpop.f32.mrb[0].mxu0
        %v1170 = vadd.f32 %v619, %v1169
        %1171 = vmatprep.mubr.bf16.mxu0 0
        %1172 = vmatmul.mubr.bf16.gmra.mrb[0].mxu0 %v876
        %v1173 = vpop.f32.mrb[0].mxu0
        %v1174 = vadd.f32 %v615, %v1173
        %v1175 = vpop.f32.mrb[0].mxu0
        %v1176 = vadd.f32 %v619, %v1175
        %v1177 = vpop.f32.mrb[0].mxu0
        %v1178 = vadd.f32 %v615, %v1177
        %v1179 = vpop.f32.mrb[0].mxu0
        %v1180 = vadd.f32 %v619, %v1179
        %1181 = vmatprep.mubr.bf16.mxu0 0
        %1182 = vmatmul.mubr.bf16.gmra.mrb[0].mxu0 %v879
        %v1183 = vpop.f32.mrb[0].mxu0
        %v1184 = vadd.f32 %v615, %v1183
        %v1185 = vpop.f32.mrb[0].mxu0
        %v1186 = vadd.f32 %v619, %v1185
        %v1187 = vpop.f32.mrb[0].mxu0
        %v1188 = vadd.f32 %v615, %v1187
        %v1189 = vpop.f32.mrb[0].mxu0
        %v1190 = vadd.f32 %v619, %v1189
        %1191 = vmatprep.mubr.bf16.mxu0 0
        %1192 = vmatmul.mubr.bf16.gmra.mrb[0].mxu0 %v882
        %v1193 = vpop.f32.mrb[0].mxu0
        %v1194 = vadd.f32 %v615, %v1193
        %v1195 = vpop.f32.mrb[0].mxu0
        %v1196 = vadd.f32 %v619, %v1195
        %v1197 = vpop.f32.mrb[0].mxu0
        %v1198 = vadd.f32 %v615, %v1197
        %v1199 = vpop.f32.mrb[0].mxu0
        %v1200 = vadd.f32 %v619, %v1199
        %1201 = vmatprep.mubr.bf16.mxu0 0
        %1202 = vmatmul.mubr.bf16.gmra.mrb[0].mxu0 %v885
        %v1203 = vpop.f32.mrb[0].mxu0
        %v1204 = vadd.f32 %v615, %v1203
        %v1205 = vpop.f32.mrb[0].mxu0
        %v1206 = vadd.f32 %v619, %v1205
        %v1207 = vpop.f32.mrb[0].mxu0
        %v1208 = vadd.f32 %v615, %v1207
        %v1209 = vpop.f32.mrb[0].mxu0
        %v1210 = vadd.f32 %v619, %v1209
        %1211 = vmatprep.mubr.bf16.mxu0 0
        %1212 = vmatmul.mubr.bf16.gmra.mrb[0].mxu0 %v888
        %v1213 = vpop.f32.mrb[0].mxu0
        %v1214 = vadd.f32 %v615, %v1213
        %v1215 = vpop.f32.mrb[0].mxu0
        %v1216 = vadd.f32 %v619, %v1215
        %v1217 = vpop.f32.mrb[0].mxu0
        %v1218 = vadd.f32 %v615, %v1217
        %v1219 = vpop.f32.mrb[0].mxu0
        %v1220 = vadd.f32 %v619, %v1219
        %1221 = vmatprep.mubr.bf16.mxu0 0
        %1222 = vmatmul.mubr.bf16.gmra.mrb[0].mxu0 %v891
        %v1223 = vpop.f32.mrb[0].mxu0
        %v1224 = vadd.f32 %v615, %v1223
        %v1225 = vpop.f32.mrb[0].mxu0
        %v1226 = vadd.f32 %v619, %v1225
        %v1227 = vpop.f32.mrb[0].mxu0
        %v1228 = vadd.f32 %v615, %v1227
        %v1229 = vpop.f32.mrb[0].mxu0
        %v1230 = vadd.f32 %v619, %v1229
        %1231 = vmatprep.mubr.bf16.mxu0 0
        %1232 = vmatmul.mubr.bf16.gmra.mrb[0].mxu0 %v894
        %v1233 = vpop.f32.mrb[0].mxu0
        %v1234 = vadd.f32 %v615, %v1233
        %v1235 = vpop.f32.mrb[0].mxu0
        %v1236 = vadd.f32 %v619, %v1235
        %v1237 = vpop.f32.mrb[0].mxu0
        %v1238 = vadd.f32 %v615, %v1237
        %v1239 = vpop.f32.mrb[0].mxu0
        %v1240 = vadd.f32 %v619, %v1239
        %1241 = vmatprep.mubr.bf16.mxu0 0
        %1242 = vmatmul.mubr.bf16.gmra.mrb[0].mxu0 %v897
        %v1243 = vpop.f32.mrb[0].mxu0
        %v1244 = vadd.f32 %v615, %v1243
        %v1245 = vpop.f32.mrb[0].mxu0
        %v1246 = vadd.f32 %v619, %v1245
        %v1247 = vpop.f32.mrb[0].mxu0
        %v1248 = vadd.f32 %v615, %v1247
        %v1249 = vpop.f32.mrb[0].mxu0
        %v1250 = vadd.f32 %v619, %v1249
        %1251 = vdwg.mxu0
        %v1252 = vpack.c.bf16 %v532, %v532
        %v1253 = vld [vmem:[%s6] sm:$0xff]
        %v1254 = vld [vmem:[%s6 + $0x8] sm:$0xff]
        %v1255 = vld [vmem:[%s6 + $0x10] sm:$0xff]
        %v1256 = vld [vmem:[%s6 + $0x18] sm:$0xff]
        %v1257 = vld [vmem:[%s6 + $0x20] sm:$0xff]
        %v1258 = vld [vmem:[%s6 + $0x28] sm:$0xff]
        %v1259 = vld [vmem:[%s6 + $0x30] sm:$0xff]
        %v1260 = vld [vmem:[%s6 + $0x38] sm:$0xff]
        %v1261 = vld [vmem:[%s6 + $0x40] sm:$0xff]
        %v1262 = vld [vmem:[%s6 + $0x48] sm:$0xff]
        %v1263 = vld [vmem:[%s6 + $0x50] sm:$0xff]
        %v1264 = vld [vmem:[%s6 + $0x58] sm:$0xff]
        %v1265 = vld [vmem:[%s6 + $0x60] sm:$0xff]
        %v1266 = vld [vmem:[%s6 + $0x68] sm:$0xff]
        %v1267 = vld [vmem:[%s6 + $0x70] sm:$0xff]
        %v1268 = vld [vmem:[%s6 + $0x78] sm:$0xff]
        %v1269 = vld [vmem:[%s7] sm:$0x3]
        %v1271 = vlaneseq
        %v1272 = vshrl.u32 %v1271, 7
        %v1273 = vsub.s32 0, %v1272
        %v1274 = vrot.slane %v1269, %v1273
        %v1275 = vlaneseq
        %v1276 = vshrl.u32 %v1275, 7
        %v1277 = vsub.s32 1, %v1276
        %v1278 = vrot.slane %v1269, %v1277
        %v1297 = vunpack.c.l.b16 %v1253
        %v1298 = vunpack.c.h.b16 %v1253
        %v1299 = vunpack.c.l.b16 %v1254
        %v1300 = vunpack.c.h.b16 %v1254
        %v1301 = vunpack.c.l.b16 %v1255
        %v1302 = vunpack.c.h.b16 %v1255
        %v1303 = vunpack.c.l.b16 %v1256
        %v1304 = vunpack.c.h.b16 %v1256
        %v1305 = vunpack.c.l.b16 %v1257
        %v1306 = vunpack.c.h.b16 %v1257
        %v1307 = vunpack.c.l.b16 %v1258
        %v1308 = vunpack.c.h.b16 %v1258
        %v1309 = vunpack.c.l.b16 %v1259
        %v1310 = vunpack.c.h.b16 %v1259
        %v1311 = vunpack.c.l.b16 %v1260
        %v1312 = vunpack.c.h.b16 %v1260
        %v1313 = vunpack.c.l.b16 %v1261
        %v1314 = vunpack.c.h.b16 %v1261
        %v1315 = vunpack.c.l.b16 %v1262
        %v1316 = vunpack.c.h.b16 %v1262
        %v1317 = vunpack.c.l.b16 %v1263
        %v1318 = vunpack.c.h.b16 %v1263
        %v1319 = vunpack.c.l.b16 %v1264
        %v1320 = vunpack.c.h.b16 %v1264
        %v1321 = vunpack.c.l.b16 %v1265
        %v1322 = vunpack.c.h.b16 %v1265
        %v1323 = vunpack.c.l.b16 %v1266
        %v1324 = vunpack.c.h.b16 %v1266
        %v1325 = vunpack.c.l.b16 %v1267
        %v1326 = vunpack.c.h.b16 %v1267
        %v1327 = vunpack.c.l.b16 %v1268
        %v1328 = vunpack.c.h.b16 %v1268
        %v1329 = vpack.c.b16 %v1299, %v1297
        %v1330 = vpack.c.b16 %v1300, %v1298
        %v1331 = vpack.c.b16 %v1303, %v1301
        %v1332 = vpack.c.b16 %v1304, %v1302
        %v1333 = vpack.c.b16 %v1307, %v1305
        %v1334 = vpack.c.b16 %v1308, %v1306
        %v1335 = vpack.c.b16 %v1311, %v1309
        %v1336 = vpack.c.b16 %v1312, %v1310
        %v1337 = vpack.c.b16 %v1315, %v1313
        %v1338 = vpack.c.b16 %v1316, %v1314
        %v1339 = vpack.c.b16 %v1319, %v1317
        %v1340 = vpack.c.b16 %v1320, %v1318
        %v1341 = vpack.c.b16 %v1323, %v1321
        %v1342 = vpack.c.b16 %v1324, %v1322
        %v1343 = vpack.c.b16 %v1327, %v1325
        %v1344 = vpack.c.b16 %v1328, %v1326
        %1361 = vmatprep.subr.bf16.mxu0 %v1330
        %1362 = vmatpush1.bf16.msra.mxu0 %v1329
        %1363 = vmatprep.subr.bf16.mxu0 %v1332
        %1364 = vmatpush1.bf16.msra.mxu0 %v1331
        %1365 = vmatprep.subr.bf16.mxu0 %v1334
        %1366 = vmatpush1.bf16.msra.mxu0 %v1333
        %1367 = vmatprep.subr.bf16.mxu0 %v1336
        %1368 = vmatpush1.bf16.msra.mxu0 %v1335
        %1369 = vmatprep.subr.bf16.mxu0 %v1338
        %1370 = vmatpush1.bf16.msra.mxu0 %v1337
        %1371 = vmatprep.subr.bf16.mxu0 %v1340
        %1372 = vmatpush1.bf16.msra.mxu0 %v1339
        %1373 = vmatprep.subr.bf16.mxu0 %v1342
        %1374 = vmatpush1.bf16.msra.mxu0 %v1341
        %1375 = vmatprep.subr.bf16.mxu0 %v1344
        %1376 = vmatpush1.bf16.msra.mxu0 %v1343
        %1377 = vmatprep.subr.bf16.mxu0 0
        %1378 = vmatpush1.bf16.msra.mxu0 0
        %1379 = vmatprep.subr.bf16.mxu0 0
        %1380 = vmatpush1.bf16.msra.mxu0 0
        %1381 = vmatprep.subr.bf16.mxu0 0
        %1382 = vmatpush1.bf16.msra.mxu0 0
        %1383 = vmatprep.subr.bf16.mxu0 0
        %1384 = vmatpush1.bf16.msra.mxu0 0
        %1385 = vmatprep.subr.bf16.mxu0 0
        %1386 = vmatpush1.bf16.msra.mxu0 0
        %1387 = vmatprep.subr.bf16.mxu0 0
        %1388 = vmatpush1.bf16.msra.mxu0 0
        %1389 = vmatprep.subr.bf16.mxu0 0
        %1390 = vmatpush1.bf16.msra.mxu0 0
        %1391 = vmatprep.subr.bf16.mxu0 0
        %1392 = vmatpush1.bf16.msra.mxu0 0
        %1393 = vmatprep.mubr.bf16.mxu0 0
        %1394 = vmatmul.mubr.bf16.gmra.mrb[0].mxu0 %v1252
        %v1395 = vpop.f32.mrb[0].mxu0
        %v1396 = vadd.f32 %v1274, %v1395
        %v1397 = vpop.f32.mrb[0].mxu0
        %v1398 = vadd.f32 %v1278, %v1397
        %v1399 = vpop.f32.mrb[0].mxu0
        %v1400 = vpop.f32.mrb[0].mxu0
        %1401 = vdwg.mxu0
        %v1403 = vcombine.high %v1398, %v1398
        %v1405 = vunpack.c.l.s4 1966171168
        %v1406 = vunpack.c.0.s8 %v1405
        %v1407 = vlaneseq
        %v1408 = vshrl.u32 %v1407, 7
        %v1409 = vsub.s32 %v1406, %v1408
        %v1410 = vrot.slane %v1398, %v1409
        %v1412 = vunpack.c.l.s4 1966171168
        %v1413 = vunpack.c.0.s8 %v1412
        %v1414 = vlaneseq
        %v1415 = vshrl.u32 %v1414, 7
        %v1416 = vsub.s32 %v1413, %v1415
        %v1417 = vrot.slane %v1403, %v1416
        %v1418 = vcombine.high %v1410, %v1410
        %v1419 = vcombine.high %v1417, %v1417
        %v1421 = vunpack.c.l.s4 1966171168
        %v1422 = vunpack.c.0.s8 %v1421
        %v1423 = vlaneseq
        %v1424 = vshrl.u32 %v1423, 7
        %v1425 = vsub.s32 %v1422, %v1424
        %v1426 = vrot.slane %v1410, %v1425
        %v1428 = vunpack.c.l.s4 1966171168
        %v1429 = vunpack.c.0.s8 %v1428
        %v1430 = vlaneseq
        %v1431 = vshrl.u32 %v1430, 7
        %v1432 = vsub.s32 %v1429, %v1431
        %v1433 = vrot.slane %v1417, %v1432
        %v1435 = vunpack.c.l.s4 1966171168
        %v1436 = vunpack.c.0.s8 %v1435
        %v1437 = vlaneseq
        %v1438 = vshrl.u32 %v1437, 7
        %v1439 = vsub.s32 %v1436, %v1438
        %v1440 = vrot.slane %v1418, %v1439
        %v1442 = vunpack.c.l.s4 1966171168
        %v1443 = vunpack.c.0.s8 %v1442
        %v1444 = vlaneseq
        %v1445 = vshrl.u32 %v1444, 7
        %v1446 = vsub.s32 %v1443, %v1445
        %v1447 = vrot.slane %v1419, %v1446
        %v1448 = vcombine.high %v1426, %v1426
        %v1449 = vcombine.high %v1433, %v1433
        %v1450 = vcombine.high %v1440, %v1440
        %v1451 = vcombine.high %v1447, %v1447
        %v1452 = vlaneseq
        %v1453 = vshrl.u32 %v1452, 7
        %v1454 = vsub.s32 0, %v1453
        %v1455 = vrot.slane %v1426, %v1454
        %v1456 = vlaneseq
        %v1457 = vshrl.u32 %v1456, 7
        %v1458 = vsub.s32 0, %v1457
        %v1459 = vrot.slane %v1440, %v1458
        %v1460 = vlaneseq
        %v1461 = vshrl.u32 %v1460, 7
        %v1462 = vsub.s32 0, %v1461
        %v1463 = vrot.slane %v1448, %v1462
        %v1464 = vlaneseq
        %v1465 = vshrl.u32 %v1464, 7
        %v1466 = vsub.s32 0, %v1465
        %v1467 = vrot.slane %v1450, %v1466
        %v1468 = vlaneseq
        %v1469 = vshrl.u32 %v1468, 7
        %v1470 = vsub.s32 0, %v1469
        %v1471 = vrot.slane %v1433, %v1470
        %v1472 = vlaneseq
        %v1473 = vshrl.u32 %v1472, 7
        %v1474 = vsub.s32 0, %v1473
        %v1475 = vrot.slane %v1447, %v1474
        %v1476 = vlaneseq
        %v1477 = vshrl.u32 %v1476, 7
        %v1478 = vsub.s32 0, %v1477
        %v1479 = vrot.slane %v1449, %v1478
        %v1480 = vlaneseq
        %v1481 = vshrl.u32 %v1480, 7
        %v1482 = vsub.s32 0, %v1481
        %v1483 = vrot.slane %v1451, %v1482
        %v1492 = vadd.f32 %v936, %v1455
        %v1493 = vadd.f32 %v940, %v1455
        %v1494 = vadd.f32 %v946, %v1455
        %v1495 = vadd.f32 %v950, %v1455
        %v1496 = vadd.f32 %v956, %v1455
        %v1497 = vadd.f32 %v960, %v1455
        %v1498 = vadd.f32 %v966, %v1455
        %v1499 = vadd.f32 %v970, %v1455
        %v1500 = vadd.f32 %v976, %v1459
        %v1501 = vadd.f32 %v980, %v1459
        %v1502 = vadd.f32 %v986, %v1459
        %v1503 = vadd.f32 %v990, %v1459
        %v1504 = vadd.f32 %v996, %v1459
        %v1505 = vadd.f32 %v1000, %v1459
        %v1506 = vadd.f32 %v1006, %v1459
        %v1507 = vadd.f32 %v1010, %v1459
        %v1508 = vadd.f32 %v1016, %v1463
        %v1509 = vadd.f32 %v1020, %v1463
        %v1510 = vadd.f32 %v1026, %v1463
        %v1511 = vadd.f32 %v1030, %v1463
        %v1512 = vadd.f32 %v1036, %v1463
        %v1513 = vadd.f32 %v1040, %v1463
        %v1514 = vadd.f32 %v1046, %v1463
        %v1515 = vadd.f32 %v1050, %v1463
        %v1516 = vadd.f32 %v1056, %v1467
        %v1517 = vadd.f32 %v1060, %v1467
        %v1518 = vadd.f32 %v1066, %v1467
        %v1519 = vadd.f32 %v1070, %v1467
        %v1520 = vadd.f32 %v1076, %v1467
        %v1521 = vadd.f32 %v1080, %v1467
        %v1522 = vadd.f32 %v1086, %v1467
        %v1523 = vadd.f32 %v1090, %v1467
        %v1524 = vadd.f32 %v1096, %v1471
        %v1525 = vadd.f32 %v1100, %v1471
        %v1526 = vadd.f32 %v1106, %v1471
        %v1527 = vadd.f32 %v1110, %v1471
        %v1528 = vadd.f32 %v1116, %v1471
        %v1529 = vadd.f32 %v1120, %v1471
        %v1530 = vadd.f32 %v1126, %v1471
        %v1531 = vadd.f32 %v1130, %v1471
        %v1532 = vadd.f32 %v1136, %v1475
        %v1533 = vadd.f32 %v1140, %v1475
        %v1534 = vadd.f32 %v1146, %v1475
        %v1535 = vadd.f32 %v1150, %v1475
        %v1536 = vadd.f32 %v1156, %v1475
        %v1537 = vadd.f32 %v1160, %v1475
        %v1538 = vadd.f32 %v1166, %v1475
        %v1539 = vadd.f32 %v1170, %v1475
        %v1540 = vadd.f32 %v1176, %v1479
        %v1541 = vadd.f32 %v1180, %v1479
        %v1542 = vadd.f32 %v1186, %v1479
        %v1543 = vadd.f32 %v1190, %v1479
        %v1544 = vadd.f32 %v1196, %v1479
        %v1545 = vadd.f32 %v1200, %v1479
        %v1546 = vadd.f32 %v1206, %v1479
        %v1547 = vadd.f32 %v1210, %v1479
        %v1548 = vadd.f32 %v1216, %v1483
        %v1549 = vadd.f32 %v1220, %v1483
        %v1550 = vadd.f32 %v1226, %v1483
        %v1551 = vadd.f32 %v1230, %v1483
        %v1552 = vadd.f32 %v1236, %v1483
        %v1553 = vadd.f32 %v1240, %v1483
        %v1554 = vadd.f32 %v1246, %v1483
        %v1555 = vadd.f32 %v1250, %v1483
        %v1556 = vmax.f32 %v1492, 0.0
        %v1557 = vmax.f32 %v1493, 0.0
        %v1558 = vmax.f32 %v1494, 0.0
        %v1559 = vmax.f32 %v1495, 0.0
        %v1560 = vmax.f32 %v1496, 0.0
        %v1561 = vmax.f32 %v1497, 0.0
        %v1562 = vmax.f32 %v1498, 0.0
        %v1563 = vmax.f32 %v1499, 0.0
        %v1564 = vmax.f32 %v1500, 0.0
        %v1565 = vmax.f32 %v1501, 0.0
        %v1566 = vmax.f32 %v1502, 0.0
        %v1567 = vmax.f32 %v1503, 0.0
        %v1568 = vmax.f32 %v1504, 0.0
        %v1569 = vmax.f32 %v1505, 0.0
        %v1570 = vmax.f32 %v1506, 0.0
        %v1571 = vmax.f32 %v1507, 0.0
        %v1572 = vmax.f32 %v1508, 0.0
        %v1573 = vmax.f32 %v1509, 0.0
        %v1574 = vmax.f32 %v1510, 0.0
        %v1575 = vmax.f32 %v1511, 0.0
        %v1576 = vmax.f32 %v1512, 0.0
        %v1577 = vmax.f32 %v1513, 0.0
        %v1578 = vmax.f32 %v1514, 0.0
        %v1579 = vmax.f32 %v1515, 0.0
        %v1580 = vmax.f32 %v1516, 0.0
        %v1581 = vmax.f32 %v1517, 0.0
        %v1582 = vmax.f32 %v1518, 0.0
        %v1583 = vmax.f32 %v1519, 0.0
        %v1584 = vmax.f32 %v1520, 0.0
        %v1585 = vmax.f32 %v1521, 0.0
        %v1586 = vmax.f32 %v1522, 0.0
        %v1587 = vmax.f32 %v1523, 0.0
        %v1588 = vmax.f32 %v1524, 0.0
        %v1589 = vmax.f32 %v1525, 0.0
        %v1590 = vmax.f32 %v1526, 0.0
        %v1591 = vmax.f32 %v1527, 0.0
        %v1592 = vmax.f32 %v1528, 0.0
        %v1593 = vmax.f32 %v1529, 0.0
        %v1594 = vmax.f32 %v1530, 0.0
        %v1595 = vmax.f32 %v1531, 0.0
        %v1596 = vmax.f32 %v1532, 0.0
        %v1597 = vmax.f32 %v1533, 0.0
        %v1598 = vmax.f32 %v1534, 0.0
        %v1599 = vmax.f32 %v1535, 0.0
        %v1600 = vmax.f32 %v1536, 0.0
        %v1601 = vmax.f32 %v1537, 0.0
        %v1602 = vmax.f32 %v1538, 0.0
        %v1603 = vmax.f32 %v1539, 0.0
        %v1604 = vmax.f32 %v1540, 0.0
        %v1605 = vmax.f32 %v1541, 0.0
        %v1606 = vmax.f32 %v1542, 0.0
        %v1607 = vmax.f32 %v1543, 0.0
        %v1608 = vmax.f32 %v1544, 0.0
        %v1609 = vmax.f32 %v1545, 0.0
        %v1610 = vmax.f32 %v1546, 0.0
        %v1611 = vmax.f32 %v1547, 0.0
        %v1612 = vmax.f32 %v1548, 0.0
        %v1613 = vmax.f32 %v1549, 0.0
        %v1614 = vmax.f32 %v1550, 0.0
        %v1615 = vmax.f32 %v1551, 0.0
        %v1616 = vmax.f32 %v1552, 0.0
        %v1617 = vmax.f32 %v1553, 0.0
        %v1618 = vmax.f32 %v1554, 0.0
        %v1619 = vmax.f32 %v1555, 0.0
        %v1620 = vld [vmem:[%s8] sm:$0x1]
        %v1622 = vlaneseq
        %v1623 = vshrl.u32 %v1622, 7
        %v1624 = vsub.s32 0, %v1623
        %v1625 = vrot.slane %v1620, %v1624
        %v1627 = vmul.f32 %v1556, %v1625
        %v1628 = vmul.f32 %v1557, %v1625
        %v1629 = vmul.f32 %v1558, %v1625
        %v1630 = vmul.f32 %v1559, %v1625
        %v1631 = vmul.f32 %v1560, %v1625
        %v1632 = vmul.f32 %v1561, %v1625
        %v1633 = vmul.f32 %v1562, %v1625
        %v1634 = vmul.f32 %v1563, %v1625
        %v1635 = vmul.f32 %v1564, %v1625
        %v1636 = vmul.f32 %v1565, %v1625
        %v1637 = vmul.f32 %v1566, %v1625
        %v1638 = vmul.f32 %v1567, %v1625
        %v1639 = vmul.f32 %v1568, %v1625
        %v1640 = vmul.f32 %v1569, %v1625
        %v1641 = vmul.f32 %v1570, %v1625
        %v1642 = vmul.f32 %v1571, %v1625
        %v1643 = vmul.f32 %v1572, %v1625
        %v1644 = vmul.f32 %v1573, %v1625
        %v1645 = vmul.f32 %v1574, %v1625
        %v1646 = vmul.f32 %v1575, %v1625
        %v1647 = vmul.f32 %v1576, %v1625
        %v1648 = vmul.f32 %v1577, %v1625
        %v1649 = vmul.f32 %v1578, %v1625
        %v1650 = vmul.f32 %v1579, %v1625
        %v1651 = vmul.f32 %v1580, %v1625
        %v1652 = vmul.f32 %v1581, %v1625
        %v1653 = vmul.f32 %v1582, %v1625
        %v1654 = vmul.f32 %v1583, %v1625
        %v1655 = vmul.f32 %v1584, %v1625
        %v1656 = vmul.f32 %v1585, %v1625
        %v1657 = vmul.f32 %v1586, %v1625
        %v1658 = vmul.f32 %v1587, %v1625
        %v1659 = vmul.f32 %v1588, %v1625
        %v1660 = vmul.f32 %v1589, %v1625
        %v1661 = vmul.f32 %v1590, %v1625
        %v1662 = vmul.f32 %v1591, %v1625
        %v1663 = vmul.f32 %v1592, %v1625
        %v1664 = vmul.f32 %v1593, %v1625
        %v1665 = vmul.f32 %v1594, %v1625
        %v1666 = vmul.f32 %v1595, %v1625
        %v1667 = vmul.f32 %v1596, %v1625
        %v1668 = vmul.f32 %v1597, %v1625
        %v1669 = vmul.f32 %v1598, %v1625
        %v1670 = vmul.f32 %v1599, %v1625
        %v1671 = vmul.f32 %v1600, %v1625
        %v1672 = vmul.f32 %v1601, %v1625
        %v1673 = vmul.f32 %v1602, %v1625
        %v1674 = vmul.f32 %v1603, %v1625
        %v1675 = vmul.f32 %v1604, %v1625
        %v1676 = vmul.f32 %v1605, %v1625
        %v1677 = vmul.f32 %v1606, %v1625
        %v1678 = vmul.f32 %v1607, %v1625
        %v1679 = vmul.f32 %v1608, %v1625
        %v1680 = vmul.f32 %v1609, %v1625
        %v1681 = vmul.f32 %v1610, %v1625
        %v1682 = vmul.f32 %v1611, %v1625
        %v1683 = vmul.f32 %v1612, %v1625
        %v1684 = vmul.f32 %v1613, %v1625
        %v1685 = vmul.f32 %v1614, %v1625
        %v1686 = vmul.f32 %v1615, %v1625
        %v1687 = vmul.f32 %v1616, %v1625
        %v1688 = vmul.f32 %v1617, %v1625
        %v1689 = vmul.f32 %v1618, %v1625
        %v1690 = vmul.f32 %v1619, %v1625
        %1691 = vadd.xlane.f32.xlu0 %v1627
        %v1692 = vpop.xlane.xlu0 %1691
        %1693 = vadd.xlane.f32.xlu0 %v1628
        %v1694 = vpop.xlane.xlu0 %1693
        %1695 = vadd.xlane.f32.xlu0 %v1629
        %v1696 = vpop.xlane.xlu0 %1695
        %1697 = vadd.xlane.f32.xlu0 %v1630
        %v1698 = vpop.xlane.xlu0 %1697
        %1699 = vadd.xlane.f32.xlu0 %v1631
        %v1700 = vpop.xlane.xlu0 %1699
        %1701 = vadd.xlane.f32.xlu0 %v1632
        %v1702 = vpop.xlane.xlu0 %1701
        %1703 = vadd.xlane.f32.xlu0 %v1633
        %v1704 = vpop.xlane.xlu0 %1703
        %1705 = vadd.xlane.f32.xlu0 %v1634
        %v1706 = vpop.xlane.xlu0 %1705
        %1707 = vadd.xlane.f32.xlu0 %v1635
        %v1708 = vpop.xlane.xlu0 %1707
        %1709 = vadd.xlane.f32.xlu0 %v1636
        %v1710 = vpop.xlane.xlu0 %1709
        %1711 = vadd.xlane.f32.xlu0 %v1637
        %v1712 = vpop.xlane.xlu0 %1711
        %1713 = vadd.xlane.f32.xlu0 %v1638
        %v1714 = vpop.xlane.xlu0 %1713
        %1715 = vadd.xlane.f32.xlu0 %v1639
        %v1716 = vpop.xlane.xlu0 %1715
        %1717 = vadd.xlane.f32.xlu0 %v1640
        %v1718 = vpop.xlane.xlu0 %1717
        %1719 = vadd.xlane.f32.xlu0 %v1641
        %v1720 = vpop.xlane.xlu0 %1719
        %1721 = vadd.xlane.f32.xlu0 %v1642
        %v1722 = vpop.xlane.xlu0 %1721
        %1723 = vadd.xlane.f32.xlu0 %v1643
        %v1724 = vpop.xlane.xlu0 %1723
        %1725 = vadd.xlane.f32.xlu0 %v1644
        %v1726 = vpop.xlane.xlu0 %1725
        %1727 = vadd.xlane.f32.xlu0 %v1645
        %v1728 = vpop.xlane.xlu0 %1727
        %1729 = vadd.xlane.f32.xlu0 %v1646
        %v1730 = vpop.xlane.xlu0 %1729
        %1731 = vadd.xlane.f32.xlu0 %v1647
        %v1732 = vpop.xlane.xlu0 %1731
        %1733 = vadd.xlane.f32.xlu0 %v1648
        %v1734 = vpop.xlane.xlu0 %1733
        %1735 = vadd.xlane.f32.xlu0 %v1649
        %v1736 = vpop.xlane.xlu0 %1735
        %1737 = vadd.xlane.f32.xlu0 %v1650
        %v1738 = vpop.xlane.xlu0 %1737
        %1739 = vadd.xlane.f32.xlu0 %v1651
        %v1740 = vpop.xlane.xlu0 %1739
        %1741 = vadd.xlane.f32.xlu0 %v1652
        %v1742 = vpop.xlane.xlu0 %1741
        %1743 = vadd.xlane.f32.xlu0 %v1653
        %v1744 = vpop.xlane.xlu0 %1743
        %1745 = vadd.xlane.f32.xlu0 %v1654
        %v1746 = vpop.xlane.xlu0 %1745
        %1747 = vadd.xlane.f32.xlu0 %v1655
        %v1748 = vpop.xlane.xlu0 %1747
        %1749 = vadd.xlane.f32.xlu0 %v1656
        %v1750 = vpop.xlane.xlu0 %1749
        %1751 = vadd.xlane.f32.xlu0 %v1657
        %v1752 = vpop.xlane.xlu0 %1751
        %1753 = vadd.xlane.f32.xlu0 %v1658
        %v1754 = vpop.xlane.xlu0 %1753
        %1755 = vadd.xlane.f32.xlu0 %v1659
        %v1756 = vpop.xlane.xlu0 %1755
        %1757 = vadd.xlane.f32.xlu0 %v1660
        %v1758 = vpop.xlane.xlu0 %1757
        %1759 = vadd.xlane.f32.xlu0 %v1661
        %v1760 = vpop.xlane.xlu0 %1759
        %1761 = vadd.xlane.f32.xlu0 %v1662
        %v1762 = vpop.xlane.xlu0 %1761
        %1763 = vadd.xlane.f32.xlu0 %v1663
        %v1764 = vpop.xlane.xlu0 %1763
        %1765 = vadd.xlane.f32.xlu0 %v1664
        %v1766 = vpop.xlane.xlu0 %1765
        %1767 = vadd.xlane.f32.xlu0 %v1665
        %v1768 = vpop.xlane.xlu0 %1767
        %1769 = vadd.xlane.f32.xlu0 %v1666
        %v1770 = vpop.xlane.xlu0 %1769
        %1771 = vadd.xlane.f32.xlu0 %v1667
        %v1772 = vpop.xlane.xlu0 %1771
        %1773 = vadd.xlane.f32.xlu0 %v1668
        %v1774 = vpop.xlane.xlu0 %1773
        %1775 = vadd.xlane.f32.xlu0 %v1669
        %v1776 = vpop.xlane.xlu0 %1775
        %1777 = vadd.xlane.f32.xlu0 %v1670
        %v1778 = vpop.xlane.xlu0 %1777
        %1779 = vadd.xlane.f32.xlu0 %v1671
        %v1780 = vpop.xlane.xlu0 %1779
        %1781 = vadd.xlane.f32.xlu0 %v1672
        %v1782 = vpop.xlane.xlu0 %1781
        %1783 = vadd.xlane.f32.xlu0 %v1673
        %v1784 = vpop.xlane.xlu0 %1783
        %1785 = vadd.xlane.f32.xlu0 %v1674
        %v1786 = vpop.xlane.xlu0 %1785
        %1787 = vadd.xlane.f32.xlu0 %v1675
        %v1788 = vpop.xlane.xlu0 %1787
        %1789 = vadd.xlane.f32.xlu0 %v1676
        %v1790 = vpop.xlane.xlu0 %1789
        %1791 = vadd.xlane.f32.xlu0 %v1677
        %v1792 = vpop.xlane.xlu0 %1791
        %1793 = vadd.xlane.f32.xlu0 %v1678
        %v1794 = vpop.xlane.xlu0 %1793
        %1795 = vadd.xlane.f32.xlu0 %v1679
        %v1796 = vpop.xlane.xlu0 %1795
        %1797 = vadd.xlane.f32.xlu0 %v1680
        %v1798 = vpop.xlane.xlu0 %1797
        %1799 = vadd.xlane.f32.xlu0 %v1681
        %v1800 = vpop.xlane.xlu0 %1799
        %1801 = vadd.xlane.f32.xlu0 %v1682
        %v1802 = vpop.xlane.xlu0 %1801
        %1803 = vadd.xlane.f32.xlu0 %v1683
        %v1804 = vpop.xlane.xlu0 %1803
        %1805 = vadd.xlane.f32.xlu0 %v1684
        %v1806 = vpop.xlane.xlu0 %1805
        %1807 = vadd.xlane.f32.xlu0 %v1685
        %v1808 = vpop.xlane.xlu0 %1807
        %1809 = vadd.xlane.f32.xlu0 %v1686
        %v1810 = vpop.xlane.xlu0 %1809
        %1811 = vadd.xlane.f32.xlu0 %v1687
        %v1812 = vpop.xlane.xlu0 %1811
        %1813 = vadd.xlane.f32.xlu0 %v1688
        %v1814 = vpop.xlane.xlu0 %1813
        %1815 = vadd.xlane.f32.xlu0 %v1689
        %v1816 = vpop.xlane.xlu0 %1815
        %1817 = vadd.xlane.f32.xlu0 %v1690
        %v1818 = vpop.xlane.xlu0 %1817
        %v1819 = vld [vmem:[#allocation2] sm:$0x1]
        %v1821 = vlaneseq
        %v1822 = vshrl.u32 %v1821, 7
        %v1823 = vsub.s32 0, %v1822
        %v1824 = vrot.slane %v1819, %v1823
        %1825 = vset.pattern.permute.xlu0 0
        %1826 = vperm.xlu0 %1825, %v1824
        %v1827 = vpop.permute.xlu0 %1826
        %v1829 = vadd.f32 %v1692, %v1827
        %v1830 = vadd.f32 %v1694, %v1827
        %v1831 = vadd.f32 %v1696, %v1827
        %v1832 = vadd.f32 %v1698, %v1827
        %v1833 = vadd.f32 %v1700, %v1827
        %v1834 = vadd.f32 %v1702, %v1827
        %v1835 = vadd.f32 %v1704, %v1827
        %v1836 = vadd.f32 %v1706, %v1827
        %v1837 = vadd.f32 %v1708, %v1827
        %v1838 = vadd.f32 %v1710, %v1827
        %v1839 = vadd.f32 %v1712, %v1827
        %v1840 = vadd.f32 %v1714, %v1827
        %v1841 = vadd.f32 %v1716, %v1827
        %v1842 = vadd.f32 %v1718, %v1827
        %v1843 = vadd.f32 %v1720, %v1827
        %v1844 = vadd.f32 %v1722, %v1827
        %v1845 = vadd.f32 %v1724, %v1827
        %v1846 = vadd.f32 %v1726, %v1827
        %v1847 = vadd.f32 %v1728, %v1827
        %v1848 = vadd.f32 %v1730, %v1827
        %v1849 = vadd.f32 %v1732, %v1827
        %v1850 = vadd.f32 %v1734, %v1827
        %v1851 = vadd.f32 %v1736, %v1827
        %v1852 = vadd.f32 %v1738, %v1827
        %v1853 = vadd.f32 %v1740, %v1827
        %v1854 = vadd.f32 %v1742, %v1827
        %v1855 = vadd.f32 %v1744, %v1827
        %v1856 = vadd.f32 %v1746, %v1827
        %v1857 = vadd.f32 %v1748, %v1827
        %v1858 = vadd.f32 %v1750, %v1827
        %v1859 = vadd.f32 %v1752, %v1827
        %v1860 = vadd.f32 %v1754, %v1827
        %v1861 = vadd.f32 %v1756, %v1827
        %v1862 = vadd.f32 %v1758, %v1827
        %v1863 = vadd.f32 %v1760, %v1827
        %v1864 = vadd.f32 %v1762, %v1827
        %v1865 = vadd.f32 %v1764, %v1827
        %v1866 = vadd.f32 %v1766, %v1827
        %v1867 = vadd.f32 %v1768, %v1827
        %v1868 = vadd.f32 %v1770, %v1827
        %v1869 = vadd.f32 %v1772, %v1827
        %v1870 = vadd.f32 %v1774, %v1827
        %v1871 = vadd.f32 %v1776, %v1827
        %v1872 = vadd.f32 %v1778, %v1827
        %v1873 = vadd.f32 %v1780, %v1827
        %v1874 = vadd.f32 %v1782, %v1827
        %v1875 = vadd.f32 %v1784, %v1827
        %v1876 = vadd.f32 %v1786, %v1827
        %v1877 = vadd.f32 %v1788, %v1827
        %v1878 = vadd.f32 %v1790, %v1827
        %v1879 = vadd.f32 %v1792, %v1827
        %v1880 = vadd.f32 %v1794, %v1827
        %v1881 = vadd.f32 %v1796, %v1827
        %v1882 = vadd.f32 %v1798, %v1827
        %v1883 = vadd.f32 %v1800, %v1827
        %v1884 = vadd.f32 %v1802, %v1827
        %v1885 = vadd.f32 %v1804, %v1827
        %v1886 = vadd.f32 %v1806, %v1827
        %v1887 = vadd.f32 %v1808, %v1827
        %v1888 = vadd.f32 %v1810, %v1827
        %v1889 = vadd.f32 %v1812, %v1827
        %v1890 = vadd.f32 %v1814, %v1827
        %v1891 = vadd.f32 %v1816, %v1827
        %v1892 = vadd.f32 %v1818, %v1827
        %1957 = vset.pattern.permute.xlu0 0
        %1958 = vperm.xlu0 %1957, %v1829
        %v1959 = vpop.permute.xlu0 %1958
        %1960 = vset.pattern.permute.xlu0 0
        %1961 = vperm.xlu0 %1960, %v1837
        %v1962 = vpop.permute.xlu0 %1961
        %1963 = vset.pattern.permute.xlu0 0
        %1964 = vperm.xlu0 %1963, %v1845
        %v1965 = vpop.permute.xlu0 %1964
        %1966 = vset.pattern.permute.xlu0 0
        %1967 = vperm.xlu0 %1966, %v1853
        %v1968 = vpop.permute.xlu0 %1967
        %1969 = vset.pattern.permute.xlu0 0
        %1970 = vperm.xlu0 %1969, %v1861
        %v1971 = vpop.permute.xlu0 %1970
        %1972 = vset.pattern.permute.xlu0 0
        %1973 = vperm.xlu0 %1972, %v1869
        %v1974 = vpop.permute.xlu0 %1973
        %1975 = vset.pattern.permute.xlu0 0
        %1976 = vperm.xlu0 %1975, %v1877
        %v1977 = vpop.permute.xlu0 %1976
        %1978 = vset.pattern.permute.xlu0 0
        %1979 = vperm.xlu0 %1978, %v1885
        %v1980 = vpop.permute.xlu0 %1979
        %1981 = vset.pattern.permute.xlu0 0
        %1982 = vperm.xlu0 %1981, %v1830
        %v1983 = vpop.permute.xlu0 %1982
        %1984 = vset.pattern.permute.xlu0 0
        %1985 = vperm.xlu0 %1984, %v1838
        %v1986 = vpop.permute.xlu0 %1985
        %1987 = vset.pattern.permute.xlu0 0
        %1988 = vperm.xlu0 %1987, %v1846
        %v1989 = vpop.permute.xlu0 %1988
        %1990 = vset.pattern.permute.xlu0 0
        %1991 = vperm.xlu0 %1990, %v1854
        %v1992 = vpop.permute.xlu0 %1991
        %1993 = vset.pattern.permute.xlu0 0
        %1994 = vperm.xlu0 %1993, %v1862
        %v1995 = vpop.permute.xlu0 %1994
        %1996 = vset.pattern.permute.xlu0 0
        %1997 = vperm.xlu0 %1996, %v1870
        %v1998 = vpop.permute.xlu0 %1997
        %1999 = vset.pattern.permute.xlu0 0
        %2000 = vperm.xlu0 %1999, %v1878
        %v2001 = vpop.permute.xlu0 %2000
        %2002 = vset.pattern.permute.xlu0 0
        %2003 = vperm.xlu0 %2002, %v1886
        %v2004 = vpop.permute.xlu0 %2003
        %2005 = vset.pattern.permute.xlu0 0
        %2006 = vperm.xlu0 %2005, %v1831
        %v2007 = vpop.permute.xlu0 %2006
        %2008 = vset.pattern.permute.xlu0 0
        %2009 = vperm.xlu0 %2008, %v1839
        %v2010 = vpop.permute.xlu0 %2009
        %2011 = vset.pattern.permute.xlu0 0
        %2012 = vperm.xlu0 %2011, %v1847
        %v2013 = vpop.permute.xlu0 %2012
        %2014 = vset.pattern.permute.xlu0 0
        %2015 = vperm.xlu0 %2014, %v1855
        %v2016 = vpop.permute.xlu0 %2015
        %2017 = vset.pattern.permute.xlu0 0
        %2018 = vperm.xlu0 %2017, %v1863
        %v2019 = vpop.permute.xlu0 %2018
        %2020 = vset.pattern.permute.xlu0 0
        %2021 = vperm.xlu0 %2020, %v1871
        %v2022 = vpop.permute.xlu0 %2021
        %2023 = vset.pattern.permute.xlu0 0
        %2024 = vperm.xlu0 %2023, %v1879
        %v2025 = vpop.permute.xlu0 %2024
        %2026 = vset.pattern.permute.xlu0 0
        %2027 = vperm.xlu0 %2026, %v1887
        %v2028 = vpop.permute.xlu0 %2027
        %2029 = vset.pattern.permute.xlu0 0
        %2030 = vperm.xlu0 %2029, %v1832
        %v2031 = vpop.permute.xlu0 %2030
        %2032 = vset.pattern.permute.xlu0 0
        %2033 = vperm.xlu0 %2032, %v1840
        %v2034 = vpop.permute.xlu0 %2033
        %2035 = vset.pattern.permute.xlu0 0
        %2036 = vperm.xlu0 %2035, %v1848
        %v2037 = vpop.permute.xlu0 %2036
        %2038 = vset.pattern.permute.xlu0 0
        %2039 = vperm.xlu0 %2038, %v1856
        %v2040 = vpop.permute.xlu0 %2039
        %2041 = vset.pattern.permute.xlu0 0
        %2042 = vperm.xlu0 %2041, %v1864
        %v2043 = vpop.permute.xlu0 %2042
        %2044 = vset.pattern.permute.xlu0 0
        %2045 = vperm.xlu0 %2044, %v1872
        %v2046 = vpop.permute.xlu0 %2045
        %2047 = vset.pattern.permute.xlu0 0
        %2048 = vperm.xlu0 %2047, %v1880
        %v2049 = vpop.permute.xlu0 %2048
        %2050 = vset.pattern.permute.xlu0 0
        %2051 = vperm.xlu0 %2050, %v1888
        %v2052 = vpop.permute.xlu0 %2051
        %2053 = vset.pattern.permute.xlu0 0
        %2054 = vperm.xlu0 %2053, %v1833
        %v2055 = vpop.permute.xlu0 %2054
        %2056 = vset.pattern.permute.xlu0 0
        %2057 = vperm.xlu0 %2056, %v1841
        %v2058 = vpop.permute.xlu0 %2057
        %2059 = vset.pattern.permute.xlu0 0
        %2060 = vperm.xlu0 %2059, %v1849
        %v2061 = vpop.permute.xlu0 %2060
        %2062 = vset.pattern.permute.xlu0 0
        %2063 = vperm.xlu0 %2062, %v1857
        %v2064 = vpop.permute.xlu0 %2063
        %2065 = vset.pattern.permute.xlu0 0
        %2066 = vperm.xlu0 %2065, %v1865
        %v2067 = vpop.permute.xlu0 %2066
        %2068 = vset.pattern.permute.xlu0 0
        %2069 = vperm.xlu0 %2068, %v1873
        %v2070 = vpop.permute.xlu0 %2069
        %2071 = vset.pattern.permute.xlu0 0
        %2072 = vperm.xlu0 %2071, %v1881
        %v2073 = vpop.permute.xlu0 %2072
        %2074 = vset.pattern.permute.xlu0 0
        %2075 = vperm.xlu0 %2074, %v1889
        %v2076 = vpop.permute.xlu0 %2075
        %2077 = vset.pattern.permute.xlu0 0
        %2078 = vperm.xlu0 %2077, %v1834
        %v2079 = vpop.permute.xlu0 %2078
        %2080 = vset.pattern.permute.xlu0 0
        %2081 = vperm.xlu0 %2080, %v1842
        %v2082 = vpop.permute.xlu0 %2081
        %2083 = vset.pattern.permute.xlu0 0
        %2084 = vperm.xlu0 %2083, %v1850
        %v2085 = vpop.permute.xlu0 %2084
        %2086 = vset.pattern.permute.xlu0 0
        %2087 = vperm.xlu0 %2086, %v1858
        %v2088 = vpop.permute.xlu0 %2087
        %2089 = vset.pattern.permute.xlu0 0
        %2090 = vperm.xlu0 %2089, %v1866
        %v2091 = vpop.permute.xlu0 %2090
        %2092 = vset.pattern.permute.xlu0 0
        %2093 = vperm.xlu0 %2092, %v1874
        %v2094 = vpop.permute.xlu0 %2093
        %2095 = vset.pattern.permute.xlu0 0
        %2096 = vperm.xlu0 %2095, %v1882
        %v2097 = vpop.permute.xlu0 %2096
        %2098 = vset.pattern.permute.xlu0 0
        %2099 = vperm.xlu0 %2098, %v1890
        %v2100 = vpop.permute.xlu0 %2099
        %2101 = vset.pattern.permute.xlu0 0
        %2102 = vperm.xlu0 %2101, %v1835
        %v2103 = vpop.permute.xlu0 %2102
        %2104 = vset.pattern.permute.xlu0 0
        %2105 = vperm.xlu0 %2104, %v1843
        %v2106 = vpop.permute.xlu0 %2105
        %2107 = vset.pattern.permute.xlu0 0
        %2108 = vperm.xlu0 %2107, %v1851
        %v2109 = vpop.permute.xlu0 %2108
        %2110 = vset.pattern.permute.xlu0 0
        %2111 = vperm.xlu0 %2110, %v1859
        %v2112 = vpop.permute.xlu0 %2111
        %2113 = vset.pattern.permute.xlu0 0
        %2114 = vperm.xlu0 %2113, %v1867
        %v2115 = vpop.permute.xlu0 %2114
        %2116 = vset.pattern.permute.xlu0 0
        %2117 = vperm.xlu0 %2116, %v1875
        %v2118 = vpop.permute.xlu0 %2117
        %2119 = vset.pattern.permute.xlu0 0
        %2120 = vperm.xlu0 %2119, %v1883
        %v2121 = vpop.permute.xlu0 %2120
        %2122 = vset.pattern.permute.xlu0 0
        %2123 = vperm.xlu0 %2122, %v1891
        %v2124 = vpop.permute.xlu0 %2123
        %2125 = vset.pattern.permute.xlu0 0
        %2126 = vperm.xlu0 %2125, %v1836
        %v2127 = vpop.permute.xlu0 %2126
        %2128 = vset.pattern.permute.xlu0 0
        %2129 = vperm.xlu0 %2128, %v1844
        %v2130 = vpop.permute.xlu0 %2129
        %2131 = vset.pattern.permute.xlu0 0
        %2132 = vperm.xlu0 %2131, %v1852
        %v2133 = vpop.permute.xlu0 %2132
        %2134 = vset.pattern.permute.xlu0 0
        %2135 = vperm.xlu0 %2134, %v1860
        %v2136 = vpop.permute.xlu0 %2135
        %2137 = vset.pattern.permute.xlu0 0
        %2138 = vperm.xlu0 %2137, %v1868
        %v2139 = vpop.permute.xlu0 %2138
        %2140 = vset.pattern.permute.xlu0 0
        %2141 = vperm.xlu0 %2140, %v1876
        %v2142 = vpop.permute.xlu0 %2141
        %2143 = vset.pattern.permute.xlu0 0
        %2144 = vperm.xlu0 %2143, %v1884
        %v2145 = vpop.permute.xlu0 %2144
        %2146 = vset.pattern.permute.xlu0 0
        %2147 = vperm.xlu0 %2146, %v1892
        %v2148 = vpop.permute.xlu0 %2147
        %v2149 = vlaneseq
        %v2150 = vand.u32 %v2149, 127
        %v2151 = vlaneseq
        %v2152 = vshrl.u32 %v2151, 7
        %v2153 = vsub.s32 %v2150, %v2152
        %v2154 = vrot.slane %v1959, %v2153
        %v2155 = vlaneseq
        %v2156 = vshrl.u32 %v2155, 7
        %v2157 = vsub.s32 %v2150, %v2156
        %v2158 = vrot.slane %v1962, %v2157
        %v2159 = vlaneseq
        %v2160 = vshrl.u32 %v2159, 7
        %v2161 = vsub.s32 %v2150, %v2160
        %v2162 = vrot.slane %v1965, %v2161
        %v2163 = vlaneseq
        %v2164 = vshrl.u32 %v2163, 7
        %v2165 = vsub.s32 %v2150, %v2164
        %v2166 = vrot.slane %v1968, %v2165
        %v2167 = vlaneseq
        %v2168 = vshrl.u32 %v2167, 7
        %v2169 = vsub.s32 %v2150, %v2168
        %v2170 = vrot.slane %v1971, %v2169
        %v2171 = vlaneseq
        %v2172 = vshrl.u32 %v2171, 7
        %v2173 = vsub.s32 %v2150, %v2172
        %v2174 = vrot.slane %v1974, %v2173
        %v2175 = vlaneseq
        %v2176 = vshrl.u32 %v2175, 7
        %v2177 = vsub.s32 %v2150, %v2176
        %v2178 = vrot.slane %v1977, %v2177
        %v2179 = vlaneseq
        %v2180 = vshrl.u32 %v2179, 7
        %v2181 = vsub.s32 %v2150, %v2180
        %v2182 = vrot.slane %v1980, %v2181
        %v2183 = vlaneseq
        %v2184 = vshrl.u32 %v2183, 7
        %v2185 = vsub.s32 %v2150, %v2184
        %v2186 = vrot.slane %v1983, %v2185
        %v2187 = vlaneseq
        %v2188 = vshrl.u32 %v2187, 7
        %v2189 = vsub.s32 %v2150, %v2188
        %v2190 = vrot.slane %v1986, %v2189
        %v2191 = vlaneseq
        %v2192 = vshrl.u32 %v2191, 7
        %v2193 = vsub.s32 %v2150, %v2192
        %v2194 = vrot.slane %v1989, %v2193
        %v2195 = vlaneseq
        %v2196 = vshrl.u32 %v2195, 7
        %v2197 = vsub.s32 %v2150, %v2196
        %v2198 = vrot.slane %v1992, %v2197
        %v2199 = vlaneseq
        %v2200 = vshrl.u32 %v2199, 7
        %v2201 = vsub.s32 %v2150, %v2200
        %v2202 = vrot.slane %v1995, %v2201
        %v2203 = vlaneseq
        %v2204 = vshrl.u32 %v2203, 7
        %v2205 = vsub.s32 %v2150, %v2204
        %v2206 = vrot.slane %v1998, %v2205
        %v2207 = vlaneseq
        %v2208 = vshrl.u32 %v2207, 7
        %v2209 = vsub.s32 %v2150, %v2208
        %v2210 = vrot.slane %v2001, %v2209
        %v2211 = vlaneseq
        %v2212 = vshrl.u32 %v2211, 7
        %v2213 = vsub.s32 %v2150, %v2212
        %v2214 = vrot.slane %v2004, %v2213
        %v2215 = vlaneseq
        %v2216 = vshrl.u32 %v2215, 7
        %v2217 = vsub.s32 %v2150, %v2216
        %v2218 = vrot.slane %v2007, %v2217
        %v2219 = vlaneseq
        %v2220 = vshrl.u32 %v2219, 7
        %v2221 = vsub.s32 %v2150, %v2220
        %v2222 = vrot.slane %v2010, %v2221
        %v2223 = vlaneseq
        %v2224 = vshrl.u32 %v2223, 7
        %v2225 = vsub.s32 %v2150, %v2224
        %v2226 = vrot.slane %v2013, %v2225
        %v2227 = vlaneseq
        %v2228 = vshrl.u32 %v2227, 7
        %v2229 = vsub.s32 %v2150, %v2228
        %v2230 = vrot.slane %v2016, %v2229
        %v2231 = vlaneseq
        %v2232 = vshrl.u32 %v2231, 7
        %v2233 = vsub.s32 %v2150, %v2232
        %v2234 = vrot.slane %v2019, %v2233
        %v2235 = vlaneseq
        %v2236 = vshrl.u32 %v2235, 7
        %v2237 = vsub.s32 %v2150, %v2236
        %v2238 = vrot.slane %v2022, %v2237
        %v2239 = vlaneseq
        %v2240 = vshrl.u32 %v2239, 7
        %v2241 = vsub.s32 %v2150, %v2240
        %v2242 = vrot.slane %v2025, %v2241
        %v2243 = vlaneseq
        %v2244 = vshrl.u32 %v2243, 7
        %v2245 = vsub.s32 %v2150, %v2244
        %v2246 = vrot.slane %v2028, %v2245
        %v2247 = vlaneseq
        %v2248 = vshrl.u32 %v2247, 7
        %v2249 = vsub.s32 %v2150, %v2248
        %v2250 = vrot.slane %v2031, %v2249
        %v2251 = vlaneseq
        %v2252 = vshrl.u32 %v2251, 7
        %v2253 = vsub.s32 %v2150, %v2252
        %v2254 = vrot.slane %v2034, %v2253
        %v2255 = vlaneseq
        %v2256 = vshrl.u32 %v2255, 7
        %v2257 = vsub.s32 %v2150, %v2256
        %v2258 = vrot.slane %v2037, %v2257
        %v2259 = vlaneseq
        %v2260 = vshrl.u32 %v2259, 7
        %v2261 = vsub.s32 %v2150, %v2260
        %v2262 = vrot.slane %v2040, %v2261
        %v2263 = vlaneseq
        %v2264 = vshrl.u32 %v2263, 7
        %v2265 = vsub.s32 %v2150, %v2264
        %v2266 = vrot.slane %v2043, %v2265
        %v2267 = vlaneseq
        %v2268 = vshrl.u32 %v2267, 7
        %v2269 = vsub.s32 %v2150, %v2268
        %v2270 = vrot.slane %v2046, %v2269
        %v2271 = vlaneseq
        %v2272 = vshrl.u32 %v2271, 7
        %v2273 = vsub.s32 %v2150, %v2272
        %v2274 = vrot.slane %v2049, %v2273
        %v2275 = vlaneseq
        %v2276 = vshrl.u32 %v2275, 7
        %v2277 = vsub.s32 %v2150, %v2276
        %v2278 = vrot.slane %v2052, %v2277
        %v2279 = vlaneseq
        %v2280 = vshrl.u32 %v2279, 7
        %v2281 = vsub.s32 %v2150, %v2280
        %v2282 = vrot.slane %v2055, %v2281
        %v2283 = vlaneseq
        %v2284 = vshrl.u32 %v2283, 7
        %v2285 = vsub.s32 %v2150, %v2284
        %v2286 = vrot.slane %v2058, %v2285
        %v2287 = vlaneseq
        %v2288 = vshrl.u32 %v2287, 7
        %v2289 = vsub.s32 %v2150, %v2288
        %v2290 = vrot.slane %v2061, %v2289
        %v2291 = vlaneseq
        %v2292 = vshrl.u32 %v2291, 7
        %v2293 = vsub.s32 %v2150, %v2292
        %v2294 = vrot.slane %v2064, %v2293
        %v2295 = vlaneseq
        %v2296 = vshrl.u32 %v2295, 7
        %v2297 = vsub.s32 %v2150, %v2296
        %v2298 = vrot.slane %v2067, %v2297
        %v2299 = vlaneseq
        %v2300 = vshrl.u32 %v2299, 7
        %v2301 = vsub.s32 %v2150, %v2300
        %v2302 = vrot.slane %v2070, %v2301
        %v2303 = vlaneseq
        %v2304 = vshrl.u32 %v2303, 7
        %v2305 = vsub.s32 %v2150, %v2304
        %v2306 = vrot.slane %v2073, %v2305
        %v2307 = vlaneseq
        %v2308 = vshrl.u32 %v2307, 7
        %v2309 = vsub.s32 %v2150, %v2308
        %v2310 = vrot.slane %v2076, %v2309
        %v2311 = vlaneseq
        %v2312 = vshrl.u32 %v2311, 7
        %v2313 = vsub.s32 %v2150, %v2312
        %v2314 = vrot.slane %v2079, %v2313
        %v2315 = vlaneseq
        %v2316 = vshrl.u32 %v2315, 7
        %v2317 = vsub.s32 %v2150, %v2316
        %v2318 = vrot.slane %v2082, %v2317
        %v2319 = vlaneseq
        %v2320 = vshrl.u32 %v2319, 7
        %v2321 = vsub.s32 %v2150, %v2320
        %v2322 = vrot.slane %v2085, %v2321
        %v2323 = vlaneseq
        %v2324 = vshrl.u32 %v2323, 7
        %v2325 = vsub.s32 %v2150, %v2324
        %v2326 = vrot.slane %v2088, %v2325
        %v2327 = vlaneseq
        %v2328 = vshrl.u32 %v2327, 7
        %v2329 = vsub.s32 %v2150, %v2328
        %v2330 = vrot.slane %v2091, %v2329
        %v2331 = vlaneseq
        %v2332 = vshrl.u32 %v2331, 7
        %v2333 = vsub.s32 %v2150, %v2332
        %v2334 = vrot.slane %v2094, %v2333
        %v2335 = vlaneseq
        %v2336 = vshrl.u32 %v2335, 7
        %v2337 = vsub.s32 %v2150, %v2336
        %v2338 = vrot.slane %v2097, %v2337
        %v2339 = vlaneseq
        %v2340 = vshrl.u32 %v2339, 7
        %v2341 = vsub.s32 %v2150, %v2340
        %v2342 = vrot.slane %v2100, %v2341
        %v2343 = vlaneseq
        %v2344 = vshrl.u32 %v2343, 7
        %v2345 = vsub.s32 %v2150, %v2344
        %v2346 = vrot.slane %v2103, %v2345
        %v2347 = vlaneseq
        %v2348 = vshrl.u32 %v2347, 7
        %v2349 = vsub.s32 %v2150, %v2348
        %v2350 = vrot.slane %v2106, %v2349
        %v2351 = vlaneseq
        %v2352 = vshrl.u32 %v2351, 7
        %v2353 = vsub.s32 %v2150, %v2352
        %v2354 = vrot.slane %v2109, %v2353
        %v2355 = vlaneseq
        %v2356 = vshrl.u32 %v2355, 7
        %v2357 = vsub.s32 %v2150, %v2356
        %v2358 = vrot.slane %v2112, %v2357
        %v2359 = vlaneseq
        %v2360 = vshrl.u32 %v2359, 7
        %v2361 = vsub.s32 %v2150, %v2360
        %v2362 = vrot.slane %v2115, %v2361
        %v2363 = vlaneseq
        %v2364 = vshrl.u32 %v2363, 7
        %v2365 = vsub.s32 %v2150, %v2364
        %v2366 = vrot.slane %v2118, %v2365
        %v2367 = vlaneseq
        %v2368 = vshrl.u32 %v2367, 7
        %v2369 = vsub.s32 %v2150, %v2368
        %v2370 = vrot.slane %v2121, %v2369
        %v2371 = vlaneseq
        %v2372 = vshrl.u32 %v2371, 7
        %v2373 = vsub.s32 %v2150, %v2372
        %v2374 = vrot.slane %v2124, %v2373
        %v2375 = vlaneseq
        %v2376 = vshrl.u32 %v2375, 7
        %v2377 = vsub.s32 %v2150, %v2376
        %v2378 = vrot.slane %v2127, %v2377
        %v2379 = vlaneseq
        %v2380 = vshrl.u32 %v2379, 7
        %v2381 = vsub.s32 %v2150, %v2380
        %v2382 = vrot.slane %v2130, %v2381
        %v2383 = vlaneseq
        %v2384 = vshrl.u32 %v2383, 7
        %v2385 = vsub.s32 %v2150, %v2384
        %v2386 = vrot.slane %v2133, %v2385
        %v2387 = vlaneseq
        %v2388 = vshrl.u32 %v2387, 7
        %v2389 = vsub.s32 %v2150, %v2388
        %v2390 = vrot.slane %v2136, %v2389
        %v2391 = vlaneseq
        %v2392 = vshrl.u32 %v2391, 7
        %v2393 = vsub.s32 %v2150, %v2392
        %v2394 = vrot.slane %v2139, %v2393
        %v2395 = vlaneseq
        %v2396 = vshrl.u32 %v2395, 7
        %v2397 = vsub.s32 %v2150, %v2396
        %v2398 = vrot.slane %v2142, %v2397
        %v2399 = vlaneseq
        %v2400 = vshrl.u32 %v2399, 7
        %v2401 = vsub.s32 %v2150, %v2400
        %v2402 = vrot.slane %v2145, %v2401
        %v2403 = vlaneseq
        %v2404 = vshrl.u32 %v2403, 7
        %v2405 = vsub.s32 %v2150, %v2404
        %v2406 = vrot.slane %v2148, %v2405
        %vm2407 = vcmask 1041409
        %v2408 = vsel %vm2407, %v2158, %v2154
        %vm2409 = vcmask 1042434
        %v2410 = vsel %vm2409, %v2162, %v2408
        %vm2411 = vcmask 1043459
        %v2412 = vsel %vm2411, %v2166, %v2410
        %vm2413 = vcmask 1044484
        %v2414 = vsel %vm2413, %v2170, %v2412
        %vm2415 = vcmask 1045509
        %v2416 = vsel %vm2415, %v2174, %v2414
        %vm2417 = vcmask 1046534
        %v2418 = vsel %vm2417, %v2178, %v2416
        %vm2419 = vcmask 1047559
        %v2420 = vsel %vm2419, %v2182, %v2418
        %v2421 = vsel %vm2407, %v2190, %v2186
        %v2422 = vsel %vm2409, %v2194, %v2421
        %v2423 = vsel %vm2411, %v2198, %v2422
        %v2424 = vsel %vm2413, %v2202, %v2423
        %v2425 = vsel %vm2415, %v2206, %v2424
        %v2426 = vsel %vm2417, %v2210, %v2425
        %v2427 = vsel %vm2419, %v2214, %v2426
        %v2428 = vsel %vm2407, %v2222, %v2218
        %v2429 = vsel %vm2409, %v2226, %v2428
        %v2430 = vsel %vm2411, %v2230, %v2429
        %v2431 = vsel %vm2413, %v2234, %v2430
        %v2432 = vsel %vm2415, %v2238, %v2431
        %v2433 = vsel %vm2417, %v2242, %v2432
        %v2434 = vsel %vm2419, %v2246, %v2433
        %v2435 = vsel %vm2407, %v2254, %v2250
        %v2436 = vsel %vm2409, %v2258, %v2435
        %v2437 = vsel %vm2411, %v2262, %v2436
        %v2438 = vsel %vm2413, %v2266, %v2437
        %v2439 = vsel %vm2415, %v2270, %v2438
        %v2440 = vsel %vm2417, %v2274, %v2439
        %v2441 = vsel %vm2419, %v2278, %v2440
        %v2442 = vsel %vm2407, %v2286, %v2282
        %v2443 = vsel %vm2409, %v2290, %v2442
        %v2444 = vsel %vm2411, %v2294, %v2443
        %v2445 = vsel %vm2413, %v2298, %v2444
        %v2446 = vsel %vm2415, %v2302, %v2445
        %v2447 = vsel %vm2417, %v2306, %v2446
        %v2448 = vsel %vm2419, %v2310, %v2447
        %v2449 = vsel %vm2407, %v2318, %v2314
        %v2450 = vsel %vm2409, %v2322, %v2449
        %v2451 = vsel %vm2411, %v2326, %v2450
        %v2452 = vsel %vm2413, %v2330, %v2451
        %v2453 = vsel %vm2415, %v2334, %v2452
        %v2454 = vsel %vm2417, %v2338, %v2453
        %v2455 = vsel %vm2419, %v2342, %v2454
        %v2456 = vsel %vm2407, %v2350, %v2346
        %v2457 = vsel %vm2409, %v2354, %v2456
        %v2458 = vsel %vm2411, %v2358, %v2457
        %v2459 = vsel %vm2413, %v2362, %v2458
        %v2460 = vsel %vm2415, %v2366, %v2459
        %v2461 = vsel %vm2417, %v2370, %v2460
        %v2462 = vsel %vm2419, %v2374, %v2461
        %v2463 = vsel %vm2407, %v2382, %v2378
        %v2464 = vsel %vm2409, %v2386, %v2463
        %v2465 = vsel %vm2411, %v2390, %v2464
        %v2466 = vsel %vm2413, %v2394, %v2465
        %v2467 = vsel %vm2415, %v2398, %v2466
        %v2468 = vsel %vm2417, %v2402, %v2467
        %v2469 = vsel %vm2419, %v2406, %v2468
        %v2478 = vcombine.low %v2420, %v2434
        %v2479 = vcombine.high %v2420, %v2434
        %v2481 = vunpack.c.l.s4 1983009808
        %v2482 = vunpack.c.0.s8 %v2481
        %v2483 = vlaneseq
        %v2484 = vshrl.u32 %v2483, 7
        %v2485 = vsub.s32 %v2482, %v2484
        %v2486 = vrot.slane %v2478, %v2485
        %v2488 = vunpack.c.l.s4 1983009808
        %v2489 = vunpack.c.0.s8 %v2488
        %v2490 = vlaneseq
        %v2491 = vshrl.u32 %v2490, 7
        %v2492 = vsub.s32 %v2489, %v2491
        %v2493 = vrot.slane %v2479, %v2492
        %v2494 = vcombine.low %v2427, %v2441
        %v2495 = vcombine.high %v2427, %v2441
        %v2497 = vunpack.c.l.s4 1983009808
        %v2498 = vunpack.c.0.s8 %v2497
        %v2499 = vlaneseq
        %v2500 = vshrl.u32 %v2499, 7
        %v2501 = vsub.s32 %v2498, %v2500
        %v2502 = vrot.slane %v2494, %v2501
        %v2504 = vunpack.c.l.s4 1983009808
        %v2505 = vunpack.c.0.s8 %v2504
        %v2506 = vlaneseq
        %v2507 = vshrl.u32 %v2506, 7
        %v2508 = vsub.s32 %v2505, %v2507
        %v2509 = vrot.slane %v2495, %v2508
        %v2510 = vcombine.low %v2448, %v2462
        %v2511 = vcombine.high %v2448, %v2462
        %v2513 = vunpack.c.l.s4 1983009808
        %v2514 = vunpack.c.0.s8 %v2513
        %v2515 = vlaneseq
        %v2516 = vshrl.u32 %v2515, 7
        %v2517 = vsub.s32 %v2514, %v2516
        %v2518 = vrot.slane %v2510, %v2517
        %v2520 = vunpack.c.l.s4 1983009808
        %v2521 = vunpack.c.0.s8 %v2520
        %v2522 = vlaneseq
        %v2523 = vshrl.u32 %v2522, 7
        %v2524 = vsub.s32 %v2521, %v2523
        %v2525 = vrot.slane %v2511, %v2524
        %v2526 = vcombine.low %v2455, %v2469
        %v2527 = vcombine.high %v2455, %v2469
        %v2529 = vunpack.c.l.s4 1983009808
        %v2530 = vunpack.c.0.s8 %v2529
        %v2531 = vlaneseq
        %v2532 = vshrl.u32 %v2531, 7
        %v2533 = vsub.s32 %v2530, %v2532
        %v2534 = vrot.slane %v2526, %v2533
        %v2536 = vunpack.c.l.s4 1983009808
        %v2537 = vunpack.c.0.s8 %v2536
        %v2538 = vlaneseq
        %v2539 = vshrl.u32 %v2538, 7
        %v2540 = vsub.s32 %v2537, %v2539
        %v2541 = vrot.slane %v2527, %v2540
        %v2542 = vcombine.low %v2486, %v2502
        %v2543 = vcombine.high %v2486, %v2502
        %v2545 = vunpack.c.l.s4 1934713408
        %v2546 = vunpack.c.0.s8 %v2545
        %v2547 = vlaneseq
        %v2548 = vshrl.u32 %v2547, 7
        %v2549 = vsub.s32 %v2546, %v2548
        %v2550 = vrot.slane %v2542, %v2549
        %v2552 = vunpack.c.l.s4 1934713408
        %v2553 = vunpack.c.0.s8 %v2552
        %v2554 = vlaneseq
        %v2555 = vshrl.u32 %v2554, 7
        %v2556 = vsub.s32 %v2553, %v2555
        %v2557 = vrot.slane %v2543, %v2556
        %v2558 = vcombine.low %v2493, %v2509
        %v2559 = vcombine.high %v2493, %v2509
        %v2561 = vunpack.c.l.s4 1934713408
        %v2562 = vunpack.c.0.s8 %v2561
        %v2563 = vlaneseq
        %v2564 = vshrl.u32 %v2563, 7
        %v2565 = vsub.s32 %v2562, %v2564
        %v2566 = vrot.slane %v2558, %v2565
        %v2568 = vunpack.c.l.s4 1934713408
        %v2569 = vunpack.c.0.s8 %v2568
        %v2570 = vlaneseq
        %v2571 = vshrl.u32 %v2570, 7
        %v2572 = vsub.s32 %v2569, %v2571
        %v2573 = vrot.slane %v2559, %v2572
        %v2574 = vcombine.low %v2518, %v2534
        %v2575 = vcombine.high %v2518, %v2534
        %v2577 = vunpack.c.l.s4 1934713408
        %v2578 = vunpack.c.0.s8 %v2577
        %v2579 = vlaneseq
        %v2580 = vshrl.u32 %v2579, 7
        %v2581 = vsub.s32 %v2578, %v2580
        %v2582 = vrot.slane %v2574, %v2581
        %v2584 = vunpack.c.l.s4 1934713408
        %v2585 = vunpack.c.0.s8 %v2584
        %v2586 = vlaneseq
        %v2587 = vshrl.u32 %v2586, 7
        %v2588 = vsub.s32 %v2585, %v2587
        %v2589 = vrot.slane %v2575, %v2588
        %v2590 = vcombine.low %v2525, %v2541
        %v2591 = vcombine.high %v2525, %v2541
        %v2593 = vunpack.c.l.s4 1934713408
        %v2594 = vunpack.c.0.s8 %v2593
        %v2595 = vlaneseq
        %v2596 = vshrl.u32 %v2595, 7
        %v2597 = vsub.s32 %v2594, %v2596
        %v2598 = vrot.slane %v2590, %v2597
        %v2600 = vunpack.c.l.s4 1934713408
        %v2601 = vunpack.c.0.s8 %v2600
        %v2602 = vlaneseq
        %v2603 = vshrl.u32 %v2602, 7
        %v2604 = vsub.s32 %v2601, %v2603
        %v2605 = vrot.slane %v2591, %v2604
        %v2606 = vcombine.low %v2550, %v2582
        %v2607 = vcombine.high %v2550, %v2582
        %v2608 = vcombine.low %v2557, %v2589
        %v2609 = vcombine.high %v2557, %v2589
        %v2610 = vcombine.low %v2566, %v2598
        %v2611 = vcombine.high %v2566, %v2598
        %v2612 = vcombine.low %v2573, %v2605
        %v2613 = vcombine.high %v2573, %v2605
        %vm2614 = vcmask 64512
        %v2615 = vsel %vm2614, %v2606, -inf
        %2616 = vmax.xlane.f32.xlu0 %v2615
        %v2617 = vpop.xlane.xlu0 %2616
        %v2618 = vsel %vm2614, %v2607, -inf
        %2619 = vmax.xlane.f32.xlu0 %v2618
        %v2620 = vpop.xlane.xlu0 %2619
        %v2621 = vsel %vm2614, %v2608, -inf
        %2622 = vmax.xlane.f32.xlu0 %v2621
        %v2623 = vpop.xlane.xlu0 %2622
        %v2624 = vsel %vm2614, %v2609, -inf
        %2625 = vmax.xlane.f32.xlu0 %v2624
        %v2626 = vpop.xlane.xlu0 %2625
        %v2627 = vsel %vm2614, %v2610, -inf
        %2628 = vmax.xlane.f32.xlu0 %v2627
        %v2629 = vpop.xlane.xlu0 %2628
        %v2630 = vsel %vm2614, %v2611, -inf
        %2631 = vmax.xlane.f32.xlu0 %v2630
        %v2632 = vpop.xlane.xlu0 %2631
        %v2633 = vsel %vm2614, %v2612, -inf
        %2634 = vmax.xlane.f32.xlu0 %v2633
        %v2635 = vpop.xlane.xlu0 %2634
        %v2636 = vsel %vm2614, %v2613, -inf
        %2637 = vmax.xlane.f32.xlu0 %v2636
        %v2638 = vpop.xlane.xlu0 %2637
        %v2639 = vsub.f32 %v2606, %v2617
        %v2640 = vsub.f32 %v2607, %v2620
        %v2641 = vsub.f32 %v2608, %v2623
        %v2642 = vsub.f32 %v2609, %v2626
        %v2643 = vsub.f32 %v2610, %v2629
        %v2644 = vsub.f32 %v2611, %v2632
        %v2645 = vsub.f32 %v2612, %v2635
        %v2646 = vsub.f32 %v2613, %v2638
        %v2647 = vmul.f32 %v2639, 1.442695
        %v2648 = vpow.pop %v2647
        %v2649 = vmul.f32 %v2640, 1.442695
        %v2650 = vpow.pop %v2649
        %v2651 = vmul.f32 %v2641, 1.442695
        %v2652 = vpow.pop %v2651
        %v2653 = vmul.f32 %v2642, 1.442695
        %v2654 = vpow.pop %v2653
        %v2655 = vmul.f32 %v2643, 1.442695
        %v2656 = vpow.pop %v2655
        %v2657 = vmul.f32 %v2644, 1.442695
        %v2658 = vpow.pop %v2657
        %v2659 = vmul.f32 %v2645, 1.442695
        %v2660 = vpow.pop %v2659
        %v2661 = vmul.f32 %v2646, 1.442695
        %v2662 = vpow.pop %v2661
        %v2663 = vsel %vm2614, %v2648, 0.0
        %2664 = vadd.xlane.f32.xlu0 %v2663
        %v2665 = vpop.xlane.xlu0 %2664
        %v2666 = vsel %vm2614, %v2650, 0.0
        %2667 = vadd.xlane.f32.xlu0 %v2666
        %v2668 = vpop.xlane.xlu0 %2667
        %v2669 = vsel %vm2614, %v2652, 0.0
        %2670 = vadd.xlane.f32.xlu0 %v2669
        %v2671 = vpop.xlane.xlu0 %2670
        %v2672 = vsel %vm2614, %v2654, 0.0
        %2673 = vadd.xlane.f32.xlu0 %v2672
        %v2674 = vpop.xlane.xlu0 %2673
        %v2675 = vsel %vm2614, %v2656, 0.0
        %2676 = vadd.xlane.f32.xlu0 %v2675
        %v2677 = vpop.xlane.xlu0 %2676
        %v2678 = vsel %vm2614, %v2658, 0.0
        %2679 = vadd.xlane.f32.xlu0 %v2678
        %v2680 = vpop.xlane.xlu0 %2679
        %v2681 = vsel %vm2614, %v2660, 0.0
        %2682 = vadd.xlane.f32.xlu0 %v2681
        %v2683 = vpop.xlane.xlu0 %2682
        %v2684 = vsel %vm2614, %v2662, 0.0
        %2685 = vadd.xlane.f32.xlu0 %v2684
        %v2686 = vpop.xlane.xlu0 %2685
        %v2687 = vrcp.pop %v2665
        %v2688 = vmul.f32 %v2648, %v2687
        %v2689 = vrcp.pop %v2668
        %v2690 = vmul.f32 %v2650, %v2689
        %v2691 = vrcp.pop %v2671
        %v2692 = vmul.f32 %v2652, %v2691
        %v2693 = vrcp.pop %v2674
        %v2694 = vmul.f32 %v2654, %v2693
        %v2695 = vrcp.pop %v2677
        %v2696 = vmul.f32 %v2656, %v2695
        %v2697 = vrcp.pop %v2680
        %v2698 = vmul.f32 %v2658, %v2697
        %v2699 = vrcp.pop %v2683
        %v2700 = vmul.f32 %v2660, %v2699
        %v2701 = vrcp.pop %v2686
        %v2702 = vmul.f32 %v2662, %v2701
        %v2703 = vlaneseq
        %v2704 = vshrl.u32 %v2703, 7
        %v2705 = vsub.s32 0, %v2704
        %v2706 = vrot.slane %v2688, %v2705
        %2708 = vbcast.lane.b32.xlu0 %v2706, 256
        %v2709 = vpop.permute.xlu0 %2708
        %v2710 = vlaneseq
        %v2711 = vshrl.u32 %v2710, 7
        %v2712 = vsub.s32 1, %v2711
        %v2713 = vrot.slane %v2688, %v2712
        %2715 = vbcast.lane.b32.xlu0 %v2713, 256
        %v2716 = vpop.permute.xlu0 %2715
        %v2717 = vlaneseq
        %v2718 = vshrl.u32 %v2717, 7
        %v2719 = vsub.s32 2, %v2718
        %v2720 = vrot.slane %v2688, %v2719
        %2722 = vbcast.lane.b32.xlu0 %v2720, 256
        %v2723 = vpop.permute.xlu0 %2722
        %v2724 = vlaneseq
        %v2725 = vshrl.u32 %v2724, 7
        %v2726 = vsub.s32 3, %v2725
        %v2727 = vrot.slane %v2688, %v2726
        %2729 = vbcast.lane.b32.xlu0 %v2727, 256
        %v2730 = vpop.permute.xlu0 %2729
        %v2731 = vlaneseq
        %v2732 = vshrl.u32 %v2731, 7
        %v2733 = vsub.s32 4, %v2732
        %v2734 = vrot.slane %v2688, %v2733
        %2736 = vbcast.lane.b32.xlu0 %v2734, 256
        %v2737 = vpop.permute.xlu0 %2736
        %v2738 = vlaneseq
        %v2739 = vshrl.u32 %v2738, 7
        %v2740 = vsub.s32 5, %v2739
        %v2741 = vrot.slane %v2688, %v2740
        %2743 = vbcast.lane.b32.xlu0 %v2741, 256
        %v2744 = vpop.permute.xlu0 %2743
        %v2745 = vlaneseq
        %v2746 = vshrl.u32 %v2745, 7
        %v2747 = vsub.s32 6, %v2746
        %v2748 = vrot.slane %v2688, %v2747
        %2750 = vbcast.lane.b32.xlu0 %v2748, 256
        %v2751 = vpop.permute.xlu0 %2750
        %v2752 = vlaneseq
        %v2753 = vshrl.u32 %v2752, 7
        %v2754 = vsub.s32 7, %v2753
        %v2755 = vrot.slane %v2688, %v2754
        %2757 = vbcast.lane.b32.xlu0 %v2755, 256
        %v2758 = vpop.permute.xlu0 %2757
        %v2759 = vlaneseq
        %v2760 = vshrl.u32 %v2759, 7
        %v2761 = vsub.s32 0, %v2760
        %v2762 = vrot.slane %v2690, %v2761
        %2764 = vbcast.lane.b32.xlu0 %v2762, 256
        %v2765 = vpop.permute.xlu0 %2764
        %v2766 = vlaneseq
        %v2767 = vshrl.u32 %v2766, 7
        %v2768 = vsub.s32 1, %v2767
        %v2769 = vrot.slane %v2690, %v2768
        %2771 = vbcast.lane.b32.xlu0 %v2769, 256
        %v2772 = vpop.permute.xlu0 %2771
        %v2773 = vlaneseq
        %v2774 = vshrl.u32 %v2773, 7
        %v2775 = vsub.s32 2, %v2774
        %v2776 = vrot.slane %v2690, %v2775
        %2778 = vbcast.lane.b32.xlu0 %v2776, 256
        %v2779 = vpop.permute.xlu0 %2778
        %v2780 = vlaneseq
        %v2781 = vshrl.u32 %v2780, 7
        %v2782 = vsub.s32 3, %v2781
        %v2783 = vrot.slane %v2690, %v2782
        %2785 = vbcast.lane.b32.xlu0 %v2783, 256
        %v2786 = vpop.permute.xlu0 %2785
        %v2787 = vlaneseq
        %v2788 = vshrl.u32 %v2787, 7
        %v2789 = vsub.s32 4, %v2788
        %v2790 = vrot.slane %v2690, %v2789
        %2792 = vbcast.lane.b32.xlu0 %v2790, 256
        %v2793 = vpop.permute.xlu0 %2792
        %v2794 = vlaneseq
        %v2795 = vshrl.u32 %v2794, 7
        %v2796 = vsub.s32 5, %v2795
        %v2797 = vrot.slane %v2690, %v2796
        %2799 = vbcast.lane.b32.xlu0 %v2797, 256
        %v2800 = vpop.permute.xlu0 %2799
        %v2801 = vlaneseq
        %v2802 = vshrl.u32 %v2801, 7
        %v2803 = vsub.s32 6, %v2802
        %v2804 = vrot.slane %v2690, %v2803
        %2806 = vbcast.lane.b32.xlu0 %v2804, 256
        %v2807 = vpop.permute.xlu0 %2806
        %v2808 = vlaneseq
        %v2809 = vshrl.u32 %v2808, 7
        %v2810 = vsub.s32 7, %v2809
        %v2811 = vrot.slane %v2690, %v2810
        %2813 = vbcast.lane.b32.xlu0 %v2811, 256
        %v2814 = vpop.permute.xlu0 %2813
        %v2815 = vlaneseq
        %v2816 = vshrl.u32 %v2815, 7
        %v2817 = vsub.s32 0, %v2816
        %v2818 = vrot.slane %v2692, %v2817
        %2820 = vbcast.lane.b32.xlu0 %v2818, 256
        %v2821 = vpop.permute.xlu0 %2820
        %v2822 = vlaneseq
        %v2823 = vshrl.u32 %v2822, 7
        %v2824 = vsub.s32 1, %v2823
        %v2825 = vrot.slane %v2692, %v2824
        %2827 = vbcast.lane.b32.xlu0 %v2825, 256
        %v2828 = vpop.permute.xlu0 %2827
        %v2829 = vlaneseq
        %v2830 = vshrl.u32 %v2829, 7
        %v2831 = vsub.s32 2, %v2830
        %v2832 = vrot.slane %v2692, %v2831
        %2834 = vbcast.lane.b32.xlu0 %v2832, 256
        %v2835 = vpop.permute.xlu0 %2834
        %v2836 = vlaneseq
        %v2837 = vshrl.u32 %v2836, 7
        %v2838 = vsub.s32 3, %v2837
        %v2839 = vrot.slane %v2692, %v2838
        %2841 = vbcast.lane.b32.xlu0 %v2839, 256
        %v2842 = vpop.permute.xlu0 %2841
        %v2843 = vlaneseq
        %v2844 = vshrl.u32 %v2843, 7
        %v2845 = vsub.s32 4, %v2844
        %v2846 = vrot.slane %v2692, %v2845
        %2848 = vbcast.lane.b32.xlu0 %v2846, 256
        %v2849 = vpop.permute.xlu0 %2848
        %v2850 = vlaneseq
        %v2851 = vshrl.u32 %v2850, 7
        %v2852 = vsub.s32 5, %v2851
        %v2853 = vrot.slane %v2692, %v2852
        %2855 = vbcast.lane.b32.xlu0 %v2853, 256
        %v2856 = vpop.permute.xlu0 %2855
        %v2857 = vlaneseq
        %v2858 = vshrl.u32 %v2857, 7
        %v2859 = vsub.s32 6, %v2858
        %v2860 = vrot.slane %v2692, %v2859
        %2862 = vbcast.lane.b32.xlu0 %v2860, 256
        %v2863 = vpop.permute.xlu0 %2862
        %v2864 = vlaneseq
        %v2865 = vshrl.u32 %v2864, 7
        %v2866 = vsub.s32 7, %v2865
        %v2867 = vrot.slane %v2692, %v2866
        %2869 = vbcast.lane.b32.xlu0 %v2867, 256
        %v2870 = vpop.permute.xlu0 %2869
        %v2871 = vlaneseq
        %v2872 = vshrl.u32 %v2871, 7
        %v2873 = vsub.s32 0, %v2872
        %v2874 = vrot.slane %v2694, %v2873
        %2876 = vbcast.lane.b32.xlu0 %v2874, 256
        %v2877 = vpop.permute.xlu0 %2876
        %v2878 = vlaneseq
        %v2879 = vshrl.u32 %v2878, 7
        %v2880 = vsub.s32 1, %v2879
        %v2881 = vrot.slane %v2694, %v2880
        %2883 = vbcast.lane.b32.xlu0 %v2881, 256
        %v2884 = vpop.permute.xlu0 %2883
        %v2885 = vlaneseq
        %v2886 = vshrl.u32 %v2885, 7
        %v2887 = vsub.s32 2, %v2886
        %v2888 = vrot.slane %v2694, %v2887
        %2890 = vbcast.lane.b32.xlu0 %v2888, 256
        %v2891 = vpop.permute.xlu0 %2890
        %v2892 = vlaneseq
        %v2893 = vshrl.u32 %v2892, 7
        %v2894 = vsub.s32 3, %v2893
        %v2895 = vrot.slane %v2694, %v2894
        %2897 = vbcast.lane.b32.xlu0 %v2895, 256
        %v2898 = vpop.permute.xlu0 %2897
        %v2899 = vlaneseq
        %v2900 = vshrl.u32 %v2899, 7
        %v2901 = vsub.s32 4, %v2900
        %v2902 = vrot.slane %v2694, %v2901
        %2904 = vbcast.lane.b32.xlu0 %v2902, 256
        %v2905 = vpop.permute.xlu0 %2904
        %v2906 = vlaneseq
        %v2907 = vshrl.u32 %v2906, 7
        %v2908 = vsub.s32 5, %v2907
        %v2909 = vrot.slane %v2694, %v2908
        %2911 = vbcast.lane.b32.xlu0 %v2909, 256
        %v2912 = vpop.permute.xlu0 %2911
        %v2913 = vlaneseq
        %v2914 = vshrl.u32 %v2913, 7
        %v2915 = vsub.s32 6, %v2914
        %v2916 = vrot.slane %v2694, %v2915
        %2918 = vbcast.lane.b32.xlu0 %v2916, 256
        %v2919 = vpop.permute.xlu0 %2918
        %v2920 = vlaneseq
        %v2921 = vshrl.u32 %v2920, 7
        %v2922 = vsub.s32 7, %v2921
        %v2923 = vrot.slane %v2694, %v2922
        %2925 = vbcast.lane.b32.xlu0 %v2923, 256
        %v2926 = vpop.permute.xlu0 %2925
        %v2927 = vlaneseq
        %v2928 = vshrl.u32 %v2927, 7
        %v2929 = vsub.s32 0, %v2928
        %v2930 = vrot.slane %v2696, %v2929
        %2932 = vbcast.lane.b32.xlu0 %v2930, 256
        %v2933 = vpop.permute.xlu0 %2932
        %v2934 = vlaneseq
        %v2935 = vshrl.u32 %v2934, 7
        %v2936 = vsub.s32 1, %v2935
        %v2937 = vrot.slane %v2696, %v2936
        %2939 = vbcast.lane.b32.xlu0 %v2937, 256
        %v2940 = vpop.permute.xlu0 %2939
        %v2941 = vlaneseq
        %v2942 = vshrl.u32 %v2941, 7
        %v2943 = vsub.s32 2, %v2942
        %v2944 = vrot.slane %v2696, %v2943
        %2946 = vbcast.lane.b32.xlu0 %v2944, 256
        %v2947 = vpop.permute.xlu0 %2946
        %v2948 = vlaneseq
        %v2949 = vshrl.u32 %v2948, 7
        %v2950 = vsub.s32 3, %v2949
        %v2951 = vrot.slane %v2696, %v2950
        %2953 = vbcast.lane.b32.xlu0 %v2951, 256
        %v2954 = vpop.permute.xlu0 %2953
        %v2955 = vlaneseq
        %v2956 = vshrl.u32 %v2955, 7
        %v2957 = vsub.s32 4, %v2956
        %v2958 = vrot.slane %v2696, %v2957
        %2960 = vbcast.lane.b32.xlu0 %v2958, 256
        %v2961 = vpop.permute.xlu0 %2960
        %v2962 = vlaneseq
        %v2963 = vshrl.u32 %v2962, 7
        %v2964 = vsub.s32 5, %v2963
        %v2965 = vrot.slane %v2696, %v2964
        %2967 = vbcast.lane.b32.xlu0 %v2965, 256
        %v2968 = vpop.permute.xlu0 %2967
        %v2969 = vlaneseq
        %v2970 = vshrl.u32 %v2969, 7
        %v2971 = vsub.s32 6, %v2970
        %v2972 = vrot.slane %v2696, %v2971
        %2974 = vbcast.lane.b32.xlu0 %v2972, 256
        %v2975 = vpop.permute.xlu0 %2974
        %v2976 = vlaneseq
        %v2977 = vshrl.u32 %v2976, 7
        %v2978 = vsub.s32 7, %v2977
        %v2979 = vrot.slane %v2696, %v2978
        %2981 = vbcast.lane.b32.xlu0 %v2979, 256
        %v2982 = vpop.permute.xlu0 %2981
        %v2983 = vlaneseq
        %v2984 = vshrl.u32 %v2983, 7
        %v2985 = vsub.s32 0, %v2984
        %v2986 = vrot.slane %v2698, %v2985
        %2988 = vbcast.lane.b32.xlu0 %v2986, 256
        %v2989 = vpop.permute.xlu0 %2988
        %v2990 = vlaneseq
        %v2991 = vshrl.u32 %v2990, 7
        %v2992 = vsub.s32 1, %v2991
        %v2993 = vrot.slane %v2698, %v2992
        %2995 = vbcast.lane.b32.xlu0 %v2993, 256
        %v2996 = vpop.permute.xlu0 %2995
        %v2997 = vlaneseq
        %v2998 = vshrl.u32 %v2997, 7
        %v2999 = vsub.s32 2, %v2998
        %v3000 = vrot.slane %v2698, %v2999
        %3002 = vbcast.lane.b32.xlu0 %v3000, 256
        %v3003 = vpop.permute.xlu0 %3002
        %v3004 = vlaneseq
        %v3005 = vshrl.u32 %v3004, 7
        %v3006 = vsub.s32 3, %v3005
        %v3007 = vrot.slane %v2698, %v3006
        %3009 = vbcast.lane.b32.xlu0 %v3007, 256
        %v3010 = vpop.permute.xlu0 %3009
        %v3011 = vlaneseq
        %v3012 = vshrl.u32 %v3011, 7
        %v3013 = vsub.s32 4, %v3012
        %v3014 = vrot.slane %v2698, %v3013
        %3016 = vbcast.lane.b32.xlu0 %v3014, 256
        %v3017 = vpop.permute.xlu0 %3016
        %v3018 = vlaneseq
        %v3019 = vshrl.u32 %v3018, 7
        %v3020 = vsub.s32 5, %v3019
        %v3021 = vrot.slane %v2698, %v3020
        %3023 = vbcast.lane.b32.xlu0 %v3021, 256
        %v3024 = vpop.permute.xlu0 %3023
        %v3025 = vlaneseq
        %v3026 = vshrl.u32 %v3025, 7
        %v3027 = vsub.s32 6, %v3026
        %v3028 = vrot.slane %v2698, %v3027
        %3030 = vbcast.lane.b32.xlu0 %v3028, 256
        %v3031 = vpop.permute.xlu0 %3030
        %v3032 = vlaneseq
        %v3033 = vshrl.u32 %v3032, 7
        %v3034 = vsub.s32 7, %v3033
        %v3035 = vrot.slane %v2698, %v3034
        %3037 = vbcast.lane.b32.xlu0 %v3035, 256
        %v3038 = vpop.permute.xlu0 %3037
        %v3039 = vlaneseq
        %v3040 = vshrl.u32 %v3039, 7
        %v3041 = vsub.s32 0, %v3040
        %v3042 = vrot.slane %v2700, %v3041
        %3044 = vbcast.lane.b32.xlu0 %v3042, 256
        %v3045 = vpop.permute.xlu0 %3044
        %v3046 = vlaneseq
        %v3047 = vshrl.u32 %v3046, 7
        %v3048 = vsub.s32 1, %v3047
        %v3049 = vrot.slane %v2700, %v3048
        %3051 = vbcast.lane.b32.xlu0 %v3049, 256
        %v3052 = vpop.permute.xlu0 %3051
        %v3053 = vlaneseq
        %v3054 = vshrl.u32 %v3053, 7
        %v3055 = vsub.s32 2, %v3054
        %v3056 = vrot.slane %v2700, %v3055
        %3058 = vbcast.lane.b32.xlu0 %v3056, 256
        %v3059 = vpop.permute.xlu0 %3058
        %v3060 = vlaneseq
        %v3061 = vshrl.u32 %v3060, 7
        %v3062 = vsub.s32 3, %v3061
        %v3063 = vrot.slane %v2700, %v3062
        %3065 = vbcast.lane.b32.xlu0 %v3063, 256
        %v3066 = vpop.permute.xlu0 %3065
        %v3067 = vlaneseq
        %v3068 = vshrl.u32 %v3067, 7
        %v3069 = vsub.s32 4, %v3068
        %v3070 = vrot.slane %v2700, %v3069
        %3072 = vbcast.lane.b32.xlu0 %v3070, 256
        %v3073 = vpop.permute.xlu0 %3072
        %v3074 = vlaneseq
        %v3075 = vshrl.u32 %v3074, 7
        %v3076 = vsub.s32 5, %v3075
        %v3077 = vrot.slane %v2700, %v3076
        %3079 = vbcast.lane.b32.xlu0 %v3077, 256
        %v3080 = vpop.permute.xlu0 %3079
        %v3081 = vlaneseq
        %v3082 = vshrl.u32 %v3081, 7
        %v3083 = vsub.s32 6, %v3082
        %v3084 = vrot.slane %v2700, %v3083
        %3086 = vbcast.lane.b32.xlu0 %v3084, 256
        %v3087 = vpop.permute.xlu0 %3086
        %v3088 = vlaneseq
        %v3089 = vshrl.u32 %v3088, 7
        %v3090 = vsub.s32 7, %v3089
        %v3091 = vrot.slane %v2700, %v3090
        %3093 = vbcast.lane.b32.xlu0 %v3091, 256
        %v3094 = vpop.permute.xlu0 %3093
        %v3095 = vlaneseq
        %v3096 = vshrl.u32 %v3095, 7
        %v3097 = vsub.s32 0, %v3096
        %v3098 = vrot.slane %v2702, %v3097
        %3100 = vbcast.lane.b32.xlu0 %v3098, 256
        %v3101 = vpop.permute.xlu0 %3100
        %v3102 = vlaneseq
        %v3103 = vshrl.u32 %v3102, 7
        %v3104 = vsub.s32 1, %v3103
        %v3105 = vrot.slane %v2702, %v3104
        %3107 = vbcast.lane.b32.xlu0 %v3105, 256
        %v3108 = vpop.permute.xlu0 %3107
        %v3109 = vlaneseq
        %v3110 = vshrl.u32 %v3109, 7
        %v3111 = vsub.s32 2, %v3110
        %v3112 = vrot.slane %v2702, %v3111
        %3114 = vbcast.lane.b32.xlu0 %v3112, 256
        %v3115 = vpop.permute.xlu0 %3114
        %v3116 = vlaneseq
        %v3117 = vshrl.u32 %v3116, 7
        %v3118 = vsub.s32 3, %v3117
        %v3119 = vrot.slane %v2702, %v3118
        %3121 = vbcast.lane.b32.xlu0 %v3119, 256
        %v3122 = vpop.permute.xlu0 %3121
        %v3123 = vlaneseq
        %v3124 = vshrl.u32 %v3123, 7
        %v3125 = vsub.s32 4, %v3124
        %v3126 = vrot.slane %v2702, %v3125
        %3128 = vbcast.lane.b32.xlu0 %v3126, 256
        %v3129 = vpop.permute.xlu0 %3128
        %v3130 = vlaneseq
        %v3131 = vshrl.u32 %v3130, 7
        %v3132 = vsub.s32 5, %v3131
        %v3133 = vrot.slane %v2702, %v3132
        %3135 = vbcast.lane.b32.xlu0 %v3133, 256
        %v3136 = vpop.permute.xlu0 %3135
        %v3137 = vlaneseq
        %v3138 = vshrl.u32 %v3137, 7
        %v3139 = vsub.s32 6, %v3138
        %v3140 = vrot.slane %v2702, %v3139
        %3142 = vbcast.lane.b32.xlu0 %v3140, 256
        %v3143 = vpop.permute.xlu0 %3142
        %v3144 = vlaneseq
        %v3145 = vshrl.u32 %v3144, 7
        %v3146 = vsub.s32 7, %v3145
        %v3147 = vrot.slane %v2702, %v3146
        %3149 = vbcast.lane.b32.xlu0 %v3147, 256
        %v3150 = vpop.permute.xlu0 %3149
        %v3151 = vmul.f32 %v2709, %v934
        %v3152 = vmul.f32 %v2716, %v938
        %v3153 = vmul.f32 %v2723, %v944
        %v3154 = vmul.f32 %v2730, %v948
        %v3155 = vmul.f32 %v2737, %v954
        %v3156 = vmul.f32 %v2744, %v958
        %v3157 = vmul.f32 %v2751, %v964
        %v3158 = vmul.f32 %v2758, %v968
        %v3159 = vmul.f32 %v2765, %v974
        %v3160 = vmul.f32 %v2772, %v978
        %v3161 = vmul.f32 %v2779, %v984
        %v3162 = vmul.f32 %v2786, %v988
        %v3163 = vmul.f32 %v2793, %v994
        %v3164 = vmul.f32 %v2800, %v998
        %v3165 = vmul.f32 %v2807, %v1004
        %v3166 = vmul.f32 %v2814, %v1008
        %v3167 = vmul.f32 %v2821, %v1014
        %v3168 = vmul.f32 %v2828, %v1018
        %v3169 = vmul.f32 %v2835, %v1024
        %v3170 = vmul.f32 %v2842, %v1028
        %v3171 = vmul.f32 %v2849, %v1034
        %v3172 = vmul.f32 %v2856, %v1038
        %v3173 = vmul.f32 %v2863, %v1044
        %v3174 = vmul.f32 %v2870, %v1048
        %v3175 = vmul.f32 %v2877, %v1054
        %v3176 = vmul.f32 %v2884, %v1058
        %v3177 = vmul.f32 %v2891, %v1064
        %v3178 = vmul.f32 %v2898, %v1068
        %v3179 = vmul.f32 %v2905, %v1074
        %v3180 = vmul.f32 %v2912, %v1078
        %v3181 = vmul.f32 %v2919, %v1084
        %v3182 = vmul.f32 %v2926, %v1088
        %v3183 = vmul.f32 %v2933, %v1094
        %v3184 = vmul.f32 %v2940, %v1098
        %v3185 = vmul.f32 %v2947, %v1104
        %v3186 = vmul.f32 %v2954, %v1108
        %v3187 = vmul.f32 %v2961, %v1114
        %v3188 = vmul.f32 %v2968, %v1118
        %v3189 = vmul.f32 %v2975, %v1124
        %v3190 = vmul.f32 %v2982, %v1128
        %v3191 = vmul.f32 %v2989, %v1134
        %v3192 = vmul.f32 %v2996, %v1138
        %v3193 = vmul.f32 %v3003, %v1144
        %v3194 = vmul.f32 %v3010, %v1148
        %v3195 = vmul.f32 %v3017, %v1154
        %v3196 = vmul.f32 %v3024, %v1158
        %v3197 = vmul.f32 %v3031, %v1164
        %v3198 = vmul.f32 %v3038, %v1168
        %v3199 = vmul.f32 %v3045, %v1174
        %v3200 = vmul.f32 %v3052, %v1178
        %v3201 = vmul.f32 %v3059, %v1184
        %v3202 = vmul.f32 %v3066, %v1188
        %v3203 = vmul.f32 %v3073, %v1194
        %v3204 = vmul.f32 %v3080, %v1198
        %v3205 = vmul.f32 %v3087, %v1204
        %v3206 = vmul.f32 %v3094, %v1208
        %v3207 = vmul.f32 %v3101, %v1214
        %v3208 = vmul.f32 %v3108, %v1218
        %v3209 = vmul.f32 %v3115, %v1224
        %v3210 = vmul.f32 %v3122, %v1228
        %v3211 = vmul.f32 %v3129, %v1234
        %v3212 = vmul.f32 %v3136, %v1238
        %v3213 = vmul.f32 %v3143, %v1244
        %v3214 = vmul.f32 %v3150, %v1248
        %v3215 = vrot.slane %v3151, 4
        %v3216 = vadd.f32 %v3151, %v3215
        %v3217 = vrot.slane %v3216, 2
        %v3218 = vadd.f32 %v3216, %v3217
        %v3219 = vrot.slane %v3218, 1
        %v3220 = vadd.f32 %v3218, %v3219
        %v3221 = vrot.slane %v3152, 4
        %v3222 = vadd.f32 %v3152, %v3221
        %v3223 = vrot.slane %v3222, 2
        %v3224 = vadd.f32 %v3222, %v3223
        %v3225 = vrot.slane %v3224, 1
        %v3226 = vadd.f32 %v3224, %v3225
        %v3227 = vrot.slane %v3153, 4
        %v3228 = vadd.f32 %v3153, %v3227
        %v3229 = vrot.slane %v3228, 2
        %v3230 = vadd.f32 %v3228, %v3229
        %v3231 = vrot.slane %v3230, 1
        %v3232 = vadd.f32 %v3230, %v3231
        %v3233 = vrot.slane %v3154, 4
        %v3234 = vadd.f32 %v3154, %v3233
        %v3235 = vrot.slane %v3234, 2
        %v3236 = vadd.f32 %v3234, %v3235
        %v3237 = vrot.slane %v3236, 1
        %v3238 = vadd.f32 %v3236, %v3237
        %v3239 = vrot.slane %v3155, 4
        %v3240 = vadd.f32 %v3155, %v3239
        %v3241 = vrot.slane %v3240, 2
        %v3242 = vadd.f32 %v3240, %v3241
        %v3243 = vrot.slane %v3242, 1
        %v3244 = vadd.f32 %v3242, %v3243
        %v3245 = vrot.slane %v3156, 4
        %v3246 = vadd.f32 %v3156, %v3245
        %v3247 = vrot.slane %v3246, 2
        %v3248 = vadd.f32 %v3246, %v3247
        %v3249 = vrot.slane %v3248, 1
        %v3250 = vadd.f32 %v3248, %v3249
        %v3251 = vrot.slane %v3157, 4
        %v3252 = vadd.f32 %v3157, %v3251
        %v3253 = vrot.slane %v3252, 2
        %v3254 = vadd.f32 %v3252, %v3253
        %v3255 = vrot.slane %v3254, 1
        %v3256 = vadd.f32 %v3254, %v3255
        %v3257 = vrot.slane %v3158, 4
        %v3258 = vadd.f32 %v3158, %v3257
        %v3259 = vrot.slane %v3258, 2
        %v3260 = vadd.f32 %v3258, %v3259
        %v3261 = vrot.slane %v3260, 1
        %v3262 = vadd.f32 %v3260, %v3261
        %v3263 = vrot.slane %v3159, 4
        %v3264 = vadd.f32 %v3159, %v3263
        %v3265 = vrot.slane %v3264, 2
        %v3266 = vadd.f32 %v3264, %v3265
        %v3267 = vrot.slane %v3266, 1
        %v3268 = vadd.f32 %v3266, %v3267
        %v3269 = vrot.slane %v3160, 4
        %v3270 = vadd.f32 %v3160, %v3269
        %v3271 = vrot.slane %v3270, 2
        %v3272 = vadd.f32 %v3270, %v3271
        %v3273 = vrot.slane %v3272, 1
        %v3274 = vadd.f32 %v3272, %v3273
        %v3275 = vrot.slane %v3161, 4
        %v3276 = vadd.f32 %v3161, %v3275
        %v3277 = vrot.slane %v3276, 2
        %v3278 = vadd.f32 %v3276, %v3277
        %v3279 = vrot.slane %v3278, 1
        %v3280 = vadd.f32 %v3278, %v3279
        %v3281 = vrot.slane %v3162, 4
        %v3282 = vadd.f32 %v3162, %v3281
        %v3283 = vrot.slane %v3282, 2
        %v3284 = vadd.f32 %v3282, %v3283
        %v3285 = vrot.slane %v3284, 1
        %v3286 = vadd.f32 %v3284, %v3285
        %v3287 = vrot.slane %v3163, 4
        %v3288 = vadd.f32 %v3163, %v3287
        %v3289 = vrot.slane %v3288, 2
        %v3290 = vadd.f32 %v3288, %v3289
        %v3291 = vrot.slane %v3290, 1
        %v3292 = vadd.f32 %v3290, %v3291
        %v3293 = vrot.slane %v3164, 4
        %v3294 = vadd.f32 %v3164, %v3293
        %v3295 = vrot.slane %v3294, 2
        %v3296 = vadd.f32 %v3294, %v3295
        %v3297 = vrot.slane %v3296, 1
        %v3298 = vadd.f32 %v3296, %v3297
        %v3299 = vrot.slane %v3165, 4
        %v3300 = vadd.f32 %v3165, %v3299
        %v3301 = vrot.slane %v3300, 2
        %v3302 = vadd.f32 %v3300, %v3301
        %v3303 = vrot.slane %v3302, 1
        %v3304 = vadd.f32 %v3302, %v3303
        %v3305 = vrot.slane %v3166, 4
        %v3306 = vadd.f32 %v3166, %v3305
        %v3307 = vrot.slane %v3306, 2
        %v3308 = vadd.f32 %v3306, %v3307
        %v3309 = vrot.slane %v3308, 1
        %v3310 = vadd.f32 %v3308, %v3309
        %v3311 = vrot.slane %v3167, 4
        %v3312 = vadd.f32 %v3167, %v3311
        %v3313 = vrot.slane %v3312, 2
        %v3314 = vadd.f32 %v3312, %v3313
        %v3315 = vrot.slane %v3314, 1
        %v3316 = vadd.f32 %v3314, %v3315
        %v3317 = vrot.slane %v3168, 4
        %v3318 = vadd.f32 %v3168, %v3317
        %v3319 = vrot.slane %v3318, 2
        %v3320 = vadd.f32 %v3318, %v3319
        %v3321 = vrot.slane %v3320, 1
        %v3322 = vadd.f32 %v3320, %v3321
        %v3323 = vrot.slane %v3169, 4
        %v3324 = vadd.f32 %v3169, %v3323
        %v3325 = vrot.slane %v3324, 2
        %v3326 = vadd.f32 %v3324, %v3325
        %v3327 = vrot.slane %v3326, 1
        %v3328 = vadd.f32 %v3326, %v3327
        %v3329 = vrot.slane %v3170, 4
        %v3330 = vadd.f32 %v3170, %v3329
        %v3331 = vrot.slane %v3330, 2
        %v3332 = vadd.f32 %v3330, %v3331
        %v3333 = vrot.slane %v3332, 1
        %v3334 = vadd.f32 %v3332, %v3333
        %v3335 = vrot.slane %v3171, 4
        %v3336 = vadd.f32 %v3171, %v3335
        %v3337 = vrot.slane %v3336, 2
        %v3338 = vadd.f32 %v3336, %v3337
        %v3339 = vrot.slane %v3338, 1
        %v3340 = vadd.f32 %v3338, %v3339
        %v3341 = vrot.slane %v3172, 4
        %v3342 = vadd.f32 %v3172, %v3341
        %v3343 = vrot.slane %v3342, 2
        %v3344 = vadd.f32 %v3342, %v3343
        %v3345 = vrot.slane %v3344, 1
        %v3346 = vadd.f32 %v3344, %v3345
        %v3347 = vrot.slane %v3173, 4
        %v3348 = vadd.f32 %v3173, %v3347
        %v3349 = vrot.slane %v3348, 2
        %v3350 = vadd.f32 %v3348, %v3349
        %v3351 = vrot.slane %v3350, 1
        %v3352 = vadd.f32 %v3350, %v3351
        %v3353 = vrot.slane %v3174, 4
        %v3354 = vadd.f32 %v3174, %v3353
        %v3355 = vrot.slane %v3354, 2
        %v3356 = vadd.f32 %v3354, %v3355
        %v3357 = vrot.slane %v3356, 1
        %v3358 = vadd.f32 %v3356, %v3357
        %v3359 = vrot.slane %v3175, 4
        %v3360 = vadd.f32 %v3175, %v3359
        %v3361 = vrot.slane %v3360, 2
        %v3362 = vadd.f32 %v3360, %v3361
        %v3363 = vrot.slane %v3362, 1
        %v3364 = vadd.f32 %v3362, %v3363
        %v3365 = vrot.slane %v3176, 4
        %v3366 = vadd.f32 %v3176, %v3365
        %v3367 = vrot.slane %v3366, 2
        %v3368 = vadd.f32 %v3366, %v3367
        %v3369 = vrot.slane %v3368, 1
        %v3370 = vadd.f32 %v3368, %v3369
        %v3371 = vrot.slane %v3177, 4
        %v3372 = vadd.f32 %v3177, %v3371
        %v3373 = vrot.slane %v3372, 2
        %v3374 = vadd.f32 %v3372, %v3373
        %v3375 = vrot.slane %v3374, 1
        %v3376 = vadd.f32 %v3374, %v3375
        %v3377 = vrot.slane %v3178, 4
        %v3378 = vadd.f32 %v3178, %v3377
        %v3379 = vrot.slane %v3378, 2
        %v3380 = vadd.f32 %v3378, %v3379
        %v3381 = vrot.slane %v3380, 1
        %v3382 = vadd.f32 %v3380, %v3381
        %v3383 = vrot.slane %v3179, 4
        %v3384 = vadd.f32 %v3179, %v3383
        %v3385 = vrot.slane %v3384, 2
        %v3386 = vadd.f32 %v3384, %v3385
        %v3387 = vrot.slane %v3386, 1
        %v3388 = vadd.f32 %v3386, %v3387
        %v3389 = vrot.slane %v3180, 4
        %v3390 = vadd.f32 %v3180, %v3389
        %v3391 = vrot.slane %v3390, 2
        %v3392 = vadd.f32 %v3390, %v3391
        %v3393 = vrot.slane %v3392, 1
        %v3394 = vadd.f32 %v3392, %v3393
        %v3395 = vrot.slane %v3181, 4
        %v3396 = vadd.f32 %v3181, %v3395
        %v3397 = vrot.slane %v3396, 2
        %v3398 = vadd.f32 %v3396, %v3397
        %v3399 = vrot.slane %v3398, 1
        %v3400 = vadd.f32 %v3398, %v3399
        %v3401 = vrot.slane %v3182, 4
        %v3402 = vadd.f32 %v3182, %v3401
        %v3403 = vrot.slane %v3402, 2
        %v3404 = vadd.f32 %v3402, %v3403
        %v3405 = vrot.slane %v3404, 1
        %v3406 = vadd.f32 %v3404, %v3405
        %v3407 = vrot.slane %v3183, 4
        %v3408 = vadd.f32 %v3183, %v3407
        %v3409 = vrot.slane %v3408, 2
        %v3410 = vadd.f32 %v3408, %v3409
        %v3411 = vrot.slane %v3410, 1
        %v3412 = vadd.f32 %v3410, %v3411
        %v3413 = vrot.slane %v3184, 4
        %v3414 = vadd.f32 %v3184, %v3413
        %v3415 = vrot.slane %v3414, 2
        %v3416 = vadd.f32 %v3414, %v3415
        %v3417 = vrot.slane %v3416, 1
        %v3418 = vadd.f32 %v3416, %v3417
        %v3419 = vrot.slane %v3185, 4
        %v3420 = vadd.f32 %v3185, %v3419
        %v3421 = vrot.slane %v3420, 2
        %v3422 = vadd.f32 %v3420, %v3421
        %v3423 = vrot.slane %v3422, 1
        %v3424 = vadd.f32 %v3422, %v3423
        %v3425 = vrot.slane %v3186, 4
        %v3426 = vadd.f32 %v3186, %v3425
        %v3427 = vrot.slane %v3426, 2
        %v3428 = vadd.f32 %v3426, %v3427
        %v3429 = vrot.slane %v3428, 1
        %v3430 = vadd.f32 %v3428, %v3429
        %v3431 = vrot.slane %v3187, 4
        %v3432 = vadd.f32 %v3187, %v3431
        %v3433 = vrot.slane %v3432, 2
        %v3434 = vadd.f32 %v3432, %v3433
        %v3435 = vrot.slane %v3434, 1
        %v3436 = vadd.f32 %v3434, %v3435
        %v3437 = vrot.slane %v3188, 4
        %v3438 = vadd.f32 %v3188, %v3437
        %v3439 = vrot.slane %v3438, 2
        %v3440 = vadd.f32 %v3438, %v3439
        %v3441 = vrot.slane %v3440, 1
        %v3442 = vadd.f32 %v3440, %v3441
        %v3443 = vrot.slane %v3189, 4
        %v3444 = vadd.f32 %v3189, %v3443
        %v3445 = vrot.slane %v3444, 2
        %v3446 = vadd.f32 %v3444, %v3445
        %v3447 = vrot.slane %v3446, 1
        %v3448 = vadd.f32 %v3446, %v3447
        %v3449 = vrot.slane %v3190, 4
        %v3450 = vadd.f32 %v3190, %v3449
        %v3451 = vrot.slane %v3450, 2
        %v3452 = vadd.f32 %v3450, %v3451
        %v3453 = vrot.slane %v3452, 1
        %v3454 = vadd.f32 %v3452, %v3453
        %v3455 = vrot.slane %v3191, 4
        %v3456 = vadd.f32 %v3191, %v3455
        %v3457 = vrot.slane %v3456, 2
        %v3458 = vadd.f32 %v3456, %v3457
        %v3459 = vrot.slane %v3458, 1
        %v3460 = vadd.f32 %v3458, %v3459
        %v3461 = vrot.slane %v3192, 4
        %v3462 = vadd.f32 %v3192, %v3461
        %v3463 = vrot.slane %v3462, 2
        %v3464 = vadd.f32 %v3462, %v3463
        %v3465 = vrot.slane %v3464, 1
        %v3466 = vadd.f32 %v3464, %v3465
        %v3467 = vrot.slane %v3193, 4
        %v3468 = vadd.f32 %v3193, %v3467
        %v3469 = vrot.slane %v3468, 2
        %v3470 = vadd.f32 %v3468, %v3469
        %v3471 = vrot.slane %v3470, 1
        %v3472 = vadd.f32 %v3470, %v3471
        %v3473 = vrot.slane %v3194, 4
        %v3474 = vadd.f32 %v3194, %v3473
        %v3475 = vrot.slane %v3474, 2
        %v3476 = vadd.f32 %v3474, %v3475
        %v3477 = vrot.slane %v3476, 1
        %v3478 = vadd.f32 %v3476, %v3477
        %v3479 = vrot.slane %v3195, 4
        %v3480 = vadd.f32 %v3195, %v3479
        %v3481 = vrot.slane %v3480, 2
        %v3482 = vadd.f32 %v3480, %v3481
        %v3483 = vrot.slane %v3482, 1
        %v3484 = vadd.f32 %v3482, %v3483
        %v3485 = vrot.slane %v3196, 4
        %v3486 = vadd.f32 %v3196, %v3485
        %v3487 = vrot.slane %v3486, 2
        %v3488 = vadd.f32 %v3486, %v3487
        %v3489 = vrot.slane %v3488, 1
        %v3490 = vadd.f32 %v3488, %v3489
        %v3491 = vrot.slane %v3197, 4
        %v3492 = vadd.f32 %v3197, %v3491
        %v3493 = vrot.slane %v3492, 2
        %v3494 = vadd.f32 %v3492, %v3493
        %v3495 = vrot.slane %v3494, 1
        %v3496 = vadd.f32 %v3494, %v3495
        %v3497 = vrot.slane %v3198, 4
        %v3498 = vadd.f32 %v3198, %v3497
        %v3499 = vrot.slane %v3498, 2
        %v3500 = vadd.f32 %v3498, %v3499
        %v3501 = vrot.slane %v3500, 1
        %v3502 = vadd.f32 %v3500, %v3501
        %v3503 = vrot.slane %v3199, 4
        %v3504 = vadd.f32 %v3199, %v3503
        %v3505 = vrot.slane %v3504, 2
        %v3506 = vadd.f32 %v3504, %v3505
        %v3507 = vrot.slane %v3506, 1
        %v3508 = vadd.f32 %v3506, %v3507
        %v3509 = vrot.slane %v3200, 4
        %v3510 = vadd.f32 %v3200, %v3509
        %v3511 = vrot.slane %v3510, 2
        %v3512 = vadd.f32 %v3510, %v3511
        %v3513 = vrot.slane %v3512, 1
        %v3514 = vadd.f32 %v3512, %v3513
        %v3515 = vrot.slane %v3201, 4
        %v3516 = vadd.f32 %v3201, %v3515
        %v3517 = vrot.slane %v3516, 2
        %v3518 = vadd.f32 %v3516, %v3517
        %v3519 = vrot.slane %v3518, 1
        %v3520 = vadd.f32 %v3518, %v3519
        %v3521 = vrot.slane %v3202, 4
        %v3522 = vadd.f32 %v3202, %v3521
        %v3523 = vrot.slane %v3522, 2
        %v3524 = vadd.f32 %v3522, %v3523
        %v3525 = vrot.slane %v3524, 1
        %v3526 = vadd.f32 %v3524, %v3525
        %v3527 = vrot.slane %v3203, 4
        %v3528 = vadd.f32 %v3203, %v3527
        %v3529 = vrot.slane %v3528, 2
        %v3530 = vadd.f32 %v3528, %v3529
        %v3531 = vrot.slane %v3530, 1
        %v3532 = vadd.f32 %v3530, %v3531
        %v3533 = vrot.slane %v3204, 4
        %v3534 = vadd.f32 %v3204, %v3533
        %v3535 = vrot.slane %v3534, 2
        %v3536 = vadd.f32 %v3534, %v3535
        %v3537 = vrot.slane %v3536, 1
        %v3538 = vadd.f32 %v3536, %v3537
        %v3539 = vrot.slane %v3205, 4
        %v3540 = vadd.f32 %v3205, %v3539
        %v3541 = vrot.slane %v3540, 2
        %v3542 = vadd.f32 %v3540, %v3541
        %v3543 = vrot.slane %v3542, 1
        %v3544 = vadd.f32 %v3542, %v3543
        %v3545 = vrot.slane %v3206, 4
        %v3546 = vadd.f32 %v3206, %v3545
        %v3547 = vrot.slane %v3546, 2
        %v3548 = vadd.f32 %v3546, %v3547
        %v3549 = vrot.slane %v3548, 1
        %v3550 = vadd.f32 %v3548, %v3549
        %v3551 = vrot.slane %v3207, 4
        %v3552 = vadd.f32 %v3207, %v3551
        %v3553 = vrot.slane %v3552, 2
        %v3554 = vadd.f32 %v3552, %v3553
        %v3555 = vrot.slane %v3554, 1
        %v3556 = vadd.f32 %v3554, %v3555
        %v3557 = vrot.slane %v3208, 4
        %v3558 = vadd.f32 %v3208, %v3557
        %v3559 = vrot.slane %v3558, 2
        %v3560 = vadd.f32 %v3558, %v3559
        %v3561 = vrot.slane %v3560, 1
        %v3562 = vadd.f32 %v3560, %v3561
        %v3563 = vrot.slane %v3209, 4
        %v3564 = vadd.f32 %v3209, %v3563
        %v3565 = vrot.slane %v3564, 2
        %v3566 = vadd.f32 %v3564, %v3565
        %v3567 = vrot.slane %v3566, 1
        %v3568 = vadd.f32 %v3566, %v3567
        %v3569 = vrot.slane %v3210, 4
        %v3570 = vadd.f32 %v3210, %v3569
        %v3571 = vrot.slane %v3570, 2
        %v3572 = vadd.f32 %v3570, %v3571
        %v3573 = vrot.slane %v3572, 1
        %v3574 = vadd.f32 %v3572, %v3573
        %v3575 = vrot.slane %v3211, 4
        %v3576 = vadd.f32 %v3211, %v3575
        %v3577 = vrot.slane %v3576, 2
        %v3578 = vadd.f32 %v3576, %v3577
        %v3579 = vrot.slane %v3578, 1
        %v3580 = vadd.f32 %v3578, %v3579
        %v3581 = vrot.slane %v3212, 4
        %v3582 = vadd.f32 %v3212, %v3581
        %v3583 = vrot.slane %v3582, 2
        %v3584 = vadd.f32 %v3582, %v3583
        %v3585 = vrot.slane %v3584, 1
        %v3586 = vadd.f32 %v3584, %v3585
        %v3587 = vrot.slane %v3213, 4
        %v3588 = vadd.f32 %v3213, %v3587
        %v3589 = vrot.slane %v3588, 2
        %v3590 = vadd.f32 %v3588, %v3589
        %v3591 = vrot.slane %v3590, 1
        %v3592 = vadd.f32 %v3590, %v3591
        %v3593 = vrot.slane %v3214, 4
        %v3594 = vadd.f32 %v3214, %v3593
        %v3595 = vrot.slane %v3594, 2
        %v3596 = vadd.f32 %v3594, %v3595
        %v3597 = vrot.slane %v3596, 1
        %v3598 = vadd.f32 %v3596, %v3597
        %v3599 = vlaneseq
        %v3600 = vshrl.u32 %v3599, 7
        %v3601 = vsub.s32 0, %v3600
        %v3602 = vrot.slane %v541, %v3601
        %3604 = vbcast.lane.b32.xlu0 %v3602, 256
        %v3605 = vpop.permute.xlu0 %3604
        %v3606 = vlaneseq
        %v3607 = vshrl.u32 %v3606, 7
        %v3608 = vsub.s32 1, %v3607
        %v3609 = vrot.slane %v541, %v3608
        %3611 = vbcast.lane.b32.xlu0 %v3609, 256
        %v3612 = vpop.permute.xlu0 %3611
        %v3613 = vlaneseq
        %v3614 = vshrl.u32 %v3613, 7
        %v3615 = vsub.s32 2, %v3614
        %v3616 = vrot.slane %v541, %v3615
        %3618 = vbcast.lane.b32.xlu0 %v3616, 256
        %v3619 = vpop.permute.xlu0 %3618
        %v3620 = vlaneseq
        %v3621 = vshrl.u32 %v3620, 7
        %v3622 = vsub.s32 3, %v3621
        %v3623 = vrot.slane %v541, %v3622
        %3625 = vbcast.lane.b32.xlu0 %v3623, 256
        %v3626 = vpop.permute.xlu0 %3625
        %v3627 = vlaneseq
        %v3628 = vshrl.u32 %v3627, 7
        %v3629 = vsub.s32 4, %v3628
        %v3630 = vrot.slane %v541, %v3629
        %3632 = vbcast.lane.b32.xlu0 %v3630, 256
        %v3633 = vpop.permute.xlu0 %3632
        %v3634 = vlaneseq
        %v3635 = vshrl.u32 %v3634, 7
        %v3636 = vsub.s32 5, %v3635
        %v3637 = vrot.slane %v541, %v3636
        %3639 = vbcast.lane.b32.xlu0 %v3637, 256
        %v3640 = vpop.permute.xlu0 %3639
        %v3641 = vlaneseq
        %v3642 = vshrl.u32 %v3641, 7
        %v3643 = vsub.s32 6, %v3642
        %v3644 = vrot.slane %v541, %v3643
        %3646 = vbcast.lane.b32.xlu0 %v3644, 256
        %v3647 = vpop.permute.xlu0 %3646
        %v3648 = vlaneseq
        %v3649 = vshrl.u32 %v3648, 7
        %v3650 = vsub.s32 7, %v3649
        %v3651 = vrot.slane %v541, %v3650
        %3653 = vbcast.lane.b32.xlu0 %v3651, 256
        %v3654 = vpop.permute.xlu0 %3653
        %v3663 = vrot.slane %v3605, 1
        %v3664 = vrot.slane %v3605, 2
        %v3665 = vrot.slane %v3605, 3
        %v3666 = vrot.slane %v3605, 4
        %v3667 = vrot.slane %v3605, 5
        %v3668 = vrot.slane %v3605, 6
        %v3669 = vrot.slane %v3605, 7
        %v3670 = vrot.slane %v3612, 1
        %v3671 = vrot.slane %v3612, 2
        %v3672 = vrot.slane %v3612, 3
        %v3673 = vrot.slane %v3612, 4
        %v3674 = vrot.slane %v3612, 5
        %v3675 = vrot.slane %v3612, 6
        %v3676 = vrot.slane %v3612, 7
        %v3677 = vrot.slane %v3619, 1
        %v3678 = vrot.slane %v3619, 2
        %v3679 = vrot.slane %v3619, 3
        %v3680 = vrot.slane %v3619, 4
        %v3681 = vrot.slane %v3619, 5
        %v3682 = vrot.slane %v3619, 6
        %v3683 = vrot.slane %v3619, 7
        %v3684 = vrot.slane %v3626, 1
        %v3685 = vrot.slane %v3626, 2
        %v3686 = vrot.slane %v3626, 3
        %v3687 = vrot.slane %v3626, 4
        %v3688 = vrot.slane %v3626, 5
        %v3689 = vrot.slane %v3626, 6
        %v3690 = vrot.slane %v3626, 7
        %v3691 = vrot.slane %v3633, 1
        %v3692 = vrot.slane %v3633, 2
        %v3693 = vrot.slane %v3633, 3
        %v3694 = vrot.slane %v3633, 4
        %v3695 = vrot.slane %v3633, 5
        %v3696 = vrot.slane %v3633, 6
        %v3697 = vrot.slane %v3633, 7
        %v3698 = vrot.slane %v3640, 1
        %v3699 = vrot.slane %v3640, 2
        %v3700 = vrot.slane %v3640, 3
        %v3701 = vrot.slane %v3640, 4
        %v3702 = vrot.slane %v3640, 5
        %v3703 = vrot.slane %v3640, 6
        %v3704 = vrot.slane %v3640, 7
        %v3705 = vrot.slane %v3647, 1
        %v3706 = vrot.slane %v3647, 2
        %v3707 = vrot.slane %v3647, 3
        %v3708 = vrot.slane %v3647, 4
        %v3709 = vrot.slane %v3647, 5
        %v3710 = vrot.slane %v3647, 6
        %v3711 = vrot.slane %v3647, 7
        %v3712 = vrot.slane %v3654, 1
        %v3713 = vrot.slane %v3654, 2
        %v3714 = vrot.slane %v3654, 3
        %v3715 = vrot.slane %v3654, 4
        %v3716 = vrot.slane %v3654, 5
        %v3717 = vrot.slane %v3654, 6
        %v3718 = vrot.slane %v3654, 7
        %v3783 = vmul.f32 %v3220, %v3605
        %v3784 = vmul.f32 %v3226, %v3663
        %v3785 = vmul.f32 %v3232, %v3664
        %v3786 = vmul.f32 %v3238, %v3665
        %v3787 = vmul.f32 %v3244, %v3666
        %v3788 = vmul.f32 %v3250, %v3667
        %v3789 = vmul.f32 %v3256, %v3668
        %v3790 = vmul.f32 %v3262, %v3669
        %v3791 = vmul.f32 %v3268, %v3612
        %v3792 = vmul.f32 %v3274, %v3670
        %v3793 = vmul.f32 %v3280, %v3671
        %v3794 = vmul.f32 %v3286, %v3672
        %v3795 = vmul.f32 %v3292, %v3673
        %v3796 = vmul.f32 %v3298, %v3674
        %v3797 = vmul.f32 %v3304, %v3675
        %v3798 = vmul.f32 %v3310, %v3676
        %v3799 = vmul.f32 %v3316, %v3619
        %v3800 = vmul.f32 %v3322, %v3677
        %v3801 = vmul.f32 %v3328, %v3678
        %v3802 = vmul.f32 %v3334, %v3679
        %v3803 = vmul.f32 %v3340, %v3680
        %v3804 = vmul.f32 %v3346, %v3681
        %v3805 = vmul.f32 %v3352, %v3682
        %v3806 = vmul.f32 %v3358, %v3683
        %v3807 = vmul.f32 %v3364, %v3626
        %v3808 = vmul.f32 %v3370, %v3684
        %v3809 = vmul.f32 %v3376, %v3685
        %v3810 = vmul.f32 %v3382, %v3686
        %v3811 = vmul.f32 %v3388, %v3687
        %v3812 = vmul.f32 %v3394, %v3688
        %v3813 = vmul.f32 %v3400, %v3689
        %v3814 = vmul.f32 %v3406, %v3690
        %v3815 = vmul.f32 %v3412, %v3633
        %v3816 = vmul.f32 %v3418, %v3691
        %v3817 = vmul.f32 %v3424, %v3692
        %v3818 = vmul.f32 %v3430, %v3693
        %v3819 = vmul.f32 %v3436, %v3694
        %v3820 = vmul.f32 %v3442, %v3695
        %v3821 = vmul.f32 %v3448, %v3696
        %v3822 = vmul.f32 %v3454, %v3697
        %v3823 = vmul.f32 %v3460, %v3640
        %v3824 = vmul.f32 %v3466, %v3698
        %v3825 = vmul.f32 %v3472, %v3699
        %v3826 = vmul.f32 %v3478, %v3700
        %v3827 = vmul.f32 %v3484, %v3701
        %v3828 = vmul.f32 %v3490, %v3702
        %v3829 = vmul.f32 %v3496, %v3703
        %v3830 = vmul.f32 %v3502, %v3704
        %v3831 = vmul.f32 %v3508, %v3647
        %v3832 = vmul.f32 %v3514, %v3705
        %v3833 = vmul.f32 %v3520, %v3706
        %v3834 = vmul.f32 %v3526, %v3707
        %v3835 = vmul.f32 %v3532, %v3708
        %v3836 = vmul.f32 %v3538, %v3709
        %v3837 = vmul.f32 %v3544, %v3710
        %v3838 = vmul.f32 %v3550, %v3711
        %v3839 = vmul.f32 %v3556, %v3654
        %v3840 = vmul.f32 %v3562, %v3712
        %v3841 = vmul.f32 %v3568, %v3713
        %v3842 = vmul.f32 %v3574, %v3714
        %v3843 = vmul.f32 %v3580, %v3715
        %v3844 = vmul.f32 %v3586, %v3716
        %v3845 = vmul.f32 %v3592, %v3717
        %v3846 = vmul.f32 %v3598, %v3718
        %v3847 = vpack.c.bf16 %v534, %v533
        %v3848 = vpack.c.bf16 %v536, %v535
        %v3849 = vpack.c.bf16 %v538, %v537
        %v3850 = vpack.c.bf16 %v540, %v539
        %v3851 = vpack.c.bf16 %v3783, %v3783
        %v3852 = vpack.c.bf16 %v3784, %v3784
        %v3853 = vpack.c.bf16 %v3785, %v3785
        %v3854 = vpack.c.bf16 %v3786, %v3786
        %v3855 = vpack.c.bf16 %v3787, %v3787
        %v3856 = vpack.c.bf16 %v3788, %v3788
        %v3857 = vpack.c.bf16 %v3789, %v3789
        %v3858 = vpack.c.bf16 %v3790, %v3790
        %v3859 = vpack.c.bf16 %v3791, %v3791
        %v3860 = vpack.c.bf16 %v3792, %v3792
        %v3861 = vpack.c.bf16 %v3793, %v3793
        %v3862 = vpack.c.bf16 %v3794, %v3794
        %v3863 = vpack.c.bf16 %v3795, %v3795
        %v3864 = vpack.c.bf16 %v3796, %v3796
        %v3865 = vpack.c.bf16 %v3797, %v3797
        %v3866 = vpack.c.bf16 %v3798, %v3798
        %v3867 = vpack.c.bf16 %v3799, %v3799
        %v3868 = vpack.c.bf16 %v3800, %v3800
        %v3869 = vpack.c.bf16 %v3801, %v3801
        %v3870 = vpack.c.bf16 %v3802, %v3802
        %v3871 = vpack.c.bf16 %v3803, %v3803
        %v3872 = vpack.c.bf16 %v3804, %v3804
        %v3873 = vpack.c.bf16 %v3805, %v3805
        %v3874 = vpack.c.bf16 %v3806, %v3806
        %v3875 = vpack.c.bf16 %v3807, %v3807
        %v3876 = vpack.c.bf16 %v3808, %v3808
        %v3877 = vpack.c.bf16 %v3809, %v3809
        %v3878 = vpack.c.bf16 %v3810, %v3810
        %v3879 = vpack.c.bf16 %v3811, %v3811
        %v3880 = vpack.c.bf16 %v3812, %v3812
        %v3881 = vpack.c.bf16 %v3813, %v3813
        %v3882 = vpack.c.bf16 %v3814, %v3814
        %v3883 = vpack.c.bf16 %v3815, %v3815
        %v3884 = vpack.c.bf16 %v3816, %v3816
        %v3885 = vpack.c.bf16 %v3817, %v3817
        %v3886 = vpack.c.bf16 %v3818, %v3818
        %v3887 = vpack.c.bf16 %v3819, %v3819
        %v3888 = vpack.c.bf16 %v3820, %v3820
        %v3889 = vpack.c.bf16 %v3821, %v3821
        %v3890 = vpack.c.bf16 %v3822, %v3822
        %v3891 = vpack.c.bf16 %v3823, %v3823
        %v3892 = vpack.c.bf16 %v3824, %v3824
        %v3893 = vpack.c.bf16 %v3825, %v3825
        %v3894 = vpack.c.bf16 %v3826, %v3826
        %v3895 = vpack.c.bf16 %v3827, %v3827
        %v3896 = vpack.c.bf16 %v3828, %v3828
        %v3897 = vpack.c.bf16 %v3829, %v3829
        %v3898 = vpack.c.bf16 %v3830, %v3830
        %v3899 = vpack.c.bf16 %v3831, %v3831
        %v3900 = vpack.c.bf16 %v3832, %v3832
        %v3901 = vpack.c.bf16 %v3833, %v3833
        %v3902 = vpack.c.bf16 %v3834, %v3834
        %v3903 = vpack.c.bf16 %v3835, %v3835
        %v3904 = vpack.c.bf16 %v3836, %v3836
        %v3905 = vpack.c.bf16 %v3837, %v3837
        %v3906 = vpack.c.bf16 %v3838, %v3838
        %v3907 = vpack.c.bf16 %v3839, %v3839
        %v3908 = vpack.c.bf16 %v3840, %v3840
        %v3909 = vpack.c.bf16 %v3841, %v3841
        %v3910 = vpack.c.bf16 %v3842, %v3842
        %v3911 = vpack.c.bf16 %v3843, %v3843
        %v3912 = vpack.c.bf16 %v3844, %v3844
        %v3913 = vpack.c.bf16 %v3845, %v3845
        %v3914 = vpack.c.bf16 %v3846, %v3846
        %v3979 = vunpack.c.l.b16 %v3851
        %v3980 = vunpack.c.l.b16 %v3852
        %v3981 = vunpack.c.l.b16 %v3853
        %v3982 = vunpack.c.l.b16 %v3854
        %v3983 = vunpack.c.l.b16 %v3855
        %v3984 = vunpack.c.l.b16 %v3856
        %v3985 = vunpack.c.l.b16 %v3857
        %v3986 = vunpack.c.l.b16 %v3858
        %v3987 = vunpack.c.l.b16 %v3859
        %v3988 = vunpack.c.l.b16 %v3860
        %v3989 = vunpack.c.l.b16 %v3861
        %v3990 = vunpack.c.l.b16 %v3862
        %v3991 = vunpack.c.l.b16 %v3863
        %v3992 = vunpack.c.l.b16 %v3864
        %v3993 = vunpack.c.l.b16 %v3865
        %v3994 = vunpack.c.l.b16 %v3866
        %v3995 = vunpack.c.l.b16 %v3867
        %v3996 = vunpack.c.l.b16 %v3868
        %v3997 = vunpack.c.l.b16 %v3869
        %v3998 = vunpack.c.l.b16 %v3870
        %v3999 = vunpack.c.l.b16 %v3871
        %v4000 = vunpack.c.l.b16 %v3872
        %v4001 = vunpack.c.l.b16 %v3873
        %v4002 = vunpack.c.l.b16 %v3874
        %v4003 = vunpack.c.l.b16 %v3875
        %v4004 = vunpack.c.l.b16 %v3876
        %v4005 = vunpack.c.l.b16 %v3877
        %v4006 = vunpack.c.l.b16 %v3878
        %v4007 = vunpack.c.l.b16 %v3879
        %v4008 = vunpack.c.l.b16 %v3880
        %v4009 = vunpack.c.l.b16 %v3881
        %v4010 = vunpack.c.l.b16 %v3882
        %v4011 = vunpack.c.l.b16 %v3883
        %v4012 = vunpack.c.l.b16 %v3884
        %v4013 = vunpack.c.l.b16 %v3885
        %v4014 = vunpack.c.l.b16 %v3886
        %v4015 = vunpack.c.l.b16 %v3887
        %v4016 = vunpack.c.l.b16 %v3888
        %v4017 = vunpack.c.l.b16 %v3889
        %v4018 = vunpack.c.l.b16 %v3890
        %v4019 = vunpack.c.l.b16 %v3891
        %v4020 = vunpack.c.l.b16 %v3892
        %v4021 = vunpack.c.l.b16 %v3893
        %v4022 = vunpack.c.l.b16 %v3894
        %v4023 = vunpack.c.l.b16 %v3895
        %v4024 = vunpack.c.l.b16 %v3896
        %v4025 = vunpack.c.l.b16 %v3897
        %v4026 = vunpack.c.l.b16 %v3898
        %v4027 = vunpack.c.l.b16 %v3899
        %v4028 = vunpack.c.l.b16 %v3900
        %v4029 = vunpack.c.l.b16 %v3901
        %v4030 = vunpack.c.l.b16 %v3902
        %v4031 = vunpack.c.l.b16 %v3903
        %v4032 = vunpack.c.l.b16 %v3904
        %v4033 = vunpack.c.l.b16 %v3905
        %v4034 = vunpack.c.l.b16 %v3906
        %v4035 = vunpack.c.l.b16 %v3907
        %v4036 = vunpack.c.l.b16 %v3908
        %v4037 = vunpack.c.l.b16 %v3909
        %v4038 = vunpack.c.l.b16 %v3910
        %v4039 = vunpack.c.l.b16 %v3911
        %v4040 = vunpack.c.l.b16 %v3912
        %v4041 = vunpack.c.l.b16 %v3913
        %v4042 = vunpack.c.l.b16 %v3914
        %v4043 = vrot.slane %v3980, 7
        %v4044 = vsel %vm2407, %v4043, %v3979
        %v4045 = vrot.slane %v3981, 6
        %v4046 = vsel %vm2409, %v4045, %v4044
        %v4047 = vrot.slane %v3982, 5
        %v4048 = vsel %vm2411, %v4047, %v4046
        %v4049 = vrot.slane %v3983, 4
        %v4050 = vsel %vm2413, %v4049, %v4048
        %v4051 = vrot.slane %v3984, 3
        %v4052 = vsel %vm2415, %v4051, %v4050
        %v4053 = vrot.slane %v3985, 2
        %v4054 = vsel %vm2417, %v4053, %v4052
        %v4055 = vrot.slane %v3986, 1
        %v4056 = vsel %vm2419, %v4055, %v4054
        %v4057 = vrot.slane %v3988, 7
        %v4058 = vsel %vm2407, %v4057, %v3987
        %v4059 = vrot.slane %v3989, 6
        %v4060 = vsel %vm2409, %v4059, %v4058
        %v4061 = vrot.slane %v3990, 5
        %v4062 = vsel %vm2411, %v4061, %v4060
        %v4063 = vrot.slane %v3991, 4
        %v4064 = vsel %vm2413, %v4063, %v4062
        %v4065 = vrot.slane %v3992, 3
        %v4066 = vsel %vm2415, %v4065, %v4064
        %v4067 = vrot.slane %v3993, 2
        %v4068 = vsel %vm2417, %v4067, %v4066
        %v4069 = vrot.slane %v3994, 1
        %v4070 = vsel %vm2419, %v4069, %v4068
        %v4071 = vrot.slane %v3996, 7
        %v4072 = vsel %vm2407, %v4071, %v3995
        %v4073 = vrot.slane %v3997, 6
        %v4074 = vsel %vm2409, %v4073, %v4072
        %v4075 = vrot.slane %v3998, 5
        %v4076 = vsel %vm2411, %v4075, %v4074
        %v4077 = vrot.slane %v3999, 4
        %v4078 = vsel %vm2413, %v4077, %v4076
        %v4079 = vrot.slane %v4000, 3
        %v4080 = vsel %vm2415, %v4079, %v4078
        %v4081 = vrot.slane %v4001, 2
        %v4082 = vsel %vm2417, %v4081, %v4080
        %v4083 = vrot.slane %v4002, 1
        %v4084 = vsel %vm2419, %v4083, %v4082
        %v4085 = vrot.slane %v4004, 7
        %v4086 = vsel %vm2407, %v4085, %v4003
        %v4087 = vrot.slane %v4005, 6
        %v4088 = vsel %vm2409, %v4087, %v4086
        %v4089 = vrot.slane %v4006, 5
        %v4090 = vsel %vm2411, %v4089, %v4088
        %v4091 = vrot.slane %v4007, 4
        %v4092 = vsel %vm2413, %v4091, %v4090
        %v4093 = vrot.slane %v4008, 3
        %v4094 = vsel %vm2415, %v4093, %v4092
        %v4095 = vrot.slane %v4009, 2
        %v4096 = vsel %vm2417, %v4095, %v4094
        %v4097 = vrot.slane %v4010, 1
        %v4098 = vsel %vm2419, %v4097, %v4096
        %v4099 = vrot.slane %v4012, 7
        %v4100 = vsel %vm2407, %v4099, %v4011
        %v4101 = vrot.slane %v4013, 6
        %v4102 = vsel %vm2409, %v4101, %v4100
        %v4103 = vrot.slane %v4014, 5
        %v4104 = vsel %vm2411, %v4103, %v4102
        %v4105 = vrot.slane %v4015, 4
        %v4106 = vsel %vm2413, %v4105, %v4104
        %v4107 = vrot.slane %v4016, 3
        %v4108 = vsel %vm2415, %v4107, %v4106
        %v4109 = vrot.slane %v4017, 2
        %v4110 = vsel %vm2417, %v4109, %v4108
        %v4111 = vrot.slane %v4018, 1
        %v4112 = vsel %vm2419, %v4111, %v4110
        %v4113 = vrot.slane %v4020, 7
        %v4114 = vsel %vm2407, %v4113, %v4019
        %v4115 = vrot.slane %v4021, 6
        %v4116 = vsel %vm2409, %v4115, %v4114
        %v4117 = vrot.slane %v4022, 5
        %v4118 = vsel %vm2411, %v4117, %v4116
        %v4119 = vrot.slane %v4023, 4
        %v4120 = vsel %vm2413, %v4119, %v4118
        %v4121 = vrot.slane %v4024, 3
        %v4122 = vsel %vm2415, %v4121, %v4120
        %v4123 = vrot.slane %v4025, 2
        %v4124 = vsel %vm2417, %v4123, %v4122
        %v4125 = vrot.slane %v4026, 1
        %v4126 = vsel %vm2419, %v4125, %v4124
        %v4127 = vrot.slane %v4028, 7
        %v4128 = vsel %vm2407, %v4127, %v4027
        %v4129 = vrot.slane %v4029, 6
        %v4130 = vsel %vm2409, %v4129, %v4128
        %v4131 = vrot.slane %v4030, 5
        %v4132 = vsel %vm2411, %v4131, %v4130
        %v4133 = vrot.slane %v4031, 4
        %v4134 = vsel %vm2413, %v4133, %v4132
        %v4135 = vrot.slane %v4032, 3
        %v4136 = vsel %vm2415, %v4135, %v4134
        %v4137 = vrot.slane %v4033, 2
        %v4138 = vsel %vm2417, %v4137, %v4136
        %v4139 = vrot.slane %v4034, 1
        %v4140 = vsel %vm2419, %v4139, %v4138
        %v4141 = vrot.slane %v4036, 7
        %v4142 = vsel %vm2407, %v4141, %v4035
        %v4143 = vrot.slane %v4037, 6
        %v4144 = vsel %vm2409, %v4143, %v4142
        %v4145 = vrot.slane %v4038, 5
        %v4146 = vsel %vm2411, %v4145, %v4144
        %v4147 = vrot.slane %v4039, 4
        %v4148 = vsel %vm2413, %v4147, %v4146
        %v4149 = vrot.slane %v4040, 3
        %v4150 = vsel %vm2415, %v4149, %v4148
        %v4151 = vrot.slane %v4041, 2
        %v4152 = vsel %vm2417, %v4151, %v4150
        %v4153 = vrot.slane %v4042, 1
        %v4154 = vsel %vm2419, %v4153, %v4152
        %v4155 = vpack.c.b16 %v4070, %v4056
        %v4156 = vpack.c.b16 %v4098, %v4084
        %v4157 = vpack.c.b16 %v4126, %v4112
        %v4158 = vpack.c.b16 %v4154, %v4140
        %v4163 = vld [vmem:[%s10] sm:$0xf]
        %v4164 = vld [vmem:[%s10 + $0x4] sm:$0xf]
        %v4165 = vld [vmem:[%s10 + $0x8] sm:$0xf]
        %v4166 = vld [vmem:[%s10 + $0xc] sm:$0xf]
        %v4167 = vld [vmem:[%s10 + $0x10] sm:$0xf]
        %v4168 = vld [vmem:[%s10 + $0x14] sm:$0xf]
        %v4169 = vld [vmem:[%s10 + $0x18] sm:$0xf]
        %v4170 = vld [vmem:[%s10 + $0x1c] sm:$0xf]
        %v4171 = vld [vmem:[%s10 + $0x20] sm:$0xf]
        %v4172 = vld [vmem:[%s10 + $0x24] sm:$0xf]
        %v4173 = vld [vmem:[%s10 + $0x28] sm:$0xf]
        %v4174 = vld [vmem:[%s10 + $0x2c] sm:$0xf]
        %v4175 = vld [vmem:[%s10 + $0x30] sm:$0xf]
        %v4176 = vld [vmem:[%s10 + $0x34] sm:$0xf]
        %v4177 = vld [vmem:[%s10 + $0x38] sm:$0xf]
        %v4178 = vld [vmem:[%s10 + $0x3c] sm:$0xf]
        %v4179 = vld [vmem:[%s10 + $0x40] sm:$0xf]
        %v4180 = vld [vmem:[%s10 + $0x44] sm:$0xf]
        %v4181 = vld [vmem:[%s10 + $0x48] sm:$0xf]
        %v4182 = vld [vmem:[%s10 + $0x4c] sm:$0xf]
        %v4183 = vld [vmem:[%s10 + $0x50] sm:$0xf]
        %v4184 = vld [vmem:[%s10 + $0x54] sm:$0xf]
        %v4185 = vld [vmem:[%s10 + $0x58] sm:$0xf]
        %v4186 = vld [vmem:[%s10 + $0x5c] sm:$0xf]
        %v4187 = vld [vmem:[%s10 + $0x60] sm:$0xf]
        %v4188 = vld [vmem:[%s10 + $0x64] sm:$0xf]
        %v4189 = vld [vmem:[%s10 + $0x68] sm:$0xf]
        %v4190 = vld [vmem:[%s10 + $0x6c] sm:$0xf]
        %v4191 = vld [vmem:[%s10 + $0x70] sm:$0xf]
        %v4192 = vld [vmem:[%s10 + $0x74] sm:$0xf]
        %v4193 = vld [vmem:[%s10 + $0x78] sm:$0xf]
        %v4194 = vld [vmem:[%s10 + $0x7c] sm:$0xf]
        %v4195 = vld [vmem:[%s11] sm:$0x1]
        %v4197 = vlaneseq
        %v4198 = vshrl.u32 %v4197, 7
        %v4199 = vsub.s32 0, %v4198
        %v4200 = vrot.slane %v4195, %v4199
        %v4234 = vunpack.c.l.b16 %v4163
        %v4235 = vunpack.c.l.b16 %v4164
        %v4236 = vunpack.c.l.b16 %v4165
        %v4237 = vunpack.c.l.b16 %v4166
        %v4238 = vunpack.c.l.b16 %v4167
        %v4239 = vunpack.c.l.b16 %v4168
        %v4240 = vunpack.c.l.b16 %v4169
        %v4241 = vunpack.c.l.b16 %v4170
        %v4242 = vunpack.c.l.b16 %v4171
        %v4243 = vunpack.c.l.b16 %v4172
        %v4244 = vunpack.c.l.b16 %v4173
        %v4245 = vunpack.c.l.b16 %v4174
        %v4246 = vunpack.c.l.b16 %v4175
        %v4247 = vunpack.c.l.b16 %v4176
        %v4248 = vunpack.c.l.b16 %v4177
        %v4249 = vunpack.c.l.b16 %v4178
        %v4250 = vunpack.c.l.b16 %v4179
        %v4251 = vunpack.c.l.b16 %v4180
        %v4252 = vunpack.c.l.b16 %v4181
        %v4253 = vunpack.c.l.b16 %v4182
        %v4254 = vunpack.c.l.b16 %v4183
        %v4255 = vunpack.c.l.b16 %v4184
        %v4256 = vunpack.c.l.b16 %v4185
        %v4257 = vunpack.c.l.b16 %v4186
        %v4258 = vunpack.c.l.b16 %v4187
        %v4259 = vunpack.c.l.b16 %v4188
        %v4260 = vunpack.c.l.b16 %v4189
        %v4261 = vunpack.c.l.b16 %v4190
        %v4262 = vunpack.c.l.b16 %v4191
        %v4263 = vunpack.c.l.b16 %v4192
        %v4264 = vunpack.c.l.b16 %v4193
        %v4265 = vunpack.c.l.b16 %v4194
        %v4266 = vpack.c.b16 %v4235, %v4234
        %v4267 = vpack.c.b16 %v4237, %v4236
        %v4268 = vpack.c.b16 %v4239, %v4238
        %v4269 = vpack.c.b16 %v4241, %v4240
        %v4270 = vpack.c.b16 %v4243, %v4242
        %v4271 = vpack.c.b16 %v4245, %v4244
        %v4272 = vpack.c.b16 %v4247, %v4246
        %v4273 = vpack.c.b16 %v4249, %v4248
        %v4274 = vpack.c.b16 %v4251, %v4250
        %v4275 = vpack.c.b16 %v4253, %v4252
        %v4276 = vpack.c.b16 %v4255, %v4254
        %v4277 = vpack.c.b16 %v4257, %v4256
        %v4278 = vpack.c.b16 %v4259, %v4258
        %v4279 = vpack.c.b16 %v4261, %v4260
        %v4280 = vpack.c.b16 %v4263, %v4262
        %v4281 = vpack.c.b16 %v4265, %v4264
        %4298 = vmatprep.subr.bf16.mxu0 0
        %4299 = vmatpush1.bf16.msra.mxu0 %v4266
        %4300 = vmatprep.subr.bf16.mxu0 0
        %4301 = vmatpush1.bf16.msra.mxu0 %v4267
        %4302 = vmatprep.subr.bf16.mxu0 0
        %4303 = vmatpush1.bf16.msra.mxu0 %v4268
        %4304 = vmatprep.subr.bf16.mxu0 0
        %4305 = vmatpush1.bf16.msra.mxu0 %v4269
        %4306 = vmatprep.subr.bf16.mxu0 0
        %4307 = vmatpush1.bf16.msra.mxu0 %v4270
        %4308 = vmatprep.subr.bf16.mxu0 0
        %4309 = vmatpush1.bf16.msra.mxu0 %v4271
        %4310 = vmatprep.subr.bf16.mxu0 0
        %4311 = vmatpush1.bf16.msra.mxu0 %v4272
        %4312 = vmatprep.subr.bf16.mxu0 0
        %4313 = vmatpush1.bf16.msra.mxu0 %v4273
        %4314 = vmatprep.subr.bf16.mxu0 0
        %4315 = vmatpush1.bf16.msra.mxu0 %v4274
        %4316 = vmatprep.subr.bf16.mxu0 0
        %4317 = vmatpush1.bf16.msra.mxu0 %v4275
        %4318 = vmatprep.subr.bf16.mxu0 0
        %4319 = vmatpush1.bf16.msra.mxu0 %v4276
        %4320 = vmatprep.subr.bf16.mxu0 0
        %4321 = vmatpush1.bf16.msra.mxu0 %v4277
        %4322 = vmatprep.subr.bf16.mxu0 0
        %4323 = vmatpush1.bf16.msra.mxu0 %v4278
        %4324 = vmatprep.subr.bf16.mxu0 0
        %4325 = vmatpush1.bf16.msra.mxu0 %v4279
        %4326 = vmatprep.subr.bf16.mxu0 0
        %4327 = vmatpush1.bf16.msra.mxu0 %v4280
        %4328 = vmatprep.subr.bf16.mxu0 0
        %4329 = vmatpush1.bf16.msra.mxu0 %v4281
        %4330 = vmatprep.mubr.bf16.mxu0 %v4155
        %4331 = vmatmul.mubr.bf16.gmra.mrb[0].mxu0 %v3847
        %v4332 = vpop.f32.mrb[0].mxu0
        %v4333 = vadd.f32 %v4200, %v4332
        %v4334 = vpop.f32.mrb[0].mxu0
        %v4335 = vpop.f32.mrb[0].mxu0
        %v4336 = vadd.f32 %v4200, %v4335
        %v4337 = vpop.f32.mrb[0].mxu0
        %4338 = vmatprep.mubr.bf16.mxu0 %v4156
        %4339 = vmatmul.mubr.bf16.gmra.mrb[0].mxu0 %v3848
        %v4340 = vpop.f32.mrb[0].mxu0
        %v4341 = vadd.f32 %v4200, %v4340
        %v4342 = vpop.f32.mrb[0].mxu0
        %v4343 = vpop.f32.mrb[0].mxu0
        %v4344 = vadd.f32 %v4200, %v4343
        %v4345 = vpop.f32.mrb[0].mxu0
        %4346 = vmatprep.mubr.bf16.mxu0 %v4157
        %4347 = vmatmul.mubr.bf16.gmra.mrb[0].mxu0 %v3849
        %v4348 = vpop.f32.mrb[0].mxu0
        %v4349 = vadd.f32 %v4200, %v4348
        %v4350 = vpop.f32.mrb[0].mxu0
        %v4351 = vpop.f32.mrb[0].mxu0
        %v4352 = vadd.f32 %v4200, %v4351
        %v4353 = vpop.f32.mrb[0].mxu0
        %4354 = vmatprep.mubr.bf16.mxu0 %v4158
        %4355 = vmatmul.mubr.bf16.gmra.mrb[0].mxu0 %v3850
        %v4356 = vpop.f32.mrb[0].mxu0
        %v4357 = vadd.f32 %v4200, %v4356
        %v4358 = vpop.f32.mrb[0].mxu0
        %v4359 = vpop.f32.mrb[0].mxu0
        %v4360 = vadd.f32 %v4200, %v4359
        %v4361 = vpop.f32.mrb[0].mxu0
        %4362 = vdwg.mxu0
        %v4364 = vcombine.high %v1396, %v1396
        %v4366 = vunpack.c.l.s4 1966171168
        %v4367 = vunpack.c.0.s8 %v4366
        %v4368 = vlaneseq
        %v4369 = vshrl.u32 %v4368, 7
        %v4370 = vsub.s32 %v4367, %v4369
        %v4371 = vrot.slane %v1396, %v4370
        %v4373 = vunpack.c.l.s4 1966171168
        %v4374 = vunpack.c.0.s8 %v4373
        %v4375 = vlaneseq
        %v4376 = vshrl.u32 %v4375, 7
        %v4377 = vsub.s32 %v4374, %v4376
        %v4378 = vrot.slane %v4364, %v4377
        %v4379 = vcombine.high %v4371, %v4371
        %v4380 = vcombine.high %v4378, %v4378
        %v4382 = vunpack.c.l.s4 1966171168
        %v4383 = vunpack.c.0.s8 %v4382
        %v4384 = vlaneseq
        %v4385 = vshrl.u32 %v4384, 7
        %v4386 = vsub.s32 %v4383, %v4385
        %v4387 = vrot.slane %v4371, %v4386
        %v4389 = vunpack.c.l.s4 1966171168
        %v4390 = vunpack.c.0.s8 %v4389
        %v4391 = vlaneseq
        %v4392 = vshrl.u32 %v4391, 7
        %v4393 = vsub.s32 %v4390, %v4392
        %v4394 = vrot.slane %v4378, %v4393
        %v4396 = vunpack.c.l.s4 1966171168
        %v4397 = vunpack.c.0.s8 %v4396
        %v4398 = vlaneseq
        %v4399 = vshrl.u32 %v4398, 7
        %v4400 = vsub.s32 %v4397, %v4399
        %v4401 = vrot.slane %v4379, %v4400
        %v4403 = vunpack.c.l.s4 1966171168
        %v4404 = vunpack.c.0.s8 %v4403
        %v4405 = vlaneseq
        %v4406 = vshrl.u32 %v4405, 7
        %v4407 = vsub.s32 %v4404, %v4406
        %v4408 = vrot.slane %v4380, %v4407
        %v4409 = vcombine.high %v4387, %v4387
        %v4410 = vcombine.high %v4394, %v4394
        %v4411 = vcombine.high %v4401, %v4401
        %v4412 = vcombine.high %v4408, %v4408
        %v4413 = vlaneseq
        %v4414 = vshrl.u32 %v4413, 7
        %v4415 = vsub.s32 0, %v4414
        %v4416 = vrot.slane %v4387, %v4415
        %v4417 = vlaneseq
        %v4418 = vshrl.u32 %v4417, 7
        %v4419 = vsub.s32 0, %v4418
        %v4420 = vrot.slane %v4401, %v4419
        %v4421 = vlaneseq
        %v4422 = vshrl.u32 %v4421, 7
        %v4423 = vsub.s32 0, %v4422
        %v4424 = vrot.slane %v4409, %v4423
        %v4425 = vlaneseq
        %v4426 = vshrl.u32 %v4425, 7
        %v4427 = vsub.s32 0, %v4426
        %v4428 = vrot.slane %v4411, %v4427
        %v4429 = vlaneseq
        %v4430 = vshrl.u32 %v4429, 7
        %v4431 = vsub.s32 0, %v4430
        %v4432 = vrot.slane %v4394, %v4431
        %v4433 = vlaneseq
        %v4434 = vshrl.u32 %v4433, 7
        %v4435 = vsub.s32 0, %v4434
        %v4436 = vrot.slane %v4408, %v4435
        %v4437 = vlaneseq
        %v4438 = vshrl.u32 %v4437, 7
        %v4439 = vsub.s32 0, %v4438
        %v4440 = vrot.slane %v4410, %v4439
        %v4441 = vlaneseq
        %v4442 = vshrl.u32 %v4441, 7
        %v4443 = vsub.s32 0, %v4442
        %v4444 = vrot.slane %v4412, %v4443
        %v4453 = vadd.f32 %v4416, %v4333
        %v4454 = vadd.f32 %v4420, %v4336
        %v4455 = vadd.f32 %v4424, %v4341
        %v4456 = vadd.f32 %v4428, %v4344
        %v4457 = vadd.f32 %v4432, %v4349
        %v4458 = vadd.f32 %v4436, %v4352
        %v4459 = vadd.f32 %v4440, %v4357
        %v4460 = vadd.f32 %v4444, %v4360
        %v4461 = vmax.f32 %v4453, 0.0
        %v4462 = vmax.f32 %v4454, 0.0
        %v4463 = vmax.f32 %v4455, 0.0
        %v4464 = vmax.f32 %v4456, 0.0
        %v4465 = vmax.f32 %v4457, 0.0
        %v4466 = vmax.f32 %v4458, 0.0
        %v4467 = vmax.f32 %v4459, 0.0
        %v4468 = vmax.f32 %v4460, 0.0
        %v4469 = vld [vmem:[%s12] sm:$0x1]
        %v4471 = vlaneseq
        %v4472 = vshrl.u32 %v4471, 7
        %v4473 = vsub.s32 0, %v4472
        %v4474 = vrot.slane %v4469, %v4473
        %v4476 = vmul.f32 %v4461, %v4474
        %v4477 = vmul.f32 %v4462, %v4474
        %v4478 = vmul.f32 %v4463, %v4474
        %v4479 = vmul.f32 %v4464, %v4474
        %v4480 = vmul.f32 %v4465, %v4474
        %v4481 = vmul.f32 %v4466, %v4474
        %v4482 = vmul.f32 %v4467, %v4474
        %v4483 = vmul.f32 %v4468, %v4474
        %4484 = vadd.xlane.f32.xlu0 %v4476
        %v4485 = vpop.xlane.xlu0 %4484
        %4486 = vadd.xlane.f32.xlu0 %v4477
        %v4487 = vpop.xlane.xlu0 %4486
        %4488 = vadd.xlane.f32.xlu0 %v4478
        %v4489 = vpop.xlane.xlu0 %4488
        %4490 = vadd.xlane.f32.xlu0 %v4479
        %v4491 = vpop.xlane.xlu0 %4490
        %4492 = vadd.xlane.f32.xlu0 %v4480
        %v4493 = vpop.xlane.xlu0 %4492
        %4494 = vadd.xlane.f32.xlu0 %v4481
        %v4495 = vpop.xlane.xlu0 %4494
        %4496 = vadd.xlane.f32.xlu0 %v4482
        %v4497 = vpop.xlane.xlu0 %4496
        %4498 = vadd.xlane.f32.xlu0 %v4483
        %v4499 = vpop.xlane.xlu0 %4498
        %v4500 = vld [vmem:[#allocation3] sm:$0x1]
        %v4502 = vlaneseq
        %v4503 = vshrl.u32 %v4502, 7
        %v4504 = vsub.s32 0, %v4503
        %v4505 = vrot.slane %v4500, %v4504
        %4506 = vset.pattern.permute.xlu0 0
        %4507 = vperm.xlu0 %4506, %v4505
        %v4508 = vpop.permute.xlu0 %4507
        %v4510 = vadd.f32 %v4485, %v4508
        %v4511 = vadd.f32 %v4487, %v4508
        %v4512 = vadd.f32 %v4489, %v4508
        %v4513 = vadd.f32 %v4491, %v4508
        %v4514 = vadd.f32 %v4493, %v4508
        %v4515 = vadd.f32 %v4495, %v4508
        %v4516 = vadd.f32 %v4497, %v4508
        %v4517 = vadd.f32 %v4499, %v4508
        %vm4518 = vcmp.gt.f32.partialorder %v541, 0.0
        %v4527 = vlaneseq
        %v4528 = vshrl.u32 %v4527, 7
        %v4529 = vsub.s32 %v2150, %v4528
        %v4530 = vrot.slane %v4510, %v4529
        %v4531 = vlaneseq
        %v4532 = vshrl.u32 %v4531, 7
        %v4533 = vsub.s32 %v2150, %v4532
        %v4534 = vrot.slane %v4511, %v4533
        %v4535 = vlaneseq
        %v4536 = vshrl.u32 %v4535, 7
        %v4537 = vsub.s32 %v2150, %v4536
        %v4538 = vrot.slane %v4512, %v4537
        %v4539 = vlaneseq
        %v4540 = vshrl.u32 %v4539, 7
        %v4541 = vsub.s32 %v2150, %v4540
        %v4542 = vrot.slane %v4513, %v4541
        %v4543 = vlaneseq
        %v4544 = vshrl.u32 %v4543, 7
        %v4545 = vsub.s32 %v2150, %v4544
        %v4546 = vrot.slane %v4514, %v4545
        %v4547 = vlaneseq
        %v4548 = vshrl.u32 %v4547, 7
        %v4549 = vsub.s32 %v2150, %v4548
        %v4550 = vrot.slane %v4515, %v4549
        %v4551 = vlaneseq
        %v4552 = vshrl.u32 %v4551, 7
        %v4553 = vsub.s32 %v2150, %v4552
        %v4554 = vrot.slane %v4516, %v4553
        %v4555 = vlaneseq
        %v4556 = vshrl.u32 %v4555, 7
        %v4557 = vsub.s32 %v2150, %v4556
        %v4558 = vrot.slane %v4517, %v4557
        %v4559 = vsel %vm2407, %v4534, %v4530
        %v4560 = vsel %vm2409, %v4538, %v4559
        %v4561 = vsel %vm2411, %v4542, %v4560
        %v4562 = vsel %vm2413, %v4546, %v4561
        %v4563 = vsel %vm2415, %v4550, %v4562
        %v4564 = vsel %vm2417, %v4554, %v4563
        %v4565 = vsel %vm2419, %v4558, %v4564
        %v4567 = vsel %vm4518, %v4565, -inf
        %v4568 = vsel %vm2614, %v4567, -inf
        %4569 = vmax.xlane.f32.xlu0 %v4568
        %v4570 = vpop.xlane.xlu0 %4569
        %vm4571 = vcmp.eq.f32.partialorder %v4570, -inf
        %v4572 = vsel %vm4571, 0.0, %v4570
        %v4573 = vsub.f32 %v4567, %v4572
        %v4574 = vmul.f32 %v4573, 1.442695
        %v4575 = vpow.pop %v4574
        %v4576 = vsel %vm4518, %v4575, 0.0
        %v4577 = vsel %vm2614, %v4576, 0.0
        %4578 = vadd.xlane.f32.xlu0 %v4577
        %v4579 = vpop.xlane.xlu0 %4578
        %vm4580 = vcmp.gt.f32.partialorder %v4579, 0.0
        %v4581 = vrcp.pop %v4579
        %v4582 = vmul.f32 %v4576, %v4581
        %v4583 = vsel %vm4580, 1, 0
        %vm4584 = vcmp.eq.s32.totalorder %v4583, 1
        %v4585 = vsel %vm4584, %v4582, 0.0
        %v4586 = vlaneseq
        %v4587 = vshrl.u32 %v4586, 7
        %v4588 = vsub.s32 0, %v4587
        %v4589 = vrot.slane %v4585, %v4588
        %4591 = vbcast.lane.b32.xlu0 %v4589, 256
        %v4592 = vpop.permute.xlu0 %4591
        %v4593 = vlaneseq
        %v4594 = vshrl.u32 %v4593, 7
        %v4595 = vsub.s32 1, %v4594
        %v4596 = vrot.slane %v4585, %v4595
        %4598 = vbcast.lane.b32.xlu0 %v4596, 256
        %v4599 = vpop.permute.xlu0 %4598
        %v4600 = vlaneseq
        %v4601 = vshrl.u32 %v4600, 7
        %v4602 = vsub.s32 2, %v4601
        %v4603 = vrot.slane %v4585, %v4602
        %4605 = vbcast.lane.b32.xlu0 %v4603, 256
        %v4606 = vpop.permute.xlu0 %4605
        %v4607 = vlaneseq
        %v4608 = vshrl.u32 %v4607, 7
        %v4609 = vsub.s32 3, %v4608
        %v4610 = vrot.slane %v4585, %v4609
        %4612 = vbcast.lane.b32.xlu0 %v4610, 256
        %v4613 = vpop.permute.xlu0 %4612
        %v4614 = vlaneseq
        %v4615 = vshrl.u32 %v4614, 7
        %v4616 = vsub.s32 4, %v4615
        %v4617 = vrot.slane %v4585, %v4616
        %4619 = vbcast.lane.b32.xlu0 %v4617, 256
        %v4620 = vpop.permute.xlu0 %4619
        %v4621 = vlaneseq
        %v4622 = vshrl.u32 %v4621, 7
        %v4623 = vsub.s32 5, %v4622
        %v4624 = vrot.slane %v4585, %v4623
        %4626 = vbcast.lane.b32.xlu0 %v4624, 256
        %v4627 = vpop.permute.xlu0 %4626
        %v4628 = vlaneseq
        %v4629 = vshrl.u32 %v4628, 7
        %v4630 = vsub.s32 6, %v4629
        %v4631 = vrot.slane %v4585, %v4630
        %4633 = vbcast.lane.b32.xlu0 %v4631, 256
        %v4634 = vpop.permute.xlu0 %4633
        %v4635 = vlaneseq
        %v4636 = vshrl.u32 %v4635, 7
        %v4637 = vsub.s32 7, %v4636
        %v4638 = vrot.slane %v4585, %v4637
        %4640 = vbcast.lane.b32.xlu0 %v4638, 256
        %v4641 = vpop.permute.xlu0 %4640
        %v4642 = vmul.f32 %v4592, %v533
        %v4643 = vmul.f32 %v4599, %v534
        %v4644 = vmul.f32 %v4606, %v535
        %v4645 = vmul.f32 %v4613, %v536
        %v4646 = vmul.f32 %v4620, %v537
        %v4647 = vmul.f32 %v4627, %v538
        %v4648 = vmul.f32 %v4634, %v539
        %v4649 = vmul.f32 %v4641, %v540
        %v4650 = vrot.slane %v4642, 4
        %v4651 = vadd.f32 %v4642, %v4650
        %v4652 = vrot.slane %v4651, 2
        %v4653 = vadd.f32 %v4651, %v4652
        %v4654 = vrot.slane %v4653, 1
        %v4655 = vadd.f32 %v4653, %v4654
        %v4656 = vrot.slane %v4643, 4
        %v4657 = vadd.f32 %v4643, %v4656
        %v4658 = vrot.slane %v4657, 2
        %v4659 = vadd.f32 %v4657, %v4658
        %v4660 = vrot.slane %v4659, 1
        %v4661 = vadd.f32 %v4659, %v4660
        %v4662 = vrot.slane %v4644, 4
        %v4663 = vadd.f32 %v4644, %v4662
        %v4664 = vrot.slane %v4663, 2
        %v4665 = vadd.f32 %v4663, %v4664
        %v4666 = vrot.slane %v4665, 1
        %v4667 = vadd.f32 %v4665, %v4666
        %v4668 = vrot.slane %v4645, 4
        %v4669 = vadd.f32 %v4645, %v4668
        %v4670 = vrot.slane %v4669, 2
        %v4671 = vadd.f32 %v4669, %v4670
        %v4672 = vrot.slane %v4671, 1
        %v4673 = vadd.f32 %v4671, %v4672
        %v4674 = vrot.slane %v4646, 4
        %v4675 = vadd.f32 %v4646, %v4674
        %v4676 = vrot.slane %v4675, 2
        %v4677 = vadd.f32 %v4675, %v4676
        %v4678 = vrot.slane %v4677, 1
        %v4679 = vadd.f32 %v4677, %v4678
        %v4680 = vrot.slane %v4647, 4
        %v4681 = vadd.f32 %v4647, %v4680
        %v4682 = vrot.slane %v4681, 2
        %v4683 = vadd.f32 %v4681, %v4682
        %v4684 = vrot.slane %v4683, 1
        %v4685 = vadd.f32 %v4683, %v4684
        %v4686 = vrot.slane %v4648, 4
        %v4687 = vadd.f32 %v4648, %v4686
        %v4688 = vrot.slane %v4687, 2
        %v4689 = vadd.f32 %v4687, %v4688
        %v4690 = vrot.slane %v4689, 1
        %v4691 = vadd.f32 %v4689, %v4690
        %v4692 = vrot.slane %v4649, 4
        %v4693 = vadd.f32 %v4649, %v4692
        %v4694 = vrot.slane %v4693, 2
        %v4695 = vadd.f32 %v4693, %v4694
        %v4696 = vrot.slane %v4695, 1
        %v4697 = vadd.f32 %v4695, %v4696
        %v4706 = vsel %vm2407, %v4661, %v4655
        %v4707 = vsel %vm2409, %v4667, %v4706
        %v4708 = vsel %vm2411, %v4673, %v4707
        %v4709 = vsel %vm2413, %v4679, %v4708
        %v4710 = vsel %vm2415, %v4685, %v4709
        %v4711 = vsel %vm2417, %v4691, %v4710
        %v4712 = vsel %vm2419, %v4697, %v4711
        %v4714 = vadd.f32 %v1396, %v4712
        %4715 = vst [vmem:[%s509] sm:$0xff] %v4714
        %s4716 = sand.u32 %s354, 1
        %s4717 = scalar_lea.sflag [#allocation5], %s4716
        %s4718 = sand.u32 %s354, 1
        %s4719 = smul.addr %s4718, 8
        %s4720 = scalar_lea.vmem [#allocation4], %s4719
        // Predicated region
        $region77: #{tpu_custom_call.1} parent=75 // pred_check
          %p4721 = pneg %p364
        $region78: #{tpu_custom_call.1} parent=75 // pred_check_branch
          %4723 = sbr.rel (%p4721) target = $region80
        $region79: #{tpu_custom_call.1} parent=75 // pred_region
          %s4725 = ssub.s32 128, 128
          %4726 = vsyncadd %s4717, %s4725
          %s4727 = smul.addr %s32, 128
          %s4728 = scalar_lea.hbm %s14, %s4727
          %s4730 = sshll.u32 %s4720, 4
          %s4731 = int_to_ptr.vmem [resolvable:$true] %s4730
          %4733 = dma.vmem_to_hbm [thread:$0]  %s4731, 128, %s4728, %s4717
        $region80: #{tpu_custom_call.1} parent=75 // pred_fallthru
          _
      $region76: #{tpu_custom_call.1} parent=5 // pred_fallthru
        _
      %p4734 = scmp.le.s32.totalorder 2, %s27
      // Predicated region
      $region81: #{tpu_custom_call.1} parent=5 // pred_check
        %p4735 = pneg %p4734
      $region82: #{tpu_custom_call.1} parent=5 // pred_check_branch
        %4737 = sbr.rel (%p4735) target = $region84
      $region83: #{tpu_custom_call.1} parent=5 // pred_region
        %s4738 = ssub.s32 %s27, 2
        // Predicated region
        $region85: #{tpu_custom_call.1} parent=83 // pred_check
          %p4739 = pneg %p370
        $region86: #{tpu_custom_call.1} parent=83 // pred_check_branch
          %4741 = sbr.rel (%p4739) target = $region88
        $region87: #{tpu_custom_call.1} parent=83 // pred_region
          %s4742 = sand.u32 %s355, 1
          %s4743 = scalar_lea.sflag [#allocation5], %s4742
          %s4744 = sand.u32 %s355, 1
          %s4745 = smul.addr %s4744, 8
          %s4746 = scalar_lea.vmem [#allocation4], %s4745
          %4747 = dma.done %s4743, 128
        $region88: #{tpu_custom_call.1} parent=83 // pred_fallthru
          _
      $region84: #{tpu_custom_call.1} parent=5 // pred_fallthru
        _
    $region6: #{tpu_custom_call.1} parent=1 // loop_footer
      %s31 = sadd.s32 1, %s27
    $region7: #{tpu_custom_call.1} parent=1 // loop_footer_branch
      %26 = sbr.rel target = $region3
    $region8: #{tpu_custom_call.1} parent=1 // loop_exit
      _
    %4748 = vsyncpa [#allocation5], 1
    %s4749 = scalar_lea.sflag [#allocation5], 1
    %4750 = vsyncpa %s4749, 1

</llo_original>
